<compile_context>
chip_gen: v7x
topology: tpu7x:2x2x1
jax: 0.10.0
libtpu: 0.0.40
codegen_flags: <defaults>
</compile_context>

<pallas_src>
import jax
import jax.numpy as jnp
from jax.experimental import pallas as pl
from jax.experimental.pallas import tpu as pltpu

LANE = 128      # TPU lane width
SUBLANE = 8     # TPU sublane width


def _round_up(x, m):
    return ((x + m - 1) // m) * m


# -----------------------------------------------------------------------------
# Pallas kernel: fused bidirectional LSTM + final linear layer
# -----------------------------------------------------------------------------
def bilstm_fc_kernel(
    x_ref,        # [T, BB, 2E+1] bf16  [x(t) | x(T-1-t) | 1], time-major, batch padded
    wih_ref,      # [2E+1, G] bf16      fused input->gate weights (+ bias row)
    whh_ref,      # [S, G]    bf16      fused hidden->gate weights (block structured)
    wfc_f_ref,    # [S, Op]   bf16      fc weights reading the forward lanes
    wfc_b_ref,    # [S, Op]   bf16      fc weights reading the backward lanes
    bfc_ref,      # [1, Op]   f32       fc bias
    out_ref,      # [T, BB, Op] f32     logits (time-major, lane-dense)
    # scratch:
    xg_buf,       # [T, BB, G] f32      merged input->gate pre-activations
    hbuf_f,       # [T, BB, S] f32      state at forward time order
    hbuf_b,       # [T, BB, S] f32      state stored at backward (reversed) time index
):
    T, BB, EC = x_ref.shape
    S = whh_ref.shape[0]          # 2*H rounded up to a lane multiple (=128 for H=64)
    G = whh_ref.shape[1]          # 4 * S
    Op = out_ref.shape[2]

    # ---- Hoisted input->gate projection: one MXU call covers every timestep and
    #      both directions; bias is folded in via the ones feature column. Backward
    #      gate columns come out already time-reversed (wrapper feeds x(T-1-t)). ----
    x_flat = x_ref[...].reshape(T * BB, EC)          # layout-preserving (BB % 8 == 0)
    xg_buf[...] = jnp.dot(
        x_flat, wih_ref[...], preferred_element_type=jnp.float32
    ).reshape(T, BB, G)
    # TODO(synk): for very long T, tile xg_buf over time chunks (or store bf16) to
    # bound VMEM on v7x (64 MiB physical).

    def body(t, carry):
        # carry lanes: [0:H] forward direction, [H:2H] backward direction.
        # Pad lanes [2H:S] (empty when 2H==128) stay exactly 0: zero weights/bias
        # give i=f=o=0.5, g=0, so c,h remain 0 from zero init.
        h_cat, c_cat = carry                         # [BB, S] f32
        gates = xg_buf[t] + jnp.dot(
            h_cat.astype(whh_ref.dtype), whh_ref[...],
            preferred_element_type=jnp.float32,
        )
        # Lane-aligned full-vreg gate slices; PyTorch gate order (i, f, g, o).
        i = jax.nn.sigmoid(gates[:, 0 * S:1 * S])
        f = jax.nn.sigmoid(gates[:, 1 * S:2 * S])
        g = jnp.tanh(gates[:, 2 * S:3 * S])
        o = jax.nn.sigmoid(gates[:, 3 * S:4 * S])
        c_new = f * c_cat + i * g
        h_new = o * jnp.tanh(c_new)
        # One full-vreg (unmasked) store per buffer; the fc weights below mask out
        # the lanes that belong to the other direction.
        hbuf_f[t] = h_new                # forward hidden for sequence position t
        hbuf_b[T - 1 - t] = h_new        # backward hidden for sequence position T-1-t
        return (h_new, c_new)

    zeros = jnp.zeros((BB, S), jnp.float32)
    # Bounded unroll based on live-vreg pressure (gates dominate: BB/8 * G/128 vregs).
    step_vregs = max(1, (BB // SUBLANE) * (G // LANE))
    unroll = max(1, min(T, 8, 64 // step_vregs))
    jax.lax.fori_loop(0, T, body, (zeros, zeros), unroll=unroll)

    # ---- Final linear layer: two lane-dense MXU matmuls over all timesteps.
    #      wfc_f reads only the forward lanes, wfc_b only the backward lanes. ----
    fwd_flat = hbuf_f[...].reshape(T * BB, S).astype(wfc_f_ref.dtype)
    bwd_flat = hbuf_b[...].reshape(T * BB, S).astype(wfc_b_ref.dtype)
    logits = (
        jnp.dot(fwd_flat, wfc_f_ref[...], preferred_element_type=jnp.float32)
        + jnp.dot(bwd_flat, wfc_b_ref[...], preferred_element_type=jnp.float32)
        + bfc_ref[...]
    )
    out_ref[...] = logits.reshape(T, BB, Op)


# -----------------------------------------------------------------------------
# Weight packing: PyTorch-layout per-direction weights -> fused lane-packed layout
# -----------------------------------------------------------------------------
def pack_params(params, hidden_dim, dtype=jnp.bfloat16):
    H = hidden_dim
    S = _round_up(2 * H, LANE)           # carried-state lane width (128 for H=64)
    G = 4 * S
    E = params["wih_f"].shape[0]
    O = params["bfc"].shape[-1]
    Op = _round_up(O, LANE)
    EC = 2 * E + 1                       # [x_fwd | x_bwd(time reversed) | ones]

    wih = jnp.zeros((EC, G), jnp.float32)
    whh = jnp.zeros((S, G), jnp.float32)
    for k in range(4):                   # PyTorch gate order (i, f, g, o)
        cf = k * S                       # forward lanes of this gate block
        cb = k * S + H                   # backward lanes of this gate block
        wih = wih.at[:E, cf:cf + H].set(params["wih_f"][:, k * H:(k + 1) * H])
        wih = wih.at[E:2 * E, cb:cb + H].set(params["wih_b"][:, k * H:(k + 1) * H])
        # fused LSTM bias (b_ih + b_hh) folded in via the ones feature column
        wih = wih.at[2 * E, cf:cf + H].set(params["b_f"][0, k * H:(k + 1) * H])
        wih = wih.at[2 * E, cb:cb + H].set(params["b_b"][0, k * H:(k + 1) * H])
        whh = whh.at[:H, cf:cf + H].set(params["whh_f"][:, k * H:(k + 1) * H])
        whh = whh.at[H:2 * H, cb:cb + H].set(params["whh_b"][:, k * H:(k + 1) * H])

    wfc_f = jnp.zeros((S, Op), jnp.float32).at[:H, :O].set(params["wfc_f"])
    wfc_b = jnp.zeros((S, Op), jnp.float32).at[H:2 * H, :O].set(params["wfc_b"])
    bfc = jnp.zeros((1, Op), jnp.float32).at[:, :O].set(params["bfc"])
    return {
        "wih": wih.astype(dtype),
        "whh": whh.astype(dtype),
        "wfc_f": wfc_f.astype(dtype),
        "wfc_b": wfc_b.astype(dtype),
        "bfc": bfc,                       # added post-matmul in f32
    }


# -----------------------------------------------------------------------------
# Wrapper
# -----------------------------------------------------------------------------
def bilstm_model_forward(tokens, params, *, hidden_dim):
    """tokens: int32 [B, T]; returns logits float32 [B, T, output_dim]."""
    B, T = tokens.shape
    H = hidden_dim
    S = _round_up(2 * H, LANE)
    G = 4 * S
    O = params["bfc"].shape[-1]
    Op = _round_up(O, LANE)
    E = params["embedding"].shape[1]
    EC = 2 * E + 1

    # Batch block: large enough to fill MXU rows, capped at 128 (one v5e row fill),
    # while keeping >=2 grid blocks when the batch allows (v7x dual TensorCore).
    Bp8 = _round_up(B, SUBLANE)
    if Bp8 <= SUBLANE:
        BB = SUBLANE
    else:
        BB = min(128, _round_up(pl.cdiv(Bp8, 2), SUBLANE))
    Bp = _round_up(Bp8, BB)

    # One-time layout packing (pre-pack offline for real deployments).
    packed = pack_params(params, hidden_dim)

    emb = jnp.take(params["embedding"], tokens, axis=0)        # [B, T, E]
    x_tm = jnp.transpose(emb, (1, 0, 2))                       # [T, B, E] time-major
    x_tm = jnp.pad(x_tm, ((0, 0), (0, Bp - B), (0, 0)))        # batch -> BB multiple
    # [x(t) | x(T-1-t) | 1]: backward-direction inputs pre-reversed, bias folded.
    x_cat = jnp.concatenate(
        [x_tm, x_tm[::-1], jnp.ones((T, Bp, 1), jnp.float32)], axis=-1
    ).astype(jnp.bfloat16)                                     # [T, Bp, 2E+1]

    grid = (Bp // BB,)   # "parallel" batch-block axis -> megacore / v7x dual-TC sharding
    out_tm = pl.pallas_call(
        bilstm_fc_kernel,
        out_shape=jax.ShapeDtypeStruct((T, Bp, Op), jnp.float32),
        grid_spec=pltpu.PrefetchScalarGridSpec(
            num_scalar_prefetch=0,
            grid=grid,
            in_specs=[
                pl.BlockSpec((T, BB, EC), lambda b: (0, b, 0)),   # x_cat
                pl.BlockSpec((EC, G), lambda b: (0, 0)),          # wih fused (+bias row)
                pl.BlockSpec((S, G), lambda b: (0, 0)),           # whh fused
                pl.BlockSpec((S, Op), lambda b: (0, 0)),          # wfc_f
                pl.BlockSpec((S, Op), lambda b: (0, 0)),          # wfc_b
                pl.BlockSpec((1, Op), lambda b: (0, 0)),          # bfc
            ],
            out_specs=pl.BlockSpec((T, BB, Op), lambda b: (0, b, 0)),
            scratch_shapes=[
                pltpu.VMEM((T, BB, G), jnp.float32),     # xg_buf
                pltpu.VMEM((T, BB, S), jnp.float32),     # hbuf_f
                pltpu.VMEM((T, BB, S), jnp.float32),     # hbuf_b
            ],
        ),
        compiler_params=pltpu.CompilerParams(
            dimension_semantics=("parallel",),
            vmem_limit_bytes=64 * 1024 * 1024,
        ),
    )(x_cat, packed["wih"], packed["whh"],
      packed["wfc_f"], packed["wfc_b"], packed["bfc"])

    # Back to batch-major; strip batch and output-lane padding.
    return jnp.transpose(out_tm, (1, 0, 2))[:B, :, :O]


# -----------------------------------------------------------------------------
# Pure-JAX f32 reference (for correctness check)
# -----------------------------------------------------------------------------
def ref_forward(tokens, params):
    emb = jnp.take(params["embedding"], tokens, axis=0)   # [B, T, E]

    def run_dir(x_seq, wih, whh, b):
        Bb = x_seq.shape[0]
        Hh = whh.shape[0]

        def step(carry, x_t):
            h, c = carry
            gates = x_t @ wih + h @ whh + b[0]
            i, f, g, o = jnp.split(gates, 4, axis=-1)
            i = jax.nn.sigmoid(i)
            f = jax.nn.sigmoid(f)
            g = jnp.tanh(g)
            o = jax.nn.sigmoid(o)
            c = f * c + i * g
            h = o * jnp.tanh(c)
            return (h, c), h

        init = (jnp.zeros((Bb, Hh), jnp.float32), jnp.zeros((Bb, Hh), jnp.float32))
        _, hs = jax.lax.scan(step, init, jnp.transpose(x_seq, (1, 0, 2)))
        return jnp.transpose(hs, (1, 0, 2))

    fwd = run_dir(emb, params["wih_f"], params["whh_f"], params["b_f"])
    bwd = run_dir(emb[:, ::-1], params["wih_b"], params["whh_b"], params["b_b"])[:, ::-1]
    feats = jnp.concatenate([fwd, bwd], axis=-1)
    wfc = jnp.concatenate([params["wfc_f"], params["wfc_b"]], axis=0)
    return feats @ wfc + params["bfc"][0]


# -----------------------------------------------------------------------------
# Deterministic parameter construction (shapes implied by the nn.Module __init__)
# -----------------------------------------------------------------------------
def init_params(key, vocab_size, embed_dim, hidden_dim, output_dim):
    ks = jax.random.split(key, 12)
    k_lstm = 1.0 / jnp.sqrt(hidden_dim)
    k_fc = 1.0 / jnp.sqrt(2.0 * hidden_dim)

    def u(k, shape, scale):
        return jax.random.uniform(k, shape, jnp.float32, -scale, scale)

    emb = jax.random.normal(ks[0], (vocab_size, embed_dim), jnp.float32)
    emb = emb.at[0].set(0.0)  # padding_idx=0

    params = {
        "embedding": emb,
        # PyTorch LSTM weights are [4H, E]/[4H, H]; stored transposed for x @ W.
        "wih_f": u(ks[1], (embed_dim, 4 * hidden_dim), k_lstm),
        "whh_f": u(ks[2], (hidden_dim, 4 * hidden_dim), k_lstm),
        "b_f": u(ks[3], (1, 4 * hidden_dim), k_lstm) + u(ks[4], (1, 4 * hidden_dim), k_lstm),
        "wih_b": u(ks[5], (embed_dim, 4 * hidden_dim), k_lstm),
        "whh_b": u(ks[6], (hidden_dim, 4 * hidden_dim), k_lstm),
        "b_b": u(ks[7], (1, 4 * hidden_dim), k_lstm) + u(ks[8], (1, 4 * hidden_dim), k_lstm),
        # fc: PyTorch Linear(2H, O) weight is [O, 2H]; stored transposed & split per direction.
        "wfc_f": u(ks[9], (hidden_dim, output_dim), k_fc),
        "wfc_b": u(ks[10], (hidden_dim, output_dim), k_fc),
        "bfc": u(ks[11], (1, output_dim), k_fc),
    }
    return params


if __name__ == "__main__":
    # Small deterministic configuration (matches the module's hyperparameters).
    vocab_size = 100
    embed_dim = 50
    hidden_dim = 64
    output_dim = 9          # stand-in for len(label_encoder.classes_)
    batch, seq = 2, 8

    key = jax.random.PRNGKey(0)
    kp, kx = jax.random.split(key)
    params = init_params(kp, vocab_size, embed_dim, hidden_dim, output_dim)
    tokens = jax.random.randint(kx, (batch, seq), 0, vocab_size, dtype=jnp.int32)

    out = bilstm_model_forward(tokens, params, hidden_dim=hidden_dim)
    out = jax.block_until_ready(out)

    ref = jax.block_until_ready(ref_forward(tokens, params))
    assert out.shape == (batch, seq, output_dim)
    # bf16 matmul operands vs. f32 reference -> loosened tolerance.
    assert jnp.allclose(out, ref, atol=3e-2, rtol=3e-2), "mismatch vs JAX reference"

    print("KERNEL_OK")
</pallas_src>

<mosaic_0001>
module attributes {stable_mosaic.version = 11 : i64} {
  func.func @bilstm_fc_kernel(%arg0: i32, %arg1: memref<8x8x101xbf16, #tpu.memory_space<vmem>>, %arg2: memref<101x512xbf16, #tpu.memory_space<vmem>>, %arg3: memref<128x512xbf16, #tpu.memory_space<vmem>>, %arg4: memref<128x128xbf16, #tpu.memory_space<vmem>>, %arg5: memref<128x128xbf16, #tpu.memory_space<vmem>>, %arg6: memref<1x128xf32, #tpu.memory_space<vmem>>, %arg7: memref<8x8x128xf32, #tpu.memory_space<vmem>>, %arg8: memref<8x8x512xf32, #tpu.memory_space<vmem>>, %arg9: memref<8x8x128xf32, #tpu.memory_space<vmem>>, %arg10: memref<8x8x128xf32, #tpu.memory_space<vmem>>) attributes {dimension_semantics = [#tpu.dimension_semantics<parallel>], iteration_bounds = array<i64: 1>, scalar_prefetch = 0 : i64, scratch_operands = 3 : i64, tpu.core_type = #tpu.core_type<tc>, window_params = [{transform_indices = @transform_0, window_bounds = array<i64: 8, 8, 101>}, {pipeline_mode = #tpu.pipeline_mode<synchronous>, transform_indices = @transform_1, window_bounds = array<i64: 101, 512>}, {pipeline_mode = #tpu.pipeline_mode<synchronous>, transform_indices = @transform_2, window_bounds = array<i64: 128, 512>}, {pipeline_mode = #tpu.pipeline_mode<synchronous>, transform_indices = @transform_3, window_bounds = array<i64: 128, 128>}, {pipeline_mode = #tpu.pipeline_mode<synchronous>, transform_indices = @transform_4, window_bounds = array<i64: 128, 128>}, {pipeline_mode = #tpu.pipeline_mode<synchronous>, transform_indices = @transform_5, window_bounds = array<i64: 1, 128>}, {transform_indices = @transform_6, window_bounds = array<i64: 8, 8, 128>}]} {
    %c0 = arith.constant 0 : index
    %c0_0 = arith.constant 0 : index
    %c0_1 = arith.constant 0 : index
    %0 = vector.load %arg1[%c0, %c0_0, %c0_1] : memref<8x8x101xbf16, #tpu.memory_space<vmem>>, vector<8x8x101xbf16>
    %1 = vector.shape_cast %0 : vector<8x8x101xbf16> to vector<64x101xbf16>
    %c0_2 = arith.constant 0 : index
    %c0_3 = arith.constant 0 : index
    %2 = vector.load %arg2[%c0_2, %c0_3] : memref<101x512xbf16, #tpu.memory_space<vmem>>, vector<101x512xbf16>
    %cst = arith.constant dense<0.000000e+00> : vector<64x512xf32>
    %3 = tpu.matmul %1, %2, %cst {dimension_numbers = #tpu.dot_dimension_numbers<[1], [0], [0], [1], [0, 0, 1, 1], [], []>} : vector<64x101xbf16>, vector<101x512xbf16>, vector<64x512xf32> -> vector<64x512xf32>
    %4 = vector.shape_cast %3 : vector<64x512xf32> to vector<8x8x512xf32>
    %c0_4 = arith.constant 0 : index
    %c0_5 = arith.constant 0 : index
    %c0_6 = arith.constant 0 : index
    %5 = vector.load %arg8[%c0_4, %c0_5, %c0_6] : memref<8x8x512xf32, #tpu.memory_space<vmem>>, vector<8x8x512xf32>
    tpu.vector_store %arg8[%c0_4, %c0_5, %c0_6], %4 {strides = array<i32>} : memref<8x8x512xf32, #tpu.memory_space<vmem>>, vector<8x8x512xf32>,
    %cst_7 = arith.constant 0.000000e+00 : f32
    %6 = vector.broadcast %cst_7 : f32 to vector<8x128xf32>
    %c0_i32 = arith.constant 0 : i32
    %7 = arith.index_cast %c0_i32 : i32 to index
    %c0_8 = arith.constant 0 : index
    %c0_9 = arith.constant 0 : index
    %8 = vector.load %arg8[%7, %c0_8, %c0_9] : memref<8x8x512xf32, #tpu.memory_space<vmem>>, vector<1x8x512xf32>
    %9 = vector.shape_cast %8 : vector<1x8x512xf32> to vector<8x512xf32>
    %10 = arith.truncf %6 : vector<8x128xf32> to vector<8x128xbf16>
    %c0_10 = arith.constant 0 : index
    %c0_11 = arith.constant 0 : index
    %11 = vector.load %arg3[%c0_10, %c0_11] : memref<128x512xbf16, #tpu.memory_space<vmem>>, vector<128x512xbf16>
    %cst_12 = arith.constant dense<0.000000e+00> : vector<8x512xf32>
    %12 = tpu.matmul %10, %11, %cst_12 {dimension_numbers = #tpu.dot_dimension_numbers<[1], [0], [0], [1], [0, 0, 1, 1], [], []>} : vector<8x128xbf16>, vector<128x512xbf16>, vector<8x512xf32> -> vector<8x512xf32>
    %13 = arith.addf %9, %12 : vector<8x512xf32>
    %14 = vector.extract_strided_slice %13 {offsets = [0, 0], sizes = [8, 128], strides = [1, 1]} : vector<8x512xf32> to vector<8x128xf32>
    %15 = arith.negf %14 : vector<8x128xf32>
    %16 = math.exp %15 : vector<8x128xf32>
    %cst_13 = arith.constant 1.000000e+00 : f32
    %17 = vector.broadcast %cst_13 : f32 to vector<8x128xf32>
    %18 = arith.addf %17, %16 : vector<8x128xf32>
    %19 = arith.divf %17, %18 : vector<8x128xf32>
    %20 = vector.extract_strided_slice %13 {offsets = [0, 128], sizes = [8, 128], strides = [1, 1]} : vector<8x512xf32> to vector<8x128xf32>
    %21 = arith.negf %20 : vector<8x128xf32>
    %22 = math.exp %21 : vector<8x128xf32>
    %cst_14 = arith.constant 1.000000e+00 : f32
    %23 = vector.broadcast %cst_14 : f32 to vector<8x128xf32>
    %24 = arith.addf %23, %22 : vector<8x128xf32>
    %25 = arith.divf %23, %24 : vector<8x128xf32>
    %26 = vector.extract_strided_slice %13 {offsets = [0, 256], sizes = [8, 128], strides = [1, 1]} : vector<8x512xf32> to vector<8x128xf32>
    %27 = math.tanh %26 : vector<8x128xf32>
    %28 = vector.extract_strided_slice %13 {offsets = [0, 384], sizes = [8, 128], strides = [1, 1]} : vector<8x512xf32> to vector<8x128xf32>
    %29 = arith.negf %28 : vector<8x128xf32>
    %30 = math.exp %29 : vector<8x128xf32>
    %cst_15 = arith.constant 1.000000e+00 : f32
    %31 = vector.broadcast %cst_15 : f32 to vector<8x128xf32>
    %32 = arith.addf %31, %30 : vector<8x128xf32>
    %33 = arith.divf %31, %32 : vector<8x128xf32>
    %34 = arith.mulf %25, %6 : vector<8x128xf32>
    %35 = arith.mulf %19, %27 : vector<8x128xf32>
    %36 = arith.addf %34, %35 : vector<8x128xf32>
    %37 = math.tanh %36 : vector<8x128xf32>
    %38 = arith.mulf %33, %37 : vector<8x128xf32>
    %39 = arith.index_cast %c0_i32 : i32 to index
    %c0_16 = arith.constant 0 : index
    %c0_17 = arith.constant 0 : index
    %40 = vector.load %arg9[%39, %c0_16, %c0_17] : memref<8x8x128xf32, #tpu.memory_space<vmem>>, vector<1x8x128xf32>
    %41 = vector.shape_cast %40 : vector<1x8x128xf32> to vector<8x128xf32>
    %42 = vector.shape_cast %38 : vector<8x128xf32> to vector<1x8x128xf32>
    tpu.vector_store %arg9[%39, %c0_16, %c0_17], %42 {strides = array<i32>} : memref<8x8x128xf32, #tpu.memory_space<vmem>>, vector<1x8x128xf32>,
    %c7_i32 = arith.constant 7 : i32
    %43 = arith.subi %c7_i32, %c0_i32 : i32
    %44 = arith.index_cast %43 : i32 to index
    %c0_18 = arith.constant 0 : index
    %c0_19 = arith.constant 0 : index
    %45 = vector.load %arg10[%44, %c0_18, %c0_19] : memref<8x8x128xf32, #tpu.memory_space<vmem>>, vector<1x8x128xf32>
    %46 = vector.shape_cast %45 : vector<1x8x128xf32> to vector<8x128xf32>
    %47 = vector.shape_cast %38 : vector<8x128xf32> to vector<1x8x128xf32>
    tpu.vector_store %arg10[%44, %c0_18, %c0_19], %47 {strides = array<i32>} : memref<8x8x128xf32, #tpu.memory_space<vmem>>, vector<1x8x128xf32>,
    %c1_i32 = arith.constant 1 : i32
    %48 = arith.index_cast %c1_i32 : i32 to index
    %c0_20 = arith.constant 0 : index
    %c0_21 = arith.constant 0 : index
    %49 = vector.load %arg8[%48, %c0_20, %c0_21] : memref<8x8x512xf32, #tpu.memory_space<vmem>>, vector<1x8x512xf32>
    %50 = vector.shape_cast %49 : vector<1x8x512xf32> to vector<8x512xf32>
    %51 = arith.truncf %38 : vector<8x128xf32> to vector<8x128xbf16>
    %c0_22 = arith.constant 0 : index
    %c0_23 = arith.constant 0 : index
    %52 = vector.load %arg3[%c0_22, %c0_23] : memref<128x512xbf16, #tpu.memory_space<vmem>>, vector<128x512xbf16>
    %cst_24 = arith.constant dense<0.000000e+00> : vector<8x512xf32>
    %53 = tpu.matmul %51, %52, %cst_24 {dimension_numbers = #tpu.dot_dimension_numbers<[1], [0], [0], [1], [0, 0, 1, 1], [], []>} : vector<8x128xbf16>, vector<128x512xbf16>, vector<8x512xf32> -> vector<8x512xf32>
    %54 = arith.addf %50, %53 : vector<8x512xf32>
    %55 = vector.extract_strided_slice %54 {offsets = [0, 0], sizes = [8, 128], strides = [1, 1]} : vector<8x512xf32> to vector<8x128xf32>
    %56 = arith.negf %55 : vector<8x128xf32>
    %57 = math.exp %56 : vector<8x128xf32>
    %cst_25 = arith.constant 1.000000e+00 : f32
    %58 = vector.broadcast %cst_25 : f32 to vector<8x128xf32>
    %59 = arith.addf %58, %57 : vector<8x128xf32>
    %60 = arith.divf %58, %59 : vector<8x128xf32>
    %61 = vector.extract_strided_slice %54 {offsets = [0, 128], sizes = [8, 128], strides = [1, 1]} : vector<8x512xf32> to vector<8x128xf32>
    %62 = arith.negf %61 : vector<8x128xf32>
    %63 = math.exp %62 : vector<8x128xf32>
    %cst_26 = arith.constant 1.000000e+00 : f32
    %64 = vector.broadcast %cst_26 : f32 to vector<8x128xf32>
    %65 = arith.addf %64, %63 : vector<8x128xf32>
    %66 = arith.divf %64, %65 : vector<8x128xf32>
    %67 = vector.extract_strided_slice %54 {offsets = [0, 256], sizes = [8, 128], strides = [1, 1]} : vector<8x512xf32> to vector<8x128xf32>
    %68 = math.tanh %67 : vector<8x128xf32>
    %69 = vector.extract_strided_slice %54 {offsets = [0, 384], sizes = [8, 128], strides = [1, 1]} : vector<8x512xf32> to vector<8x128xf32>
    %70 = arith.negf %69 : vector<8x128xf32>
    %71 = math.exp %70 : vector<8x128xf32>
    %cst_27 = arith.constant 1.000000e+00 : f32
    %72 = vector.broadcast %cst_27 : f32 to vector<8x128xf32>
    %73 = arith.addf %72, %71 : vector<8x128xf32>
    %74 = arith.divf %72, %73 : vector<8x128xf32>
    %75 = arith.mulf %66, %36 : vector<8x128xf32>
    %76 = arith.mulf %60, %68 : vector<8x128xf32>
    %77 = arith.addf %75, %76 : vector<8x128xf32>
    %78 = math.tanh %77 : vector<8x128xf32>
    %79 = arith.mulf %74, %78 : vector<8x128xf32>
    %80 = arith.index_cast %c1_i32 : i32 to index
    %c0_28 = arith.constant 0 : index
    %c0_29 = arith.constant 0 : index
    %81 = vector.load %arg9[%80, %c0_28, %c0_29] : memref<8x8x128xf32, #tpu.memory_space<vmem>>, vector<1x8x128xf32>
    %82 = vector.shape_cast %81 : vector<1x8x128xf32> to vector<8x128xf32>
    %83 = vector.shape_cast %79 : vector<8x128xf32> to vector<1x8x128xf32>
    tpu.vector_store %arg9[%80, %c0_28, %c0_29], %83 {strides = array<i32>} : memref<8x8x128xf32, #tpu.memory_space<vmem>>, vector<1x8x128xf32>,
    %c7_i32_30 = arith.constant 7 : i32
    %84 = arith.subi %c7_i32_30, %c1_i32 : i32
    %85 = arith.index_cast %84 : i32 to index
    %c0_31 = arith.constant 0 : index
    %c0_32 = arith.constant 0 : index
    %86 = vector.load %arg10[%85, %c0_31, %c0_32] : memref<8x8x128xf32, #tpu.memory_space<vmem>>, vector<1x8x128xf32>
    %87 = vector.shape_cast %86 : vector<1x8x128xf32> to vector<8x128xf32>
    %88 = vector.shape_cast %79 : vector<8x128xf32> to vector<1x8x128xf32>
    tpu.vector_store %arg10[%85, %c0_31, %c0_32], %88 {strides = array<i32>} : memref<8x8x128xf32, #tpu.memory_space<vmem>>, vector<1x8x128xf32>,
    %c2_i32 = arith.constant 2 : i32
    %89 = arith.index_cast %c2_i32 : i32 to index
    %c0_33 = arith.constant 0 : index
    %c0_34 = arith.constant 0 : index
    %90 = vector.load %arg8[%89, %c0_33, %c0_34] : memref<8x8x512xf32, #tpu.memory_space<vmem>>, vector<1x8x512xf32>
    %91 = vector.shape_cast %90 : vector<1x8x512xf32> to vector<8x512xf32>
    %92 = arith.truncf %79 : vector<8x128xf32> to vector<8x128xbf16>
    %c0_35 = arith.constant 0 : index
    %c0_36 = arith.constant 0 : index
    %93 = vector.load %arg3[%c0_35, %c0_36] : memref<128x512xbf16, #tpu.memory_space<vmem>>, vector<128x512xbf16>
    %cst_37 = arith.constant dense<0.000000e+00> : vector<8x512xf32>
    %94 = tpu.matmul %92, %93, %cst_37 {dimension_numbers = #tpu.dot_dimension_numbers<[1], [0], [0], [1], [0, 0, 1, 1], [], []>} : vector<8x128xbf16>, vector<128x512xbf16>, vector<8x512xf32> -> vector<8x512xf32>
    %95 = arith.addf %91, %94 : vector<8x512xf32>
    %96 = vector.extract_strided_slice %95 {offsets = [0, 0], sizes = [8, 128], strides = [1, 1]} : vector<8x512xf32> to vector<8x128xf32>
    %97 = arith.negf %96 : vector<8x128xf32>
    %98 = math.exp %97 : vector<8x128xf32>
    %cst_38 = arith.constant 1.000000e+00 : f32
    %99 = vector.broadcast %cst_38 : f32 to vector<8x128xf32>
    %100 = arith.addf %99, %98 : vector<8x128xf32>
    %101 = arith.divf %99, %100 : vector<8x128xf32>
    %102 = vector.extract_strided_slice %95 {offsets = [0, 128], sizes = [8, 128], strides = [1, 1]} : vector<8x512xf32> to vector<8x128xf32>
    %103 = arith.negf %102 : vector<8x128xf32>
    %104 = math.exp %103 : vector<8x128xf32>
    %cst_39 = arith.constant 1.000000e+00 : f32
    %105 = vector.broadcast %cst_39 : f32 to vector<8x128xf32>
    %106 = arith.addf %105, %104 : vector<8x128xf32>
    %107 = arith.divf %105, %106 : vector<8x128xf32>
    %108 = vector.extract_strided_slice %95 {offsets = [0, 256], sizes = [8, 128], strides = [1, 1]} : vector<8x512xf32> to vector<8x128xf32>
    %109 = math.tanh %108 : vector<8x128xf32>
    %110 = vector.extract_strided_slice %95 {offsets = [0, 384], sizes = [8, 128], strides = [1, 1]} : vector<8x512xf32> to vector<8x128xf32>
    %111 = arith.negf %110 : vector<8x128xf32>
    %112 = math.exp %111 : vector<8x128xf32>
    %cst_40 = arith.constant 1.000000e+00 : f32
    %113 = vector.broadcast %cst_40 : f32 to vector<8x128xf32>
    %114 = arith.addf %113, %112 : vector<8x128xf32>
    %115 = arith.divf %113, %114 : vector<8x128xf32>
    %116 = arith.mulf %107, %77 : vector<8x128xf32>
    %117 = arith.mulf %101, %109 : vector<8x128xf32>
    %118 = arith.addf %116, %117 : vector<8x128xf32>
    %119 = math.tanh %118 : vector<8x128xf32>
    %120 = arith.mulf %115, %119 : vector<8x128xf32>
    %121 = arith.index_cast %c2_i32 : i32 to index
    %c0_41 = arith.constant 0 : index
    %c0_42 = arith.constant 0 : index
    %122 = vector.load %arg9[%121, %c0_41, %c0_42] : memref<8x8x128xf32, #tpu.memory_space<vmem>>, vector<1x8x128xf32>
    %123 = vector.shape_cast %122 : vector<1x8x128xf32> to vector<8x128xf32>
    %124 = vector.shape_cast %120 : vector<8x128xf32> to vector<1x8x128xf32>
    tpu.vector_store %arg9[%121, %c0_41, %c0_42], %124 {strides = array<i32>} : memref<8x8x128xf32, #tpu.memory_space<vmem>>, vector<1x8x128xf32>,
    %c7_i32_43 = arith.constant 7 : i32
    %125 = arith.subi %c7_i32_43, %c2_i32 : i32
    %126 = arith.index_cast %125 : i32 to index
    %c0_44 = arith.constant 0 : index
    %c0_45 = arith.constant 0 : index
    %127 = vector.load %arg10[%126, %c0_44, %c0_45] : memref<8x8x128xf32, #tpu.memory_space<vmem>>, vector<1x8x128xf32>
    %128 = vector.shape_cast %127 : vector<1x8x128xf32> to vector<8x128xf32>
    %129 = vector.shape_cast %120 : vector<8x128xf32> to vector<1x8x128xf32>
    tpu.vector_store %arg10[%126, %c0_44, %c0_45], %129 {strides = array<i32>} : memref<8x8x128xf32, #tpu.memory_space<vmem>>, vector<1x8x128xf32>,
    %c3_i32 = arith.constant 3 : i32
    %130 = arith.index_cast %c3_i32 : i32 to index
    %c0_46 = arith.constant 0 : index
    %c0_47 = arith.constant 0 : index
    %131 = vector.load %arg8[%130, %c0_46, %c0_47] : memref<8x8x512xf32, #tpu.memory_space<vmem>>, vector<1x8x512xf32>
    %132 = vector.shape_cast %131 : vector<1x8x512xf32> to vector<8x512xf32>
    %133 = arith.truncf %120 : vector<8x128xf32> to vector<8x128xbf16>
    %c0_48 = arith.constant 0 : index
    %c0_49 = arith.constant 0 : index
    %134 = vector.load %arg3[%c0_48, %c0_49] : memref<128x512xbf16, #tpu.memory_space<vmem>>, vector<128x512xbf16>
    %cst_50 = arith.constant dense<0.000000e+00> : vector<8x512xf32>
    %135 = tpu.matmul %133, %134, %cst_50 {dimension_numbers = #tpu.dot_dimension_numbers<[1], [0], [0], [1], [0, 0, 1, 1], [], []>} : vector<8x128xbf16>, vector<128x512xbf16>, vector<8x512xf32> -> vector<8x512xf32>
    %136 = arith.addf %132, %135 : vector<8x512xf32>
    %137 = vector.extract_strided_slice %136 {offsets = [0, 0], sizes = [8, 128], strides = [1, 1]} : vector<8x512xf32> to vector<8x128xf32>
    %138 = arith.negf %137 : vector<8x128xf32>
    %139 = math.exp %138 : vector<8x128xf32>
    %cst_51 = arith.constant 1.000000e+00 : f32
    %140 = vector.broadcast %cst_51 : f32 to vector<8x128xf32>
    %141 = arith.addf %140, %139 : vector<8x128xf32>
    %142 = arith.divf %140, %141 : vector<8x128xf32>
    %143 = vector.extract_strided_slice %136 {offsets = [0, 128], sizes = [8, 128], strides = [1, 1]} : vector<8x512xf32> to vector<8x128xf32>
    %144 = arith.negf %143 : vector<8x128xf32>
    %145 = math.exp %144 : vector<8x128xf32>
    %cst_52 = arith.constant 1.000000e+00 : f32
    %146 = vector.broadcast %cst_52 : f32 to vector<8x128xf32>
    %147 = arith.addf %146, %145 : vector<8x128xf32>
    %148 = arith.divf %146, %147 : vector<8x128xf32>
    %149 = vector.extract_strided_slice %136 {offsets = [0, 256], sizes = [8, 128], strides = [1, 1]} : vector<8x512xf32> to vector<8x128xf32>
    %150 = math.tanh %149 : vector<8x128xf32>
    %151 = vector.extract_strided_slice %136 {offsets = [0, 384], sizes = [8, 128], strides = [1, 1]} : vector<8x512xf32> to vector<8x128xf32>
    %152 = arith.negf %151 : vector<8x128xf32>
    %153 = math.exp %152 : vector<8x128xf32>
    %cst_53 = arith.constant 1.000000e+00 : f32
    %154 = vector.broadcast %cst_53 : f32 to vector<8x128xf32>
    %155 = arith.addf %154, %153 : vector<8x128xf32>
    %156 = arith.divf %154, %155 : vector<8x128xf32>
    %157 = arith.mulf %148, %118 : vector<8x128xf32>
    %158 = arith.mulf %142, %150 : vector<8x128xf32>
    %159 = arith.addf %157, %158 : vector<8x128xf32>
    %160 = math.tanh %159 : vector<8x128xf32>
    %161 = arith.mulf %156, %160 : vector<8x128xf32>
    %162 = arith.index_cast %c3_i32 : i32 to index
    %c0_54 = arith.constant 0 : index
    %c0_55 = arith.constant 0 : index
    %163 = vector.load %arg9[%162, %c0_54, %c0_55] : memref<8x8x128xf32, #tpu.memory_space<vmem>>, vector<1x8x128xf32>
    %164 = vector.shape_cast %163 : vector<1x8x128xf32> to vector<8x128xf32>
    %165 = vector.shape_cast %161 : vector<8x128xf32> to vector<1x8x128xf32>
    tpu.vector_store %arg9[%162, %c0_54, %c0_55], %165 {strides = array<i32>} : memref<8x8x128xf32, #tpu.memory_space<vmem>>, vector<1x8x128xf32>,
    %c7_i32_56 = arith.constant 7 : i32
    %166 = arith.subi %c7_i32_56, %c3_i32 : i32
    %167 = arith.index_cast %166 : i32 to index
    %c0_57 = arith.constant 0 : index
    %c0_58 = arith.constant 0 : index
    %168 = vector.load %arg10[%167, %c0_57, %c0_58] : memref<8x8x128xf32, #tpu.memory_space<vmem>>, vector<1x8x128xf32>
    %169 = vector.shape_cast %168 : vector<1x8x128xf32> to vector<8x128xf32>
    %170 = vector.shape_cast %161 : vector<8x128xf32> to vector<1x8x128xf32>
    tpu.vector_store %arg10[%167, %c0_57, %c0_58], %170 {strides = array<i32>} : memref<8x8x128xf32, #tpu.memory_space<vmem>>, vector<1x8x128xf32>,
    %c4_i32 = arith.constant 4 : i32
    %171 = arith.index_cast %c4_i32 : i32 to index
    %c0_59 = arith.constant 0 : index
    %c0_60 = arith.constant 0 : index
    %172 = vector.load %arg8[%171, %c0_59, %c0_60] : memref<8x8x512xf32, #tpu.memory_space<vmem>>, vector<1x8x512xf32>
    %173 = vector.shape_cast %172 : vector<1x8x512xf32> to vector<8x512xf32>
    %174 = arith.truncf %161 : vector<8x128xf32> to vector<8x128xbf16>
    %c0_61 = arith.constant 0 : index
    %c0_62 = arith.constant 0 : index
    %175 = vector.load %arg3[%c0_61, %c0_62] : memref<128x512xbf16, #tpu.memory_space<vmem>>, vector<128x512xbf16>
    %cst_63 = arith.constant dense<0.000000e+00> : vector<8x512xf32>
    %176 = tpu.matmul %174, %175, %cst_63 {dimension_numbers = #tpu.dot_dimension_numbers<[1], [0], [0], [1], [0, 0, 1, 1], [], []>} : vector<8x128xbf16>, vector<128x512xbf16>, vector<8x512xf32> -> vector<8x512xf32>
    %177 = arith.addf %173, %176 : vector<8x512xf32>
    %178 = vector.extract_strided_slice %177 {offsets = [0, 0], sizes = [8, 128], strides = [1, 1]} : vector<8x512xf32> to vector<8x128xf32>
    %179 = arith.negf %178 : vector<8x128xf32>
    %180 = math.exp %179 : vector<8x128xf32>
    %cst_64 = arith.constant 1.000000e+00 : f32
    %181 = vector.broadcast %cst_64 : f32 to vector<8x128xf32>
    %182 = arith.addf %181, %180 : vector<8x128xf32>
    %183 = arith.divf %181, %182 : vector<8x128xf32>
    %184 = vector.extract_strided_slice %177 {offsets = [0, 128], sizes = [8, 128], strides = [1, 1]} : vector<8x512xf32> to vector<8x128xf32>
    %185 = arith.negf %184 : vector<8x128xf32>
    %186 = math.exp %185 : vector<8x128xf32>
    %cst_65 = arith.constant 1.000000e+00 : f32
    %187 = vector.broadcast %cst_65 : f32 to vector<8x128xf32>
    %188 = arith.addf %187, %186 : vector<8x128xf32>
    %189 = arith.divf %187, %188 : vector<8x128xf32>
    %190 = vector.extract_strided_slice %177 {offsets = [0, 256], sizes = [8, 128], strides = [1, 1]} : vector<8x512xf32> to vector<8x128xf32>
    %191 = math.tanh %190 : vector<8x128xf32>
    %192 = vector.extract_strided_slice %177 {offsets = [0, 384], sizes = [8, 128], strides = [1, 1]} : vector<8x512xf32> to vector<8x128xf32>
    %193 = arith.negf %192 : vector<8x128xf32>
    %194 = math.exp %193 : vector<8x128xf32>
    %cst_66 = arith.constant 1.000000e+00 : f32
    %195 = vector.broadcast %cst_66 : f32 to vector<8x128xf32>
    %196 = arith.addf %195, %194 : vector<8x128xf32>
    %197 = arith.divf %195, %196 : vector<8x128xf32>
    %198 = arith.mulf %189, %159 : vector<8x128xf32>
    %199 = arith.mulf %183, %191 : vector<8x128xf32>
    %200 = arith.addf %198, %199 : vector<8x128xf32>
    %201 = math.tanh %200 : vector<8x128xf32>
    %202 = arith.mulf %197, %201 : vector<8x128xf32>
    %203 = arith.index_cast %c4_i32 : i32 to index
    %c0_67 = arith.constant 0 : index
    %c0_68 = arith.constant 0 : index
    %204 = vector.load %arg9[%203, %c0_67, %c0_68] : memref<8x8x128xf32, #tpu.memory_space<vmem>>, vector<1x8x128xf32>
    %205 = vector.shape_cast %204 : vector<1x8x128xf32> to vector<8x128xf32>
    %206 = vector.shape_cast %202 : vector<8x128xf32> to vector<1x8x128xf32>
    tpu.vector_store %arg9[%203, %c0_67, %c0_68], %206 {strides = array<i32>} : memref<8x8x128xf32, #tpu.memory_space<vmem>>, vector<1x8x128xf32>,
    %c7_i32_69 = arith.constant 7 : i32
    %207 = arith.subi %c7_i32_69, %c4_i32 : i32
    %208 = arith.index_cast %207 : i32 to index
    %c0_70 = arith.constant 0 : index
    %c0_71 = arith.constant 0 : index
    %209 = vector.load %arg10[%208, %c0_70, %c0_71] : memref<8x8x128xf32, #tpu.memory_space<vmem>>, vector<1x8x128xf32>
    %210 = vector.shape_cast %209 : vector<1x8x128xf32> to vector<8x128xf32>
    %211 = vector.shape_cast %202 : vector<8x128xf32> to vector<1x8x128xf32>
    tpu.vector_store %arg10[%208, %c0_70, %c0_71], %211 {strides = array<i32>} : memref<8x8x128xf32, #tpu.memory_space<vmem>>, vector<1x8x128xf32>,
    %c5_i32 = arith.constant 5 : i32
    %212 = arith.index_cast %c5_i32 : i32 to index
    %c0_72 = arith.constant 0 : index
    %c0_73 = arith.constant 0 : index
    %213 = vector.load %arg8[%212, %c0_72, %c0_73] : memref<8x8x512xf32, #tpu.memory_space<vmem>>, vector<1x8x512xf32>
    %214 = vector.shape_cast %213 : vector<1x8x512xf32> to vector<8x512xf32>
    %215 = arith.truncf %202 : vector<8x128xf32> to vector<8x128xbf16>
    %c0_74 = arith.constant 0 : index
    %c0_75 = arith.constant 0 : index
    %216 = vector.load %arg3[%c0_74, %c0_75] : memref<128x512xbf16, #tpu.memory_space<vmem>>, vector<128x512xbf16>
    %cst_76 = arith.constant dense<0.000000e+00> : vector<8x512xf32>
    %217 = tpu.matmul %215, %216, %cst_76 {dimension_numbers = #tpu.dot_dimension_numbers<[1], [0], [0], [1], [0, 0, 1, 1], [], []>} : vector<8x128xbf16>, vector<128x512xbf16>, vector<8x512xf32> -> vector<8x512xf32>
    %218 = arith.addf %214, %217 : vector<8x512xf32>
    %219 = vector.extract_strided_slice %218 {offsets = [0, 0], sizes = [8, 128], strides = [1, 1]} : vector<8x512xf32> to vector<8x128xf32>
    %220 = arith.negf %219 : vector<8x128xf32>
    %221 = math.exp %220 : vector<8x128xf32>
    %cst_77 = arith.constant 1.000000e+00 : f32
    %222 = vector.broadcast %cst_77 : f32 to vector<8x128xf32>
    %223 = arith.addf %222, %221 : vector<8x128xf32>
    %224 = arith.divf %222, %223 : vector<8x128xf32>
    %225 = vector.extract_strided_slice %218 {offsets = [0, 128], sizes = [8, 128], strides = [1, 1]} : vector<8x512xf32> to vector<8x128xf32>
    %226 = arith.negf %225 : vector<8x128xf32>
    %227 = math.exp %226 : vector<8x128xf32>
    %cst_78 = arith.constant 1.000000e+00 : f32
    %228 = vector.broadcast %cst_78 : f32 to vector<8x128xf32>
    %229 = arith.addf %228, %227 : vector<8x128xf32>
    %230 = arith.divf %228, %229 : vector<8x128xf32>
    %231 = vector.extract_strided_slice %218 {offsets = [0, 256], sizes = [8, 128], strides = [1, 1]} : vector<8x512xf32> to vector<8x128xf32>
    %232 = math.tanh %231 : vector<8x128xf32>
    %233 = vector.extract_strided_slice %218 {offsets = [0, 384], sizes = [8, 128], strides = [1, 1]} : vector<8x512xf32> to vector<8x128xf32>
    %234 = arith.negf %233 : vector<8x128xf32>
    %235 = math.exp %234 : vector<8x128xf32>
    %cst_79 = arith.constant 1.000000e+00 : f32
    %236 = vector.broadcast %cst_79 : f32 to vector<8x128xf32>
    %237 = arith.addf %236, %235 : vector<8x128xf32>
    %238 = arith.divf %236, %237 : vector<8x128xf32>
    %239 = arith.mulf %230, %200 : vector<8x128xf32>
    %240 = arith.mulf %224, %232 : vector<8x128xf32>
    %241 = arith.addf %239, %240 : vector<8x128xf32>
    %242 = math.tanh %241 : vector<8x128xf32>
    %243 = arith.mulf %238, %242 : vector<8x128xf32>
    %244 = arith.index_cast %c5_i32 : i32 to index
    %c0_80 = arith.constant 0 : index
    %c0_81 = arith.constant 0 : index
    %245 = vector.load %arg9[%244, %c0_80, %c0_81] : memref<8x8x128xf32, #tpu.memory_space<vmem>>, vector<1x8x128xf32>
    %246 = vector.shape_cast %245 : vector<1x8x128xf32> to vector<8x128xf32>
    %247 = vector.shape_cast %243 : vector<8x128xf32> to vector<1x8x128xf32>
    tpu.vector_store %arg9[%244, %c0_80, %c0_81], %247 {strides = array<i32>} : memref<8x8x128xf32, #tpu.memory_space<vmem>>, vector<1x8x128xf32>,
    %c7_i32_82 = arith.constant 7 : i32
    %248 = arith.subi %c7_i32_82, %c5_i32 : i32
    %249 = arith.index_cast %248 : i32 to index
    %c0_83 = arith.constant 0 : index
    %c0_84 = arith.constant 0 : index
    %250 = vector.load %arg10[%249, %c0_83, %c0_84] : memref<8x8x128xf32, #tpu.memory_space<vmem>>, vector<1x8x128xf32>
    %251 = vector.shape_cast %250 : vector<1x8x128xf32> to vector<8x128xf32>
    %252 = vector.shape_cast %243 : vector<8x128xf32> to vector<1x8x128xf32>
    tpu.vector_store %arg10[%249, %c0_83, %c0_84], %252 {strides = array<i32>} : memref<8x8x128xf32, #tpu.memory_space<vmem>>, vector<1x8x128xf32>,
    %c6_i32 = arith.constant 6 : i32
    %253 = arith.index_cast %c6_i32 : i32 to index
    %c0_85 = arith.constant 0 : index
    %c0_86 = arith.constant 0 : index
    %254 = vector.load %arg8[%253, %c0_85, %c0_86] : memref<8x8x512xf32, #tpu.memory_space<vmem>>, vector<1x8x512xf32>
    %255 = vector.shape_cast %254 : vector<1x8x512xf32> to vector<8x512xf32>
    %256 = arith.truncf %243 : vector<8x128xf32> to vector<8x128xbf16>
    %c0_87 = arith.constant 0 : index
    %c0_88 = arith.constant 0 : index
    %257 = vector.load %arg3[%c0_87, %c0_88] : memref<128x512xbf16, #tpu.memory_space<vmem>>, vector<128x512xbf16>
    %cst_89 = arith.constant dense<0.000000e+00> : vector<8x512xf32>
    %258 = tpu.matmul %256, %257, %cst_89 {dimension_numbers = #tpu.dot_dimension_numbers<[1], [0], [0], [1], [0, 0, 1, 1], [], []>} : vector<8x128xbf16>, vector<128x512xbf16>, vector<8x512xf32> -> vector<8x512xf32>
    %259 = arith.addf %255, %258 : vector<8x512xf32>
    %260 = vector.extract_strided_slice %259 {offsets = [0, 0], sizes = [8, 128], strides = [1, 1]} : vector<8x512xf32> to vector<8x128xf32>
    %261 = arith.negf %260 : vector<8x128xf32>
    %262 = math.exp %261 : vector<8x128xf32>
    %cst_90 = arith.constant 1.000000e+00 : f32
    %263 = vector.broadcast %cst_90 : f32 to vector<8x128xf32>
    %264 = arith.addf %263, %262 : vector<8x128xf32>
    %265 = arith.divf %263, %264 : vector<8x128xf32>
    %266 = vector.extract_strided_slice %259 {offsets = [0, 128], sizes = [8, 128], strides = [1, 1]} : vector<8x512xf32> to vector<8x128xf32>
    %267 = arith.negf %266 : vector<8x128xf32>
    %268 = math.exp %267 : vector<8x128xf32>
    %cst_91 = arith.constant 1.000000e+00 : f32
    %269 = vector.broadcast %cst_91 : f32 to vector<8x128xf32>
    %270 = arith.addf %269, %268 : vector<8x128xf32>
    %271 = arith.divf %269, %270 : vector<8x128xf32>
    %272 = vector.extract_strided_slice %259 {offsets = [0, 256], sizes = [8, 128], strides = [1, 1]} : vector<8x512xf32> to vector<8x128xf32>
    %273 = math.tanh %272 : vector<8x128xf32>
    %274 = vector.extract_strided_slice %259 {offsets = [0, 384], sizes = [8, 128], strides = [1, 1]} : vector<8x512xf32> to vector<8x128xf32>
    %275 = arith.negf %274 : vector<8x128xf32>
    %276 = math.exp %275 : vector<8x128xf32>
    %cst_92 = arith.constant 1.000000e+00 : f32
    %277 = vector.broadcast %cst_92 : f32 to vector<8x128xf32>
    %278 = arith.addf %277, %276 : vector<8x128xf32>
    %279 = arith.divf %277, %278 : vector<8x128xf32>
    %280 = arith.mulf %271, %241 : vector<8x128xf32>
    %281 = arith.mulf %265, %273 : vector<8x128xf32>
    %282 = arith.addf %280, %281 : vector<8x128xf32>
    %283 = math.tanh %282 : vector<8x128xf32>
    %284 = arith.mulf %279, %283 : vector<8x128xf32>
    %285 = arith.index_cast %c6_i32 : i32 to index
    %c0_93 = arith.constant 0 : index
    %c0_94 = arith.constant 0 : index
    %286 = vector.load %arg9[%285, %c0_93, %c0_94] : memref<8x8x128xf32, #tpu.memory_space<vmem>>, vector<1x8x128xf32>
    %287 = vector.shape_cast %286 : vector<1x8x128xf32> to vector<8x128xf32>
    %288 = vector.shape_cast %284 : vector<8x128xf32> to vector<1x8x128xf32>
    tpu.vector_store %arg9[%285, %c0_93, %c0_94], %288 {strides = array<i32>} : memref<8x8x128xf32, #tpu.memory_space<vmem>>, vector<1x8x128xf32>,
    %c7_i32_95 = arith.constant 7 : i32
    %289 = arith.subi %c7_i32_95, %c6_i32 : i32
    %290 = arith.index_cast %289 : i32 to index
    %c0_96 = arith.constant 0 : index
    %c0_97 = arith.constant 0 : index
    %291 = vector.load %arg10[%290, %c0_96, %c0_97] : memref<8x8x128xf32, #tpu.memory_space<vmem>>, vector<1x8x128xf32>
    %292 = vector.shape_cast %291 : vector<1x8x128xf32> to vector<8x128xf32>
    %293 = vector.shape_cast %284 : vector<8x128xf32> to vector<1x8x128xf32>
    tpu.vector_store %arg10[%290, %c0_96, %c0_97], %293 {strides = array<i32>} : memref<8x8x128xf32, #tpu.memory_space<vmem>>, vector<1x8x128xf32>,
    %c7_i32_98 = arith.constant 7 : i32
    %294 = arith.index_cast %c7_i32_98 : i32 to index
    %c0_99 = arith.constant 0 : index
    %c0_100 = arith.constant 0 : index
    %295 = vector.load %arg8[%294, %c0_99, %c0_100] : memref<8x8x512xf32, #tpu.memory_space<vmem>>, vector<1x8x512xf32>
    %296 = vector.shape_cast %295 : vector<1x8x512xf32> to vector<8x512xf32>
    %297 = arith.truncf %284 : vector<8x128xf32> to vector<8x128xbf16>
    %c0_101 = arith.constant 0 : index
    %c0_102 = arith.constant 0 : index
    %298 = vector.load %arg3[%c0_101, %c0_102] : memref<128x512xbf16, #tpu.memory_space<vmem>>, vector<128x512xbf16>
    %cst_103 = arith.constant dense<0.000000e+00> : vector<8x512xf32>
    %299 = tpu.matmul %297, %298, %cst_103 {dimension_numbers = #tpu.dot_dimension_numbers<[1], [0], [0], [1], [0, 0, 1, 1], [], []>} : vector<8x128xbf16>, vector<128x512xbf16>, vector<8x512xf32> -> vector<8x512xf32>
    %300 = arith.addf %296, %299 : vector<8x512xf32>
    %301 = vector.extract_strided_slice %300 {offsets = [0, 0], sizes = [8, 128], strides = [1, 1]} : vector<8x512xf32> to vector<8x128xf32>
    %302 = arith.negf %301 : vector<8x128xf32>
    %303 = math.exp %302 : vector<8x128xf32>
    %cst_104 = arith.constant 1.000000e+00 : f32
    %304 = vector.broadcast %cst_104 : f32 to vector<8x128xf32>
    %305 = arith.addf %304, %303 : vector<8x128xf32>
    %306 = arith.divf %304, %305 : vector<8x128xf32>
    %307 = vector.extract_strided_slice %300 {offsets = [0, 128], sizes = [8, 128], strides = [1, 1]} : vector<8x512xf32> to vector<8x128xf32>
    %308 = arith.negf %307 : vector<8x128xf32>
    %309 = math.exp %308 : vector<8x128xf32>
    %cst_105 = arith.constant 1.000000e+00 : f32
    %310 = vector.broadcast %cst_105 : f32 to vector<8x128xf32>
    %311 = arith.addf %310, %309 : vector<8x128xf32>
    %312 = arith.divf %310, %311 : vector<8x128xf32>
    %313 = vector.extract_strided_slice %300 {offsets = [0, 256], sizes = [8, 128], strides = [1, 1]} : vector<8x512xf32> to vector<8x128xf32>
    %314 = math.tanh %313 : vector<8x128xf32>
    %315 = vector.extract_strided_slice %300 {offsets = [0, 384], sizes = [8, 128], strides = [1, 1]} : vector<8x512xf32> to vector<8x128xf32>
    %316 = arith.negf %315 : vector<8x128xf32>
    %317 = math.exp %316 : vector<8x128xf32>
    %cst_106 = arith.constant 1.000000e+00 : f32
    %318 = vector.broadcast %cst_106 : f32 to vector<8x128xf32>
    %319 = arith.addf %318, %317 : vector<8x128xf32>
    %320 = arith.divf %318, %319 : vector<8x128xf32>
    %321 = arith.mulf %312, %282 : vector<8x128xf32>
    %322 = arith.mulf %306, %314 : vector<8x128xf32>
    %323 = arith.addf %321, %322 : vector<8x128xf32>
    %324 = math.tanh %323 : vector<8x128xf32>
    %325 = arith.mulf %320, %324 : vector<8x128xf32>
    %326 = arith.index_cast %c7_i32_98 : i32 to index
    %c0_107 = arith.constant 0 : index
    %c0_108 = arith.constant 0 : index
    %327 = vector.load %arg9[%326, %c0_107, %c0_108] : memref<8x8x128xf32, #tpu.memory_space<vmem>>, vector<1x8x128xf32>
    %328 = vector.shape_cast %327 : vector<1x8x128xf32> to vector<8x128xf32>
    %329 = vector.shape_cast %325 : vector<8x128xf32> to vector<1x8x128xf32>
    tpu.vector_store %arg9[%326, %c0_107, %c0_108], %329 {strides = array<i32>} : memref<8x8x128xf32, #tpu.memory_space<vmem>>, vector<1x8x128xf32>,
    %c7_i32_109 = arith.constant 7 : i32
    %330 = arith.subi %c7_i32_109, %c7_i32_98 : i32
    %331 = arith.index_cast %330 : i32 to index
    %c0_110 = arith.constant 0 : index
    %c0_111 = arith.constant 0 : index
    %332 = vector.load %arg10[%331, %c0_110, %c0_111] : memref<8x8x128xf32, #tpu.memory_space<vmem>>, vector<1x8x128xf32>
    %333 = vector.shape_cast %332 : vector<1x8x128xf32> to vector<8x128xf32>
    %334 = vector.shape_cast %325 : vector<8x128xf32> to vector<1x8x128xf32>
    tpu.vector_store %arg10[%331, %c0_110, %c0_111], %334 {strides = array<i32>} : memref<8x8x128xf32, #tpu.memory_space<vmem>>, vector<1x8x128xf32>,
    %c8_i32 = arith.constant 8 : i32
    %c0_112 = arith.constant 0 : index
    %c0_113 = arith.constant 0 : index
    %c0_114 = arith.constant 0 : index
    %335 = vector.load %arg9[%c0_112, %c0_113, %c0_114] : memref<8x8x128xf32, #tpu.memory_space<vmem>>, vector<8x8x128xf32>
    %336 = vector.shape_cast %335 : vector<8x8x128xf32> to vector<64x128xf32>
    %337 = arith.truncf %336 : vector<64x128xf32> to vector<64x128xbf16>
    %c0_115 = arith.constant 0 : index
    %c0_116 = arith.constant 0 : index
    %c0_117 = arith.constant 0 : index
    %338 = vector.load %arg10[%c0_115, %c0_116, %c0_117] : memref<8x8x128xf32, #tpu.memory_space<vmem>>, vector<8x8x128xf32>
    %339 = vector.shape_cast %338 : vector<8x8x128xf32> to vector<64x128xf32>
    %340 = arith.truncf %339 : vector<64x128xf32> to vector<64x128xbf16>
    %c0_118 = arith.constant 0 : index
    %c0_119 = arith.constant 0 : index
    %341 = vector.load %arg4[%c0_118, %c0_119] : memref<128x128xbf16, #tpu.memory_space<vmem>>, vector<128x128xbf16>
    %cst_120 = arith.constant dense<0.000000e+00> : vector<64x128xf32>
    %342 = tpu.matmul %337, %341, %cst_120 {dimension_numbers = #tpu.dot_dimension_numbers<[1], [0], [0], [1], [0, 0, 1, 1], [], []>} : vector<64x128xbf16>, vector<128x128xbf16>, vector<64x128xf32> -> vector<64x128xf32>
    %c0_121 = arith.constant 0 : index
    %c0_122 = arith.constant 0 : index
    %343 = vector.load %arg5[%c0_121, %c0_122] : memref<128x128xbf16, #tpu.memory_space<vmem>>, vector<128x128xbf16>
    %cst_123 = arith.constant dense<0.000000e+00> : vector<64x128xf32>
    %344 = tpu.matmul %340, %343, %cst_123 {dimension_numbers = #tpu.dot_dimension_numbers<[1], [0], [0], [1], [0, 0, 1, 1], [], []>} : vector<64x128xbf16>, vector<128x128xbf16>, vector<64x128xf32> -> vector<64x128xf32>
    %345 = arith.addf %342, %344 : vector<64x128xf32>
    %c0_124 = arith.constant 0 : index
    %c0_125 = arith.constant 0 : index
    %346 = vector.load %arg6[%c0_124, %c0_125] : memref<1x128xf32, #tpu.memory_space<vmem>>, vector<1x128xf32>
    %347 = vector.broadcast %346 : vector<1x128xf32> to vector<64x128xf32>
    %348 = arith.addf %345, %347 : vector<64x128xf32>
    %349 = vector.shape_cast %348 : vector<64x128xf32> to vector<8x8x128xf32>
    %c0_126 = arith.constant 0 : index
    %c0_127 = arith.constant 0 : index
    %c0_128 = arith.constant 0 : index
    %350 = vector.load %arg7[%c0_126, %c0_127, %c0_128] : memref<8x8x128xf32, #tpu.memory_space<vmem>>, vector<8x8x128xf32>
    tpu.vector_store %arg7[%c0_126, %c0_127, %c0_128], %349 {strides = array<i32>} : memref<8x8x128xf32, #tpu.memory_space<vmem>>, vector<8x8x128xf32>,
    return
  }
  func.func @transform_0(%arg0: i32) -> (i32, i32, i32) {
    %c0_i32 = arith.constant 0 : i32
    %c0_i32_0 = arith.constant 0 : i32
    %c0_i32_1 = arith.constant 0 : i32
    return %c0_i32, %arg0, %c0_i32_0 : i32, i32, i32
  }
  func.func @transform_1(%arg0: i32) -> (i32, i32) {
    %c0_i32 = arith.constant 0 : i32
    %c0_i32_0 = arith.constant 0 : i32
    %c0_i32_1 = arith.constant 0 : i32
    return %c0_i32, %c0_i32_0 : i32, i32
  }
  func.func @transform_2(%arg0: i32) -> (i32, i32) {
    %c0_i32 = arith.constant 0 : i32
    %c0_i32_0 = arith.constant 0 : i32
    %c0_i32_1 = arith.constant 0 : i32
    return %c0_i32, %c0_i32_0 : i32, i32
  }
  func.func @transform_3(%arg0: i32) -> (i32, i32) {
    %c0_i32 = arith.constant 0 : i32
    %c0_i32_0 = arith.constant 0 : i32
    %c0_i32_1 = arith.constant 0 : i32
    return %c0_i32, %c0_i32_0 : i32, i32
  }
  func.func @transform_4(%arg0: i32) -> (i32, i32) {
    %c0_i32 = arith.constant 0 : i32
    %c0_i32_0 = arith.constant 0 : i32
    %c0_i32_1 = arith.constant 0 : i32
    return %c0_i32, %c0_i32_0 : i32, i32
  }
  func.func @transform_5(%arg0: i32) -> (i32, i32) {
    %c0_i32 = arith.constant 0 : i32
    %c0_i32_0 = arith.constant 0 : i32
    %c0_i32_1 = arith.constant 0 : i32
    return %c0_i32, %c0_i32_0 : i32, i32
  }
  func.func @transform_6(%arg0: i32) -> (i32, i32, i32) {
    %c0_i32 = arith.constant 0 : i32
    %c0_i32_0 = arith.constant 0 : i32
    %c0_i32_1 = arith.constant 0 : i32
    return %c0_i32, %arg0, %c0_i32_0 : i32, i32, i32
  }
}

</mosaic_0001>

<llo_original>
// kernel: tpu_custom_call.1
$region0: #{tpu_custom_call.1}
  #allocation0 [shape = 'u32[]', space=smem, size = 0x4, offset = 0x4, fixed_abs, tag = 'smem constant byte address 0x4 - core index']
  #allocation1 [shape = 'u32[144,128]{1,0:T(1,128)}', space=vmem, size = 0x12000, scoped, tag = 'internal scratch']
  #allocation2 [shape = 'f32[8,8,512]{2,1,0:T(8,128)}', space=vmem, size = 0x20000, scoped, tag = 'scratch operand']
  #allocation3 [shape = 'f32[8,8,128]{2,1,0:T(8,128)}', space=vmem, size = 0x8000, scoped, tag = 'scratch operand']
  #allocation4 [shape = 'f32[8,8,128]{2,1,0:T(8,128)}', space=vmem, size = 0x8000, scoped, tag = 'scratch operand']
  %s0 = inlined_call_operand.hbm [shape: bf16[8,8,101], index: 0, kind: input, shape index: {}]
  %s1 = inlined_call_operand.hbm [shape: bf16[101,512], index: 1, kind: input, shape index: {}]
  %s2 = inlined_call_operand.hbm [shape: bf16[128,512], index: 2, kind: input, shape index: {}]
  %s3 = inlined_call_operand.hbm [shape: bf16[128,128], index: 3, kind: input, shape index: {}]
  %s4 = inlined_call_operand.hbm [shape: bf16[128,128], index: 4, kind: input, shape index: {}]
  %s5 = inlined_call_operand.hbm [shape: f32[1,128], index: 5, kind: input, shape index: {}]
  %s6 = inlined_call_operand.hbm [shape: f32[8,8,128], index: 6, kind: output, shape index: {}]
  %s7 = sld [smem:[#allocation0]]
  $region58: #{tpu_custom_call.1} parent=0
    _
  %s9 = ssub.s32 1, %s7
  %s10 = scalar_select 0, %s9, %s7
  $region1: #{tpu_custom_call.1} parent=0
    #allocation5 [shape = 'u8[16384]{0}', space=vmem, size = 0x4000, scoped, tag = 'input window, operand 0, single buffered']
    #allocation6 [shape = 's32[1]{0}', space=sflag, size = 0x4, scoped, tag = 'scoped memory for tpu_custom_call.1']
    #allocation7 [shape = 's32[1]{0}', space=sflag, size = 0x4, scoped, tag = 'scoped memory for tpu_custom_call.1']
    #allocation8 [shape = 'u8[106496]{0}', space=vmem, size = 0x1a000, scoped, tag = 'input window, operand 1, single buffered']
    #allocation9 [shape = 's32[1]{0}', space=sflag, size = 0x4, scoped, tag = 'scoped memory for tpu_custom_call.1']
    #allocation10 [shape = 'u8[131072]{0}', space=vmem, size = 0x20000, scoped, tag = 'input window, operand 2, single buffered']
    #allocation11 [shape = 'u8[32768]{0}', space=vmem, size = 0x8000, scoped, tag = 'input window, operand 3, single buffered']
    #allocation12 [shape = 's32[1]{0}', space=sflag, size = 0x4, scoped, tag = 'scoped memory for tpu_custom_call.1']
    #allocation13 [shape = 'u8[32768]{0}', space=vmem, size = 0x8000, scoped, tag = 'input window, operand 4, single buffered']
    #allocation14 [shape = 'u8[512]{0}', space=vmem, size = 0x400, scoped, tag = 'input window, operand 5, single buffered']
    #allocation15 [shape = 's32[1]{0}', space=sflag, size = 0x4, scoped, tag = 'scoped memory for tpu_custom_call.1']
    #allocation16 [shape = 'u8[32768]{0}', space=vmem, size = 0x8000, scoped, tag = 'output window, operand 0, single buffered']
    %11 = vsyncpa [#allocation6], 0
    %12 = vsyncpa [#allocation9], 0
    %13 = vsyncpa [#allocation12], 0
    %14 = vsyncpa [#allocation15], 0
    %15 = vsyncpa [#allocation7], 0
    // Predicated region
    $region2: #{tpu_custom_call.1} parent=1 // pred_check
      _
    $region3: #{tpu_custom_call.1} parent=1 // pred_check_branch
      %17 = sbr.rel (0) target = $region5
    $region4: #{tpu_custom_call.1} parent=1 // pred_region
      %s19 = ssub.s32 512, 512
      %20 = vsyncadd [#allocation6], %s19
      %s21 = sshll.u32 [#allocation5], 4
      %s22 = int_to_ptr.vmem [resolvable:$true] %s21
      %27 = dma.hbm_to_vmem [thread:$0]  %s0, 512, %s22, [#allocation6], 64, 64, 4
    $region5: #{tpu_custom_call.1} parent=1 // pred_fallthru
      _
    // Predicated region
    $region6: #{tpu_custom_call.1} parent=1 // pred_check
      _
    $region7: #{tpu_custom_call.1} parent=1 // pred_check_branch
      %29 = sbr.rel (0) target = $region9
    $region8: #{tpu_custom_call.1} parent=1 // pred_region
      %s31 = ssub.s32 3328, 3328
      %32 = vsyncadd [#allocation9], %s31
      %s33 = sshll.u32 [#allocation8], 4
      %s34 = int_to_ptr.vmem [resolvable:$true] %s33
      %39 = dma.hbm_to_vmem [thread:$0]  %s1, 3328, %s34, [#allocation9], 256, 256, 16
    $region9: #{tpu_custom_call.1} parent=1 // pred_fallthru
      _
    // Predicated region
    $region10: #{tpu_custom_call.1} parent=1 // pred_check
      _
    $region11: #{tpu_custom_call.1} parent=1 // pred_check_branch
      %41 = sbr.rel (0) target = $region13
    $region12: #{tpu_custom_call.1} parent=1 // pred_region
      %s43 = ssub.s32 4096, 4096
      %44 = vsyncadd [#allocation9], %s43
      %s45 = sshll.u32 [#allocation10], 4
      %s46 = int_to_ptr.vmem [resolvable:$true] %s45
      %51 = dma.hbm_to_vmem [thread:$0]  %s2, 4096, %s46, [#allocation9], 256, 256, 16
    $region13: #{tpu_custom_call.1} parent=1 // pred_fallthru
      _
    // Predicated region
    $region14: #{tpu_custom_call.1} parent=1 // pred_check
      _
    $region15: #{tpu_custom_call.1} parent=1 // pred_check_branch
      %53 = sbr.rel (0) target = $region17
    $region16: #{tpu_custom_call.1} parent=1 // pred_region
      %s55 = ssub.s32 1024, 1024
      %56 = vsyncadd [#allocation12], %s55
      %s57 = sshll.u32 [#allocation11], 4
      %s58 = int_to_ptr.vmem [resolvable:$true] %s57
      %63 = dma.hbm_to_vmem [thread:$0]  %s3, 1024, %s58, [#allocation12], 64, 64, 4
    $region17: #{tpu_custom_call.1} parent=1 // pred_fallthru
      _
    // Predicated region
    $region18: #{tpu_custom_call.1} parent=1 // pred_check
      _
    $region19: #{tpu_custom_call.1} parent=1 // pred_check_branch
      %65 = sbr.rel (0) target = $region21
    $region20: #{tpu_custom_call.1} parent=1 // pred_region
      %s67 = ssub.s32 1024, 1024
      %68 = vsyncadd [#allocation12], %s67
      %s69 = sshll.u32 [#allocation13], 4
      %s70 = int_to_ptr.vmem [resolvable:$true] %s69
      %75 = dma.hbm_to_vmem [thread:$0]  %s4, 1024, %s70, [#allocation12], 64, 64, 4
    $region21: #{tpu_custom_call.1} parent=1 // pred_fallthru
      _
    // Predicated region
    $region22: #{tpu_custom_call.1} parent=1 // pred_check
      _
    $region23: #{tpu_custom_call.1} parent=1 // pred_check_branch
      %77 = sbr.rel (0) target = $region25
    $region24: #{tpu_custom_call.1} parent=1 // pred_region
      %s79 = ssub.s32 16, 16
      %80 = vsyncadd [#allocation15], %s79
      %s82 = sshll.u32 [#allocation14], 4
      %s83 = int_to_ptr.vmem [resolvable:$true] %s82
      %85 = dma.hbm_to_vmem [thread:$0]  %s5, 16, %s83, [#allocation15]
    $region25: #{tpu_custom_call.1} parent=1 // pred_fallthru
      _
    // Predicated region
    $region26: #{tpu_custom_call.1} parent=1 // pred_check
      _
    $region27: #{tpu_custom_call.1} parent=1 // pred_check_branch
      %87 = sbr.rel (0) target = $region29
    $region28: #{tpu_custom_call.1} parent=1 // pred_region
      %88 = dma.done [#allocation6], 512
    $region29: #{tpu_custom_call.1} parent=1 // pred_fallthru
      _
    // Predicated region
    $region30: #{tpu_custom_call.1} parent=1 // pred_check
      _
    $region31: #{tpu_custom_call.1} parent=1 // pred_check_branch
      %90 = sbr.rel (0) target = $region33
    $region32: #{tpu_custom_call.1} parent=1 // pred_region
      %91 = dma.done [#allocation9], 3328
    $region33: #{tpu_custom_call.1} parent=1 // pred_fallthru
      _
    // Predicated region
    $region34: #{tpu_custom_call.1} parent=1 // pred_check
      _
    $region35: #{tpu_custom_call.1} parent=1 // pred_check_branch
      %93 = sbr.rel (0) target = $region37
    $region36: #{tpu_custom_call.1} parent=1 // pred_region
      %94 = dma.done [#allocation9], 4096
    $region37: #{tpu_custom_call.1} parent=1 // pred_fallthru
      _
    // Predicated region
    $region38: #{tpu_custom_call.1} parent=1 // pred_check
      _
    $region39: #{tpu_custom_call.1} parent=1 // pred_check_branch
      %96 = sbr.rel (0) target = $region41
    $region40: #{tpu_custom_call.1} parent=1 // pred_region
      %97 = dma.done [#allocation12], 1024
    $region41: #{tpu_custom_call.1} parent=1 // pred_fallthru
      _
    // Predicated region
    $region42: #{tpu_custom_call.1} parent=1 // pred_check
      _
    $region43: #{tpu_custom_call.1} parent=1 // pred_check_branch
      %99 = sbr.rel (0) target = $region45
    $region44: #{tpu_custom_call.1} parent=1 // pred_region
      %100 = dma.done [#allocation12], 1024
    $region45: #{tpu_custom_call.1} parent=1 // pred_fallthru
      _
    // Predicated region
    $region46: #{tpu_custom_call.1} parent=1 // pred_check
      _
    $region47: #{tpu_custom_call.1} parent=1 // pred_check_branch
      %102 = sbr.rel (0) target = $region49
    $region48: #{tpu_custom_call.1} parent=1 // pred_region
      %103 = dma.done [#allocation15], 16
    $region49: #{tpu_custom_call.1} parent=1 // pred_fallthru
      _
    %v105 = vld [vmem:[#allocation5] sm:$0xf]
    %v106 = vld [vmem:[#allocation5 + $0x4] sm:$0xf]
    %v107 = vld [vmem:[#allocation5 + $0x8] sm:$0xf]
    %v108 = vld [vmem:[#allocation5 + $0xc] sm:$0xf]
    %v109 = vld [vmem:[#allocation5 + $0x10] sm:$0xf]
    %v110 = vld [vmem:[#allocation5 + $0x14] sm:$0xf]
    %v111 = vld [vmem:[#allocation5 + $0x18] sm:$0xf]
    %v112 = vld [vmem:[#allocation5 + $0x1c] sm:$0xf]
    %v113 = vld [vmem:[#allocation8] sm:$0xff]
    %v114 = vld [vmem:[#allocation8 + $0x8] sm:$0xff]
    %v115 = vld [vmem:[#allocation8 + $0x10] sm:$0xff]
    %v116 = vld [vmem:[#allocation8 + $0x18] sm:$0xff]
    %v117 = vld [vmem:[#allocation8 + $0x20] sm:$0xff]
    %v118 = vld [vmem:[#allocation8 + $0x28] sm:$0xff]
    %v119 = vld [vmem:[#allocation8 + $0x30] sm:$0xff]
    %v120 = vld [vmem:[#allocation8 + $0x38] sm:$0xff]
    %v121 = vld [vmem:[#allocation8 + $0x40] sm:$0xff]
    %v122 = vld [vmem:[#allocation8 + $0x48] sm:$0xff]
    %v123 = vld [vmem:[#allocation8 + $0x50] sm:$0xff]
    %v124 = vld [vmem:[#allocation8 + $0x58] sm:$0xff]
    %v125 = vld [vmem:[#allocation8 + $0x60] sm:$0xff]
    %v126 = vld [vmem:[#allocation8 + $0x68] sm:$0xff]
    %v127 = vld [vmem:[#allocation8 + $0x70] sm:$0xff]
    %v128 = vld [vmem:[#allocation8 + $0x78] sm:$0xff]
    %v129 = vld [vmem:[#allocation8 + $0x80] sm:$0xff]
    %v130 = vld [vmem:[#allocation8 + $0x88] sm:$0xff]
    %v131 = vld [vmem:[#allocation8 + $0x90] sm:$0xff]
    %v132 = vld [vmem:[#allocation8 + $0x98] sm:$0xff]
    %v133 = vld [vmem:[#allocation8 + $0xa0] sm:$0xff]
    %v134 = vld [vmem:[#allocation8 + $0xa8] sm:$0xff]
    %v135 = vld [vmem:[#allocation8 + $0xb0] sm:$0xff]
    %v136 = vld [vmem:[#allocation8 + $0xb8] sm:$0xff]
    %v137 = vld [vmem:[#allocation8 + $0xc0] sm:$0x77]
    %v138 = vld [vmem:[#allocation8 + $0xc8] sm:$0x77]
    %v147 = vunpack.c.l.b16 %v105
    %v148 = vunpack.c.l.b16 %v106
    %v149 = vunpack.c.l.b16 %v107
    %v150 = vunpack.c.l.b16 %v108
    %v151 = vunpack.c.l.b16 %v109
    %v152 = vunpack.c.l.b16 %v110
    %v153 = vunpack.c.l.b16 %v111
    %v154 = vunpack.c.l.b16 %v112
    %v155 = vpack.c.b16 %v148, %v147
    %v156 = vpack.c.b16 %v150, %v149
    %v157 = vpack.c.b16 %v152, %v151
    %v158 = vpack.c.b16 %v154, %v153
    %v185 = vunpack.c.l.b16 %v113
    %v186 = vunpack.c.h.b16 %v113
    %v187 = vunpack.c.l.b16 %v114
    %v188 = vunpack.c.h.b16 %v114
    %v189 = vunpack.c.l.b16 %v115
    %v190 = vunpack.c.h.b16 %v115
    %v191 = vunpack.c.l.b16 %v116
    %v192 = vunpack.c.h.b16 %v116
    %v193 = vunpack.c.l.b16 %v117
    %v194 = vunpack.c.h.b16 %v117
    %v195 = vunpack.c.l.b16 %v118
    %v196 = vunpack.c.h.b16 %v118
    %v197 = vunpack.c.l.b16 %v119
    %v198 = vunpack.c.h.b16 %v119
    %v199 = vunpack.c.l.b16 %v120
    %v200 = vunpack.c.h.b16 %v120
    %v201 = vunpack.c.l.b16 %v121
    %v202 = vunpack.c.h.b16 %v121
    %v203 = vunpack.c.l.b16 %v122
    %v204 = vunpack.c.h.b16 %v122
    %v205 = vunpack.c.l.b16 %v123
    %v206 = vunpack.c.h.b16 %v123
    %v207 = vunpack.c.l.b16 %v124
    %v208 = vunpack.c.h.b16 %v124
    %v209 = vunpack.c.l.b16 %v125
    %v210 = vunpack.c.h.b16 %v125
    %v211 = vunpack.c.l.b16 %v126
    %v212 = vunpack.c.h.b16 %v126
    %v213 = vunpack.c.l.b16 %v127
    %v214 = vunpack.c.h.b16 %v127
    %v215 = vunpack.c.l.b16 %v128
    %v216 = vunpack.c.h.b16 %v128
    %v217 = vunpack.c.l.b16 %v129
    %v218 = vunpack.c.h.b16 %v129
    %v219 = vunpack.c.l.b16 %v130
    %v220 = vunpack.c.h.b16 %v130
    %v221 = vunpack.c.l.b16 %v131
    %v222 = vunpack.c.h.b16 %v131
    %v223 = vunpack.c.l.b16 %v132
    %v224 = vunpack.c.h.b16 %v132
    %v225 = vunpack.c.l.b16 %v133
    %v226 = vunpack.c.h.b16 %v133
    %v227 = vunpack.c.l.b16 %v134
    %v228 = vunpack.c.h.b16 %v134
    %v229 = vunpack.c.l.b16 %v135
    %v230 = vunpack.c.h.b16 %v135
    %v231 = vunpack.c.l.b16 %v136
    %v232 = vunpack.c.h.b16 %v136
    %v233 = vunpack.c.l.b16 %v137
    %v234 = vunpack.c.h.b16 %v137
    %v235 = vunpack.c.l.b16 %v138
    %v236 = vunpack.c.h.b16 %v138
    %v237 = vpack.c.b16 %v189, %v185
    %v238 = vpack.c.b16 %v190, %v186
    %v239 = vpack.c.b16 %v191, %v187
    %v240 = vpack.c.b16 %v192, %v188
    %v241 = vpack.c.b16 %v197, %v193
    %v242 = vpack.c.b16 %v198, %v194
    %v243 = vpack.c.b16 %v199, %v195
    %v244 = vpack.c.b16 %v200, %v196
    %v245 = vpack.c.b16 %v205, %v201
    %v246 = vpack.c.b16 %v206, %v202
    %v247 = vpack.c.b16 %v207, %v203
    %v248 = vpack.c.b16 %v208, %v204
    %v249 = vpack.c.b16 %v213, %v209
    %v250 = vpack.c.b16 %v214, %v210
    %v251 = vpack.c.b16 %v215, %v211
    %v252 = vpack.c.b16 %v216, %v212
    %v253 = vpack.c.b16 %v221, %v217
    %v254 = vpack.c.b16 %v222, %v218
    %v255 = vpack.c.b16 %v223, %v219
    %v256 = vpack.c.b16 %v224, %v220
    %v257 = vpack.c.b16 %v229, %v225
    %v258 = vpack.c.b16 %v230, %v226
    %v259 = vpack.c.b16 %v231, %v227
    %v260 = vpack.c.b16 %v232, %v228
    %v261 = vpack.c.b16 %v233, %v233
    %v262 = vpack.c.b16 %v234, %v234
    %v263 = vpack.c.b16 %v235, %v235
    %v264 = vpack.c.b16 %v236, %v236
    %vm289 = vcmask 826368
    %v291 = vsel %vm289, %v155, 0
    %v294 = vsel %vm289, %v156, 0
    %v297 = vsel %vm289, %v157, 0
    %v300 = vsel %vm289, %v158, 0
    %vm302 = vcmask 1041408
    %vm303 = vcmask 1042432
    %v304 = vsel %vm302, 4294967295, 65535
    %v305 = vsel %vm303, %v304, 0
    %v307 = vand.u32 %v261, %v305
    %v310 = vand.u32 %v262, %v305
    %v313 = vand.u32 %v263, %v305
    %v316 = vand.u32 %v264, %v305
    %318 = vmatprep.subr.bf16.mxu0 %v238
    %319 = vmatpush1.bf16.msra.mxu0 %v237
    %320 = vmatprep.subr.bf16.mxu0 %v242
    %321 = vmatpush1.bf16.msra.mxu0 %v241
    %322 = vmatprep.subr.bf16.mxu0 %v246
    %323 = vmatpush1.bf16.msra.mxu0 %v245
    %324 = vmatprep.subr.bf16.mxu0 %v250
    %325 = vmatpush1.bf16.msra.mxu0 %v249
    %326 = vmatprep.subr.bf16.mxu0 %v254
    %327 = vmatpush1.bf16.msra.mxu0 %v253
    %328 = vmatprep.subr.bf16.mxu0 %v258
    %329 = vmatpush1.bf16.msra.mxu0 %v257
    %330 = vmatprep.subr.bf16.mxu0 %v310
    %331 = vmatpush1.bf16.msra.mxu0 %v307
    %332 = vmatprep.subr.bf16.mxu0 0
    %333 = vmatpush1.bf16.msra.mxu0 0
    %334 = vmatprep.subr.bf16.mxu0 0
    %335 = vmatpush1.bf16.msra.mxu0 0
    %336 = vmatprep.subr.bf16.mxu0 0
    %337 = vmatpush1.bf16.msra.mxu0 0
    %338 = vmatprep.subr.bf16.mxu0 0
    %339 = vmatpush1.bf16.msra.mxu0 0
    %340 = vmatprep.subr.bf16.mxu0 0
    %341 = vmatpush1.bf16.msra.mxu0 0
    %342 = vmatprep.subr.bf16.mxu0 0
    %343 = vmatpush1.bf16.msra.mxu0 0
    %344 = vmatprep.subr.bf16.mxu0 0
    %345 = vmatpush1.bf16.msra.mxu0 0
    %346 = vmatprep.subr.bf16.mxu0 0
    %347 = vmatpush1.bf16.msra.mxu0 0
    %348 = vmatprep.subr.bf16.mxu0 0
    %349 = vmatpush1.bf16.msra.mxu0 0
    %350 = vmatprep.mubr.bf16.mxu0 0
    %351 = vmatmul.mubr.bf16.gmra.mrb[0].mxu0 %v291
    %v352 = vpop.f32.mrb[0].mxu0
    %v353 = vadd.f32 0.0, %v352
    %v354 = vpop.f32.mrb[0].mxu0
    %v355 = vadd.f32 0.0, %v354
    %v356 = vpop.f32.mrb[0].mxu0
    %v357 = vadd.f32 0.0, %v356
    %v358 = vpop.f32.mrb[0].mxu0
    %v359 = vadd.f32 0.0, %v358
    %360 = vmatprep.mubr.bf16.mxu0 0
    %361 = vmatmul.mubr.bf16.gmra.mrb[0].mxu0 %v294
    %v362 = vpop.f32.mrb[0].mxu0
    %v363 = vadd.f32 0.0, %v362
    %v364 = vpop.f32.mrb[0].mxu0
    %v365 = vadd.f32 0.0, %v364
    %v366 = vpop.f32.mrb[0].mxu0
    %v367 = vadd.f32 0.0, %v366
    %v368 = vpop.f32.mrb[0].mxu0
    %v369 = vadd.f32 0.0, %v368
    %370 = vmatprep.mubr.bf16.mxu0 0
    %371 = vmatmul.mubr.bf16.gmra.mrb[0].mxu0 %v297
    %v372 = vpop.f32.mrb[0].mxu0
    %v373 = vadd.f32 0.0, %v372
    %v374 = vpop.f32.mrb[0].mxu0
    %v375 = vadd.f32 0.0, %v374
    %v376 = vpop.f32.mrb[0].mxu0
    %v377 = vadd.f32 0.0, %v376
    %v378 = vpop.f32.mrb[0].mxu0
    %v379 = vadd.f32 0.0, %v378
    %380 = vmatprep.mubr.bf16.mxu0 0
    %381 = vmatmul.mubr.bf16.gmra.mrb[0].mxu0 %v300
    %v382 = vpop.f32.mrb[0].mxu0
    %v383 = vadd.f32 0.0, %v382
    %v384 = vpop.f32.mrb[0].mxu0
    %v385 = vadd.f32 0.0, %v384
    %v386 = vpop.f32.mrb[0].mxu0
    %v387 = vadd.f32 0.0, %v386
    %v388 = vpop.f32.mrb[0].mxu0
    %v389 = vadd.f32 0.0, %v388
    %390 = vdwg.mxu0
    %391 = vmatprep.subr.bf16.mxu0 %v240
    %392 = vmatpush1.bf16.msra.mxu0 %v239
    %393 = vmatprep.subr.bf16.mxu0 %v244
    %394 = vmatpush1.bf16.msra.mxu0 %v243
    %395 = vmatprep.subr.bf16.mxu0 %v248
    %396 = vmatpush1.bf16.msra.mxu0 %v247
    %397 = vmatprep.subr.bf16.mxu0 %v252
    %398 = vmatpush1.bf16.msra.mxu0 %v251
    %399 = vmatprep.subr.bf16.mxu0 %v256
    %400 = vmatpush1.bf16.msra.mxu0 %v255
    %401 = vmatprep.subr.bf16.mxu0 %v260
    %402 = vmatpush1.bf16.msra.mxu0 %v259
    %403 = vmatprep.subr.bf16.mxu0 %v316
    %404 = vmatpush1.bf16.msra.mxu0 %v313
    %405 = vmatprep.subr.bf16.mxu0 0
    %406 = vmatpush1.bf16.msra.mxu0 0
    %407 = vmatprep.subr.bf16.mxu0 0
    %408 = vmatpush1.bf16.msra.mxu0 0
    %409 = vmatprep.subr.bf16.mxu0 0
    %410 = vmatpush1.bf16.msra.mxu0 0
    %411 = vmatprep.subr.bf16.mxu0 0
    %412 = vmatpush1.bf16.msra.mxu0 0
    %413 = vmatprep.subr.bf16.mxu0 0
    %414 = vmatpush1.bf16.msra.mxu0 0
    %415 = vmatprep.subr.bf16.mxu0 0
    %416 = vmatpush1.bf16.msra.mxu0 0
    %417 = vmatprep.subr.bf16.mxu0 0
    %418 = vmatpush1.bf16.msra.mxu0 0
    %419 = vmatprep.subr.bf16.mxu0 0
    %420 = vmatpush1.bf16.msra.mxu0 0
    %421 = vmatprep.subr.bf16.mxu0 0
    %422 = vmatpush1.bf16.msra.mxu0 0
    %423 = vmatprep.mubr.bf16.mxu0 0
    %424 = vmatmul.mubr.bf16.gmra.mrb[0].mxu0 %v291
    %v425 = vpop.f32.mrb[0].mxu0
    %v426 = vadd.f32 0.0, %v425
    %v427 = vpop.f32.mrb[0].mxu0
    %v428 = vadd.f32 0.0, %v427
    %v429 = vpop.f32.mrb[0].mxu0
    %v430 = vadd.f32 0.0, %v429
    %v431 = vpop.f32.mrb[0].mxu0
    %v432 = vadd.f32 0.0, %v431
    %433 = vmatprep.mubr.bf16.mxu0 0
    %434 = vmatmul.mubr.bf16.gmra.mrb[0].mxu0 %v294
    %v435 = vpop.f32.mrb[0].mxu0
    %v436 = vadd.f32 0.0, %v435
    %v437 = vpop.f32.mrb[0].mxu0
    %v438 = vadd.f32 0.0, %v437
    %v439 = vpop.f32.mrb[0].mxu0
    %v440 = vadd.f32 0.0, %v439
    %v441 = vpop.f32.mrb[0].mxu0
    %v442 = vadd.f32 0.0, %v441
    %443 = vmatprep.mubr.bf16.mxu0 0
    %444 = vmatmul.mubr.bf16.gmra.mrb[0].mxu0 %v297
    %v445 = vpop.f32.mrb[0].mxu0
    %v446 = vadd.f32 0.0, %v445
    %v447 = vpop.f32.mrb[0].mxu0
    %v448 = vadd.f32 0.0, %v447
    %v449 = vpop.f32.mrb[0].mxu0
    %v450 = vadd.f32 0.0, %v449
    %v451 = vpop.f32.mrb[0].mxu0
    %v452 = vadd.f32 0.0, %v451
    %453 = vmatprep.mubr.bf16.mxu0 0
    %454 = vmatmul.mubr.bf16.gmra.mrb[0].mxu0 %v300
    %v455 = vpop.f32.mrb[0].mxu0
    %v456 = vadd.f32 0.0, %v455
    %v457 = vpop.f32.mrb[0].mxu0
    %v458 = vadd.f32 0.0, %v457
    %v459 = vpop.f32.mrb[0].mxu0
    %v460 = vadd.f32 0.0, %v459
    %v461 = vpop.f32.mrb[0].mxu0
    %v462 = vadd.f32 0.0, %v461
    %463 = vdwg.mxu0
    %464 = vst [vmem:[#allocation2] sm:$0xff] %v353
    %465 = vst [vmem:[#allocation2 + $0x8] sm:$0xff] %v355
    %466 = vst [vmem:[#allocation2 + $0x10] sm:$0xff] %v426
    %467 = vst [vmem:[#allocation2 + $0x18] sm:$0xff] %v428
    %468 = vst [vmem:[#allocation2 + $0x20] sm:$0xff] %v357
    %469 = vst [vmem:[#allocation2 + $0x28] sm:$0xff] %v359
    %470 = vst [vmem:[#allocation2 + $0x30] sm:$0xff] %v430
    %471 = vst [vmem:[#allocation2 + $0x38] sm:$0xff] %v432
    %472 = vst [vmem:[#allocation2 + $0x40] sm:$0xff] %v363
    %473 = vst [vmem:[#allocation2 + $0x48] sm:$0xff] %v365
    %474 = vst [vmem:[#allocation2 + $0x50] sm:$0xff] %v436
    %475 = vst [vmem:[#allocation2 + $0x58] sm:$0xff] %v438
    %476 = vst [vmem:[#allocation2 + $0x60] sm:$0xff] %v367
    %477 = vst [vmem:[#allocation2 + $0x68] sm:$0xff] %v369
    %478 = vst [vmem:[#allocation2 + $0x70] sm:$0xff] %v440
    %479 = vst [vmem:[#allocation2 + $0x78] sm:$0xff] %v442
    %480 = vst [vmem:[#allocation2 + $0x80] sm:$0xff] %v373
    %481 = vst [vmem:[#allocation2 + $0x88] sm:$0xff] %v375
    %482 = vst [vmem:[#allocation2 + $0x90] sm:$0xff] %v446
    %483 = vst [vmem:[#allocation2 + $0x98] sm:$0xff] %v448
    %484 = vst [vmem:[#allocation2 + $0xa0] sm:$0xff] %v377
    %485 = vst [vmem:[#allocation2 + $0xa8] sm:$0xff] %v379
    %486 = vst [vmem:[#allocation2 + $0xb0] sm:$0xff] %v450
    %487 = vst [vmem:[#allocation2 + $0xb8] sm:$0xff] %v452
    %488 = vst [vmem:[#allocation2 + $0xc0] sm:$0xff] %v383
    %489 = vst [vmem:[#allocation2 + $0xc8] sm:$0xff] %v385
    %490 = vst [vmem:[#allocation2 + $0xd0] sm:$0xff] %v456
    %491 = vst [vmem:[#allocation2 + $0xd8] sm:$0xff] %v458
    %492 = vst [vmem:[#allocation2 + $0xe0] sm:$0xff] %v387
    %493 = vst [vmem:[#allocation2 + $0xe8] sm:$0xff] %v389
    %494 = vst [vmem:[#allocation2 + $0xf0] sm:$0xff] %v460
    %495 = vst [vmem:[#allocation2 + $0xf8] sm:$0xff] %v462
    %v496 = vld [vmem:[#allocation2] sm:$0xff]
    %v497 = vld [vmem:[#allocation2 + $0x8] sm:$0xff]
    %v498 = vld [vmem:[#allocation2 + $0x10] sm:$0xff]
    %v499 = vld [vmem:[#allocation2 + $0x18] sm:$0xff]
    %v500 = vld [vmem:[#allocation10] sm:$0xff]
    %v501 = vld [vmem:[#allocation10 + $0x8] sm:$0xff]
    %v502 = vld [vmem:[#allocation10 + $0x10] sm:$0xff]
    %v503 = vld [vmem:[#allocation10 + $0x18] sm:$0xff]
    %v504 = vld [vmem:[#allocation10 + $0x20] sm:$0xff]
    %v505 = vld [vmem:[#allocation10 + $0x28] sm:$0xff]
    %v506 = vld [vmem:[#allocation10 + $0x30] sm:$0xff]
    %v507 = vld [vmem:[#allocation10 + $0x38] sm:$0xff]
    %v508 = vld [vmem:[#allocation10 + $0x40] sm:$0xff]
    %v509 = vld [vmem:[#allocation10 + $0x48] sm:$0xff]
    %v510 = vld [vmem:[#allocation10 + $0x50] sm:$0xff]
    %v511 = vld [vmem:[#allocation10 + $0x58] sm:$0xff]
    %v512 = vld [vmem:[#allocation10 + $0x60] sm:$0xff]
    %v513 = vld [vmem:[#allocation10 + $0x68] sm:$0xff]
    %v514 = vld [vmem:[#allocation10 + $0x70] sm:$0xff]
    %v515 = vld [vmem:[#allocation10 + $0x78] sm:$0xff]
    %v516 = vld [vmem:[#allocation10 + $0x80] sm:$0xff]
    %v517 = vld [vmem:[#allocation10 + $0x88] sm:$0xff]
    %v518 = vld [vmem:[#allocation10 + $0x90] sm:$0xff]
    %v519 = vld [vmem:[#allocation10 + $0x98] sm:$0xff]
    %v520 = vld [vmem:[#allocation10 + $0xa0] sm:$0xff]
    %v521 = vld [vmem:[#allocation10 + $0xa8] sm:$0xff]
    %v522 = vld [vmem:[#allocation10 + $0xb0] sm:$0xff]
    %v523 = vld [vmem:[#allocation10 + $0xb8] sm:$0xff]
    %v524 = vld [vmem:[#allocation10 + $0xc0] sm:$0xff]
    %v525 = vld [vmem:[#allocation10 + $0xc8] sm:$0xff]
    %v526 = vld [vmem:[#allocation10 + $0xd0] sm:$0xff]
    %v527 = vld [vmem:[#allocation10 + $0xd8] sm:$0xff]
    %v528 = vld [vmem:[#allocation10 + $0xe0] sm:$0xff]
    %v529 = vld [vmem:[#allocation10 + $0xe8] sm:$0xff]
    %v530 = vld [vmem:[#allocation10 + $0xf0] sm:$0xff]
    %v531 = vld [vmem:[#allocation10 + $0xf8] sm:$0xff]
    %v564 = vunpack.c.l.b16 %v500
    %v565 = vunpack.c.h.b16 %v500
    %v566 = vunpack.c.l.b16 %v501
    %v567 = vunpack.c.h.b16 %v501
    %v568 = vunpack.c.l.b16 %v502
    %v569 = vunpack.c.h.b16 %v502
    %v570 = vunpack.c.l.b16 %v503
    %v571 = vunpack.c.h.b16 %v503
    %v572 = vunpack.c.l.b16 %v504
    %v573 = vunpack.c.h.b16 %v504
    %v574 = vunpack.c.l.b16 %v505
    %v575 = vunpack.c.h.b16 %v505
    %v576 = vunpack.c.l.b16 %v506
    %v577 = vunpack.c.h.b16 %v506
    %v578 = vunpack.c.l.b16 %v507
    %v579 = vunpack.c.h.b16 %v507
    %v580 = vunpack.c.l.b16 %v508
    %v581 = vunpack.c.h.b16 %v508
    %v582 = vunpack.c.l.b16 %v509
    %v583 = vunpack.c.h.b16 %v509
    %v584 = vunpack.c.l.b16 %v510
    %v585 = vunpack.c.h.b16 %v510
    %v586 = vunpack.c.l.b16 %v511
    %v587 = vunpack.c.h.b16 %v511
    %v588 = vunpack.c.l.b16 %v512
    %v589 = vunpack.c.h.b16 %v512
    %v590 = vunpack.c.l.b16 %v513
    %v591 = vunpack.c.h.b16 %v513
    %v592 = vunpack.c.l.b16 %v514
    %v593 = vunpack.c.h.b16 %v514
    %v594 = vunpack.c.l.b16 %v515
    %v595 = vunpack.c.h.b16 %v515
    %v596 = vunpack.c.l.b16 %v516
    %v597 = vunpack.c.h.b16 %v516
    %v598 = vunpack.c.l.b16 %v517
    %v599 = vunpack.c.h.b16 %v517
    %v600 = vunpack.c.l.b16 %v518
    %v601 = vunpack.c.h.b16 %v518
    %v602 = vunpack.c.l.b16 %v519
    %v603 = vunpack.c.h.b16 %v519
    %v604 = vunpack.c.l.b16 %v520
    %v605 = vunpack.c.h.b16 %v520
    %v606 = vunpack.c.l.b16 %v521
    %v607 = vunpack.c.h.b16 %v521
    %v608 = vunpack.c.l.b16 %v522
    %v609 = vunpack.c.h.b16 %v522
    %v610 = vunpack.c.l.b16 %v523
    %v611 = vunpack.c.h.b16 %v523
    %v612 = vunpack.c.l.b16 %v524
    %v613 = vunpack.c.h.b16 %v524
    %v614 = vunpack.c.l.b16 %v525
    %v615 = vunpack.c.h.b16 %v525
    %v616 = vunpack.c.l.b16 %v526
    %v617 = vunpack.c.h.b16 %v526
    %v618 = vunpack.c.l.b16 %v527
    %v619 = vunpack.c.h.b16 %v527
    %v620 = vunpack.c.l.b16 %v528
    %v621 = vunpack.c.h.b16 %v528
    %v622 = vunpack.c.l.b16 %v529
    %v623 = vunpack.c.h.b16 %v529
    %v624 = vunpack.c.l.b16 %v530
    %v625 = vunpack.c.h.b16 %v530
    %v626 = vunpack.c.l.b16 %v531
    %v627 = vunpack.c.h.b16 %v531
    %v628 = vpack.c.b16 %v568, %v564
    %v629 = vpack.c.b16 %v569, %v565
    %v630 = vpack.c.b16 %v570, %v566
    %v631 = vpack.c.b16 %v571, %v567
    %v632 = vpack.c.b16 %v576, %v572
    %v633 = vpack.c.b16 %v577, %v573
    %v634 = vpack.c.b16 %v578, %v574
    %v635 = vpack.c.b16 %v579, %v575
    %v636 = vpack.c.b16 %v584, %v580
    %v637 = vpack.c.b16 %v585, %v581
    %v638 = vpack.c.b16 %v586, %v582
    %v639 = vpack.c.b16 %v587, %v583
    %v640 = vpack.c.b16 %v592, %v588
    %v641 = vpack.c.b16 %v593, %v589
    %v642 = vpack.c.b16 %v594, %v590
    %v643 = vpack.c.b16 %v595, %v591
    %v644 = vpack.c.b16 %v600, %v596
    %v645 = vpack.c.b16 %v601, %v597
    %v646 = vpack.c.b16 %v602, %v598
    %v647 = vpack.c.b16 %v603, %v599
    %v648 = vpack.c.b16 %v608, %v604
    %v649 = vpack.c.b16 %v609, %v605
    %v650 = vpack.c.b16 %v610, %v606
    %v651 = vpack.c.b16 %v611, %v607
    %v652 = vpack.c.b16 %v616, %v612
    %v653 = vpack.c.b16 %v617, %v613
    %v654 = vpack.c.b16 %v618, %v614
    %v655 = vpack.c.b16 %v619, %v615
    %v656 = vpack.c.b16 %v624, %v620
    %v657 = vpack.c.b16 %v625, %v621
    %v658 = vpack.c.b16 %v626, %v622
    %v659 = vpack.c.b16 %v627, %v623
    %692 = vmatprep.subr.bf16.mxu0 %v629
    %693 = vmatpush1.bf16.msra.mxu0 %v628
    %694 = vmatprep.subr.bf16.mxu0 %v633
    %695 = vmatpush1.bf16.msra.mxu0 %v632
    %696 = vmatprep.subr.bf16.mxu0 %v637
    %697 = vmatpush1.bf16.msra.mxu0 %v636
    %698 = vmatprep.subr.bf16.mxu0 %v641
    %699 = vmatpush1.bf16.msra.mxu0 %v640
    %700 = vmatprep.subr.bf16.mxu0 %v645
    %701 = vmatpush1.bf16.msra.mxu0 %v644
    %702 = vmatprep.subr.bf16.mxu0 %v649
    %703 = vmatpush1.bf16.msra.mxu0 %v648
    %704 = vmatprep.subr.bf16.mxu0 %v653
    %705 = vmatpush1.bf16.msra.mxu0 %v652
    %706 = vmatprep.subr.bf16.mxu0 %v657
    %707 = vmatpush1.bf16.msra.mxu0 %v656
    %708 = vmatprep.subr.bf16.mxu0 0
    %709 = vmatpush1.bf16.msra.mxu0 0
    %710 = vmatprep.subr.bf16.mxu0 0
    %711 = vmatpush1.bf16.msra.mxu0 0
    %712 = vmatprep.subr.bf16.mxu0 0
    %713 = vmatpush1.bf16.msra.mxu0 0
    %714 = vmatprep.subr.bf16.mxu0 0
    %715 = vmatpush1.bf16.msra.mxu0 0
    %716 = vmatprep.subr.bf16.mxu0 0
    %717 = vmatpush1.bf16.msra.mxu0 0
    %718 = vmatprep.subr.bf16.mxu0 0
    %719 = vmatpush1.bf16.msra.mxu0 0
    %720 = vmatprep.subr.bf16.mxu0 0
    %721 = vmatpush1.bf16.msra.mxu0 0
    %722 = vmatprep.subr.bf16.mxu0 0
    %723 = vmatpush1.bf16.msra.mxu0 0
    %724 = vmatprep.mubr.bf16.mxu0 0
    %725 = vmatmul.mubr.bf16.gmra.mrb[0].mxu0 0
    %v726 = vpop.f32.mrb[0].mxu0
    %v727 = vadd.f32 0.0, %v726
    %v728 = vpop.f32.mrb[0].mxu0
    %v729 = vadd.f32 0.0, %v728
    %v730 = vpop.f32.mrb[0].mxu0
    %v731 = vpop.f32.mrb[0].mxu0
    %732 = vdwg.mxu0
    %733 = vmatprep.subr.bf16.mxu0 %v631
    %734 = vmatpush1.bf16.msra.mxu0 %v630
    %735 = vmatprep.subr.bf16.mxu0 %v635
    %736 = vmatpush1.bf16.msra.mxu0 %v634
    %737 = vmatprep.subr.bf16.mxu0 %v639
    %738 = vmatpush1.bf16.msra.mxu0 %v638
    %739 = vmatprep.subr.bf16.mxu0 %v643
    %740 = vmatpush1.bf16.msra.mxu0 %v642
    %741 = vmatprep.subr.bf16.mxu0 %v647
    %742 = vmatpush1.bf16.msra.mxu0 %v646
    %743 = vmatprep.subr.bf16.mxu0 %v651
    %744 = vmatpush1.bf16.msra.mxu0 %v650
    %745 = vmatprep.subr.bf16.mxu0 %v655
    %746 = vmatpush1.bf16.msra.mxu0 %v654
    %747 = vmatprep.subr.bf16.mxu0 %v659
    %748 = vmatpush1.bf16.msra.mxu0 %v658
    %749 = vmatprep.subr.bf16.mxu0 0
    %750 = vmatpush1.bf16.msra.mxu0 0
    %751 = vmatprep.subr.bf16.mxu0 0
    %752 = vmatpush1.bf16.msra.mxu0 0
    %753 = vmatprep.subr.bf16.mxu0 0
    %754 = vmatpush1.bf16.msra.mxu0 0
    %755 = vmatprep.subr.bf16.mxu0 0
    %756 = vmatpush1.bf16.msra.mxu0 0
    %757 = vmatprep.subr.bf16.mxu0 0
    %758 = vmatpush1.bf16.msra.mxu0 0
    %759 = vmatprep.subr.bf16.mxu0 0
    %760 = vmatpush1.bf16.msra.mxu0 0
    %761 = vmatprep.subr.bf16.mxu0 0
    %762 = vmatpush1.bf16.msra.mxu0 0
    %763 = vmatprep.subr.bf16.mxu0 0
    %764 = vmatpush1.bf16.msra.mxu0 0
    %765 = vmatprep.mubr.bf16.mxu0 0
    %766 = vmatmul.mubr.bf16.gmra.mrb[0].mxu0 0
    %v767 = vpop.f32.mrb[0].mxu0
    %v768 = vadd.f32 0.0, %v767
    %v769 = vpop.f32.mrb[0].mxu0
    %v770 = vadd.f32 0.0, %v769
    %v771 = vpop.f32.mrb[0].mxu0
    %v772 = vpop.f32.mrb[0].mxu0
    %773 = vdwg.mxu0
    %v774 = vadd.f32 %v496, %v727
    %v775 = vadd.f32 %v497, %v729
    %v776 = vadd.f32 %v498, %v768
    %v777 = vadd.f32 %v499, %v770
    %v778 = vxor.u32 %v774, 2147483648
    %v779 = vmul.f32 %v778, 1.442695
    %v780 = vpow.pop %v779
    %v781 = vadd.f32 %v780, 1.0
    %v782 = vrcp.pop %v781
    %v783 = vmul.f32 1.0, %v782
    %v784 = vxor.u32 %v775, 2147483648
    %v785 = vmul.f32 %v784, 1.442695
    %v786 = vpow.pop %v785
    %v787 = vadd.f32 %v786, 1.0
    %v788 = vrcp.pop %v787
    %v789 = vmul.f32 1.0, %v788
    %v790 = vtanh.pop %v776
    %v791 = vxor.u32 %v777, 2147483648
    %v792 = vmul.f32 %v791, 1.442695
    %v793 = vpow.pop %v792
    %v794 = vadd.f32 %v793, 1.0
    %v795 = vrcp.pop %v794
    %v796 = vmul.f32 1.0, %v795
    %v797 = vmul.f32 %v789, 0.0
    %v798 = vmul.f32 %v783, %v790
    %v799 = vadd.f32 %v797, %v798
    %v800 = vtanh.pop %v799
    %v801 = vmul.f32 %v796, %v800
    %802 = vst [vmem:[#allocation3] sm:$0xff] %v801
    %s803 = scalar_lea.vmem [#allocation4], 56
    %804 = vst [vmem:[%s803] sm:$0xff] %v801
    %s805 = scalar_lea.vmem [#allocation2], 32
    %v806 = vld [vmem:[%s805] sm:$0xff]
    %v807 = vld [vmem:[%s805 + $0x8] sm:$0xff]
    %v808 = vld [vmem:[%s805 + $0x10] sm:$0xff]
    %v809 = vld [vmem:[%s805 + $0x18] sm:$0xff]
    %v810 = vpack.c.bf16 %v801, %v801
    %v811 = vld [vmem:[#allocation10] sm:$0xff]
    %v812 = vld [vmem:[#allocation10 + $0x8] sm:$0xff]
    %v813 = vld [vmem:[#allocation10 + $0x10] sm:$0xff]
    %v814 = vld [vmem:[#allocation10 + $0x18] sm:$0xff]
    %v815 = vld [vmem:[#allocation10 + $0x20] sm:$0xff]
    %v816 = vld [vmem:[#allocation10 + $0x28] sm:$0xff]
    %v817 = vld [vmem:[#allocation10 + $0x30] sm:$0xff]
    %v818 = vld [vmem:[#allocation10 + $0x38] sm:$0xff]
    %v819 = vld [vmem:[#allocation10 + $0x40] sm:$0xff]
    %v820 = vld [vmem:[#allocation10 + $0x48] sm:$0xff]
    %v821 = vld [vmem:[#allocation10 + $0x50] sm:$0xff]
    %v822 = vld [vmem:[#allocation10 + $0x58] sm:$0xff]
    %v823 = vld [vmem:[#allocation10 + $0x60] sm:$0xff]
    %v824 = vld [vmem:[#allocation10 + $0x68] sm:$0xff]
    %v825 = vld [vmem:[#allocation10 + $0x70] sm:$0xff]
    %v826 = vld [vmem:[#allocation10 + $0x78] sm:$0xff]
    %v827 = vld [vmem:[#allocation10 + $0x80] sm:$0xff]
    %v828 = vld [vmem:[#allocation10 + $0x88] sm:$0xff]
    %v829 = vld [vmem:[#allocation10 + $0x90] sm:$0xff]
    %v830 = vld [vmem:[#allocation10 + $0x98] sm:$0xff]
    %v831 = vld [vmem:[#allocation10 + $0xa0] sm:$0xff]
    %v832 = vld [vmem:[#allocation10 + $0xa8] sm:$0xff]
    %v833 = vld [vmem:[#allocation10 + $0xb0] sm:$0xff]
    %v834 = vld [vmem:[#allocation10 + $0xb8] sm:$0xff]
    %v835 = vld [vmem:[#allocation10 + $0xc0] sm:$0xff]
    %v836 = vld [vmem:[#allocation10 + $0xc8] sm:$0xff]
    %v837 = vld [vmem:[#allocation10 + $0xd0] sm:$0xff]
    %v838 = vld [vmem:[#allocation10 + $0xd8] sm:$0xff]
    %v839 = vld [vmem:[#allocation10 + $0xe0] sm:$0xff]
    %v840 = vld [vmem:[#allocation10 + $0xe8] sm:$0xff]
    %v841 = vld [vmem:[#allocation10 + $0xf0] sm:$0xff]
    %v842 = vld [vmem:[#allocation10 + $0xf8] sm:$0xff]
    %v875 = vunpack.c.l.b16 %v811
    %v876 = vunpack.c.h.b16 %v811
    %v877 = vunpack.c.l.b16 %v812
    %v878 = vunpack.c.h.b16 %v812
    %v879 = vunpack.c.l.b16 %v813
    %v880 = vunpack.c.h.b16 %v813
    %v881 = vunpack.c.l.b16 %v814
    %v882 = vunpack.c.h.b16 %v814
    %v883 = vunpack.c.l.b16 %v815
    %v884 = vunpack.c.h.b16 %v815
    %v885 = vunpack.c.l.b16 %v816
    %v886 = vunpack.c.h.b16 %v816
    %v887 = vunpack.c.l.b16 %v817
    %v888 = vunpack.c.h.b16 %v817
    %v889 = vunpack.c.l.b16 %v818
    %v890 = vunpack.c.h.b16 %v818
    %v891 = vunpack.c.l.b16 %v819
    %v892 = vunpack.c.h.b16 %v819
    %v893 = vunpack.c.l.b16 %v820
    %v894 = vunpack.c.h.b16 %v820
    %v895 = vunpack.c.l.b16 %v821
    %v896 = vunpack.c.h.b16 %v821
    %v897 = vunpack.c.l.b16 %v822
    %v898 = vunpack.c.h.b16 %v822
    %v899 = vunpack.c.l.b16 %v823
    %v900 = vunpack.c.h.b16 %v823
    %v901 = vunpack.c.l.b16 %v824
    %v902 = vunpack.c.h.b16 %v824
    %v903 = vunpack.c.l.b16 %v825
    %v904 = vunpack.c.h.b16 %v825
    %v905 = vunpack.c.l.b16 %v826
    %v906 = vunpack.c.h.b16 %v826
    %v907 = vunpack.c.l.b16 %v827
    %v908 = vunpack.c.h.b16 %v827
    %v909 = vunpack.c.l.b16 %v828
    %v910 = vunpack.c.h.b16 %v828
    %v911 = vunpack.c.l.b16 %v829
    %v912 = vunpack.c.h.b16 %v829
    %v913 = vunpack.c.l.b16 %v830
    %v914 = vunpack.c.h.b16 %v830
    %v915 = vunpack.c.l.b16 %v831
    %v916 = vunpack.c.h.b16 %v831
    %v917 = vunpack.c.l.b16 %v832
    %v918 = vunpack.c.h.b16 %v832
    %v919 = vunpack.c.l.b16 %v833
    %v920 = vunpack.c.h.b16 %v833
    %v921 = vunpack.c.l.b16 %v834
    %v922 = vunpack.c.h.b16 %v834
    %v923 = vunpack.c.l.b16 %v835
    %v924 = vunpack.c.h.b16 %v835
    %v925 = vunpack.c.l.b16 %v836
    %v926 = vunpack.c.h.b16 %v836
    %v927 = vunpack.c.l.b16 %v837
    %v928 = vunpack.c.h.b16 %v837
    %v929 = vunpack.c.l.b16 %v838
    %v930 = vunpack.c.h.b16 %v838
    %v931 = vunpack.c.l.b16 %v839
    %v932 = vunpack.c.h.b16 %v839
    %v933 = vunpack.c.l.b16 %v840
    %v934 = vunpack.c.h.b16 %v840
    %v935 = vunpack.c.l.b16 %v841
    %v936 = vunpack.c.h.b16 %v841
    %v937 = vunpack.c.l.b16 %v842
    %v938 = vunpack.c.h.b16 %v842
    %v939 = vpack.c.b16 %v879, %v875
    %v940 = vpack.c.b16 %v880, %v876
    %v941 = vpack.c.b16 %v881, %v877
    %v942 = vpack.c.b16 %v882, %v878
    %v943 = vpack.c.b16 %v887, %v883
    %v944 = vpack.c.b16 %v888, %v884
    %v945 = vpack.c.b16 %v889, %v885
    %v946 = vpack.c.b16 %v890, %v886
    %v947 = vpack.c.b16 %v895, %v891
    %v948 = vpack.c.b16 %v896, %v892
    %v949 = vpack.c.b16 %v897, %v893
    %v950 = vpack.c.b16 %v898, %v894
    %v951 = vpack.c.b16 %v903, %v899
    %v952 = vpack.c.b16 %v904, %v900
    %v953 = vpack.c.b16 %v905, %v901
    %v954 = vpack.c.b16 %v906, %v902
    %v955 = vpack.c.b16 %v911, %v907
    %v956 = vpack.c.b16 %v912, %v908
    %v957 = vpack.c.b16 %v913, %v909
    %v958 = vpack.c.b16 %v914, %v910
    %v959 = vpack.c.b16 %v919, %v915
    %v960 = vpack.c.b16 %v920, %v916
    %v961 = vpack.c.b16 %v921, %v917
    %v962 = vpack.c.b16 %v922, %v918
    %v963 = vpack.c.b16 %v927, %v923
    %v964 = vpack.c.b16 %v928, %v924
    %v965 = vpack.c.b16 %v929, %v925
    %v966 = vpack.c.b16 %v930, %v926
    %v967 = vpack.c.b16 %v935, %v931
    %v968 = vpack.c.b16 %v936, %v932
    %v969 = vpack.c.b16 %v937, %v933
    %v970 = vpack.c.b16 %v938, %v934
    %1003 = vmatprep.subr.bf16.mxu0 %v940
    %1004 = vmatpush1.bf16.msra.mxu0 %v939
    %1005 = vmatprep.subr.bf16.mxu0 %v944
    %1006 = vmatpush1.bf16.msra.mxu0 %v943
    %1007 = vmatprep.subr.bf16.mxu0 %v948
    %1008 = vmatpush1.bf16.msra.mxu0 %v947
    %1009 = vmatprep.subr.bf16.mxu0 %v952
    %1010 = vmatpush1.bf16.msra.mxu0 %v951
    %1011 = vmatprep.subr.bf16.mxu0 %v956
    %1012 = vmatpush1.bf16.msra.mxu0 %v955
    %1013 = vmatprep.subr.bf16.mxu0 %v960
    %1014 = vmatpush1.bf16.msra.mxu0 %v959
    %1015 = vmatprep.subr.bf16.mxu0 %v964
    %1016 = vmatpush1.bf16.msra.mxu0 %v963
    %1017 = vmatprep.subr.bf16.mxu0 %v968
    %1018 = vmatpush1.bf16.msra.mxu0 %v967
    %1019 = vmatprep.subr.bf16.mxu0 0
    %1020 = vmatpush1.bf16.msra.mxu0 0
    %1021 = vmatprep.subr.bf16.mxu0 0
    %1022 = vmatpush1.bf16.msra.mxu0 0
    %1023 = vmatprep.subr.bf16.mxu0 0
    %1024 = vmatpush1.bf16.msra.mxu0 0
    %1025 = vmatprep.subr.bf16.mxu0 0
    %1026 = vmatpush1.bf16.msra.mxu0 0
    %1027 = vmatprep.subr.bf16.mxu0 0
    %1028 = vmatpush1.bf16.msra.mxu0 0
    %1029 = vmatprep.subr.bf16.mxu0 0
    %1030 = vmatpush1.bf16.msra.mxu0 0
    %1031 = vmatprep.subr.bf16.mxu0 0
    %1032 = vmatpush1.bf16.msra.mxu0 0
    %1033 = vmatprep.subr.bf16.mxu0 0
    %1034 = vmatpush1.bf16.msra.mxu0 0
    %1035 = vmatprep.mubr.bf16.mxu0 0
    %1036 = vmatmul.mubr.bf16.gmra.mrb[0].mxu0 %v810
    %v1037 = vpop.f32.mrb[0].mxu0
    %v1038 = vadd.f32 0.0, %v1037
    %v1039 = vpop.f32.mrb[0].mxu0
    %v1040 = vadd.f32 0.0, %v1039
    %v1041 = vpop.f32.mrb[0].mxu0
    %v1042 = vpop.f32.mrb[0].mxu0
    %1043 = vdwg.mxu0
    %1044 = vmatprep.subr.bf16.mxu0 %v942
    %1045 = vmatpush1.bf16.msra.mxu0 %v941
    %1046 = vmatprep.subr.bf16.mxu0 %v946
    %1047 = vmatpush1.bf16.msra.mxu0 %v945
    %1048 = vmatprep.subr.bf16.mxu0 %v950
    %1049 = vmatpush1.bf16.msra.mxu0 %v949
    %1050 = vmatprep.subr.bf16.mxu0 %v954
    %1051 = vmatpush1.bf16.msra.mxu0 %v953
    %1052 = vmatprep.subr.bf16.mxu0 %v958
    %1053 = vmatpush1.bf16.msra.mxu0 %v957
    %1054 = vmatprep.subr.bf16.mxu0 %v962
    %1055 = vmatpush1.bf16.msra.mxu0 %v961
    %1056 = vmatprep.subr.bf16.mxu0 %v966
    %1057 = vmatpush1.bf16.msra.mxu0 %v965
    %1058 = vmatprep.subr.bf16.mxu0 %v970
    %1059 = vmatpush1.bf16.msra.mxu0 %v969
    %1060 = vmatprep.subr.bf16.mxu0 0
    %1061 = vmatpush1.bf16.msra.mxu0 0
    %1062 = vmatprep.subr.bf16.mxu0 0
    %1063 = vmatpush1.bf16.msra.mxu0 0
    %1064 = vmatprep.subr.bf16.mxu0 0
    %1065 = vmatpush1.bf16.msra.mxu0 0
    %1066 = vmatprep.subr.bf16.mxu0 0
    %1067 = vmatpush1.bf16.msra.mxu0 0
    %1068 = vmatprep.subr.bf16.mxu0 0
    %1069 = vmatpush1.bf16.msra.mxu0 0
    %1070 = vmatprep.subr.bf16.mxu0 0
    %1071 = vmatpush1.bf16.msra.mxu0 0
    %1072 = vmatprep.subr.bf16.mxu0 0
    %1073 = vmatpush1.bf16.msra.mxu0 0
    %1074 = vmatprep.subr.bf16.mxu0 0
    %1075 = vmatpush1.bf16.msra.mxu0 0
    %1076 = vmatprep.mubr.bf16.mxu0 0
    %1077 = vmatmul.mubr.bf16.gmra.mrb[0].mxu0 %v810
    %v1078 = vpop.f32.mrb[0].mxu0
    %v1079 = vadd.f32 0.0, %v1078
    %v1080 = vpop.f32.mrb[0].mxu0
    %v1081 = vadd.f32 0.0, %v1080
    %v1082 = vpop.f32.mrb[0].mxu0
    %v1083 = vpop.f32.mrb[0].mxu0
    %1084 = vdwg.mxu0
    %v1085 = vadd.f32 %v806, %v1038
    %v1086 = vadd.f32 %v807, %v1040
    %v1087 = vadd.f32 %v808, %v1079
    %v1088 = vadd.f32 %v809, %v1081
    %v1089 = vxor.u32 %v1085, 2147483648
    %v1090 = vmul.f32 %v1089, 1.442695
    %v1091 = vpow.pop %v1090
    %v1092 = vadd.f32 %v1091, 1.0
    %v1093 = vrcp.pop %v1092
    %v1094 = vmul.f32 1.0, %v1093
    %v1095 = vxor.u32 %v1086, 2147483648
    %v1096 = vmul.f32 %v1095, 1.442695
    %v1097 = vpow.pop %v1096
    %v1098 = vadd.f32 %v1097, 1.0
    %v1099 = vrcp.pop %v1098
    %v1100 = vmul.f32 1.0, %v1099
    %v1101 = vtanh.pop %v1087
    %v1102 = vxor.u32 %v1088, 2147483648
    %v1103 = vmul.f32 %v1102, 1.442695
    %v1104 = vpow.pop %v1103
    %v1105 = vadd.f32 %v1104, 1.0
    %v1106 = vrcp.pop %v1105
    %v1107 = vmul.f32 1.0, %v1106
    %v1108 = vmul.f32 %v1100, %v799
    %v1109 = vmul.f32 %v1094, %v1101
    %v1110 = vadd.f32 %v1108, %v1109
    %v1111 = vtanh.pop %v1110
    %v1112 = vmul.f32 %v1107, %v1111
    %s1113 = scalar_lea.vmem [#allocation3], 8
    %1114 = vst [vmem:[%s1113] sm:$0xff] %v1112
    %s1115 = scalar_lea.vmem [#allocation4], 48
    %1116 = vst [vmem:[%s1115] sm:$0xff] %v1112
    %s1117 = scalar_lea.vmem [#allocation2], 64
    %v1118 = vld [vmem:[%s1117] sm:$0xff]
    %v1119 = vld [vmem:[%s1117 + $0x8] sm:$0xff]
    %v1120 = vld [vmem:[%s1117 + $0x10] sm:$0xff]
    %v1121 = vld [vmem:[%s1117 + $0x18] sm:$0xff]
    %v1122 = vpack.c.bf16 %v1112, %v1112
    %v1123 = vld [vmem:[#allocation10] sm:$0xff]
    %v1124 = vld [vmem:[#allocation10 + $0x8] sm:$0xff]
    %v1125 = vld [vmem:[#allocation10 + $0x10] sm:$0xff]
    %v1126 = vld [vmem:[#allocation10 + $0x18] sm:$0xff]
    %v1127 = vld [vmem:[#allocation10 + $0x20] sm:$0xff]
    %v1128 = vld [vmem:[#allocation10 + $0x28] sm:$0xff]
    %v1129 = vld [vmem:[#allocation10 + $0x30] sm:$0xff]
    %v1130 = vld [vmem:[#allocation10 + $0x38] sm:$0xff]
    %v1131 = vld [vmem:[#allocation10 + $0x40] sm:$0xff]
    %v1132 = vld [vmem:[#allocation10 + $0x48] sm:$0xff]
    %v1133 = vld [vmem:[#allocation10 + $0x50] sm:$0xff]
    %v1134 = vld [vmem:[#allocation10 + $0x58] sm:$0xff]
    %v1135 = vld [vmem:[#allocation10 + $0x60] sm:$0xff]
    %v1136 = vld [vmem:[#allocation10 + $0x68] sm:$0xff]
    %v1137 = vld [vmem:[#allocation10 + $0x70] sm:$0xff]
    %v1138 = vld [vmem:[#allocation10 + $0x78] sm:$0xff]
    %v1139 = vld [vmem:[#allocation10 + $0x80] sm:$0xff]
    %v1140 = vld [vmem:[#allocation10 + $0x88] sm:$0xff]
    %v1141 = vld [vmem:[#allocation10 + $0x90] sm:$0xff]
    %v1142 = vld [vmem:[#allocation10 + $0x98] sm:$0xff]
    %v1143 = vld [vmem:[#allocation10 + $0xa0] sm:$0xff]
    %v1144 = vld [vmem:[#allocation10 + $0xa8] sm:$0xff]
    %v1145 = vld [vmem:[#allocation10 + $0xb0] sm:$0xff]
    %v1146 = vld [vmem:[#allocation10 + $0xb8] sm:$0xff]
    %v1147 = vld [vmem:[#allocation10 + $0xc0] sm:$0xff]
    %v1148 = vld [vmem:[#allocation10 + $0xc8] sm:$0xff]
    %v1149 = vld [vmem:[#allocation10 + $0xd0] sm:$0xff]
    %v1150 = vld [vmem:[#allocation10 + $0xd8] sm:$0xff]
    %v1151 = vld [vmem:[#allocation10 + $0xe0] sm:$0xff]
    %v1152 = vld [vmem:[#allocation10 + $0xe8] sm:$0xff]
    %v1153 = vld [vmem:[#allocation10 + $0xf0] sm:$0xff]
    %v1154 = vld [vmem:[#allocation10 + $0xf8] sm:$0xff]
    %v1187 = vunpack.c.l.b16 %v1123
    %v1188 = vunpack.c.h.b16 %v1123
    %v1189 = vunpack.c.l.b16 %v1124
    %v1190 = vunpack.c.h.b16 %v1124
    %v1191 = vunpack.c.l.b16 %v1125
    %v1192 = vunpack.c.h.b16 %v1125
    %v1193 = vunpack.c.l.b16 %v1126
    %v1194 = vunpack.c.h.b16 %v1126
    %v1195 = vunpack.c.l.b16 %v1127
    %v1196 = vunpack.c.h.b16 %v1127
    %v1197 = vunpack.c.l.b16 %v1128
    %v1198 = vunpack.c.h.b16 %v1128
    %v1199 = vunpack.c.l.b16 %v1129
    %v1200 = vunpack.c.h.b16 %v1129
    %v1201 = vunpack.c.l.b16 %v1130
    %v1202 = vunpack.c.h.b16 %v1130
    %v1203 = vunpack.c.l.b16 %v1131
    %v1204 = vunpack.c.h.b16 %v1131
    %v1205 = vunpack.c.l.b16 %v1132
    %v1206 = vunpack.c.h.b16 %v1132
    %v1207 = vunpack.c.l.b16 %v1133
    %v1208 = vunpack.c.h.b16 %v1133
    %v1209 = vunpack.c.l.b16 %v1134
    %v1210 = vunpack.c.h.b16 %v1134
    %v1211 = vunpack.c.l.b16 %v1135
    %v1212 = vunpack.c.h.b16 %v1135
    %v1213 = vunpack.c.l.b16 %v1136
    %v1214 = vunpack.c.h.b16 %v1136
    %v1215 = vunpack.c.l.b16 %v1137
    %v1216 = vunpack.c.h.b16 %v1137
    %v1217 = vunpack.c.l.b16 %v1138
    %v1218 = vunpack.c.h.b16 %v1138
    %v1219 = vunpack.c.l.b16 %v1139
    %v1220 = vunpack.c.h.b16 %v1139
    %v1221 = vunpack.c.l.b16 %v1140
    %v1222 = vunpack.c.h.b16 %v1140
    %v1223 = vunpack.c.l.b16 %v1141
    %v1224 = vunpack.c.h.b16 %v1141
    %v1225 = vunpack.c.l.b16 %v1142
    %v1226 = vunpack.c.h.b16 %v1142
    %v1227 = vunpack.c.l.b16 %v1143
    %v1228 = vunpack.c.h.b16 %v1143
    %v1229 = vunpack.c.l.b16 %v1144
    %v1230 = vunpack.c.h.b16 %v1144
    %v1231 = vunpack.c.l.b16 %v1145
    %v1232 = vunpack.c.h.b16 %v1145
    %v1233 = vunpack.c.l.b16 %v1146
    %v1234 = vunpack.c.h.b16 %v1146
    %v1235 = vunpack.c.l.b16 %v1147
    %v1236 = vunpack.c.h.b16 %v1147
    %v1237 = vunpack.c.l.b16 %v1148
    %v1238 = vunpack.c.h.b16 %v1148
    %v1239 = vunpack.c.l.b16 %v1149
    %v1240 = vunpack.c.h.b16 %v1149
    %v1241 = vunpack.c.l.b16 %v1150
    %v1242 = vunpack.c.h.b16 %v1150
    %v1243 = vunpack.c.l.b16 %v1151
    %v1244 = vunpack.c.h.b16 %v1151
    %v1245 = vunpack.c.l.b16 %v1152
    %v1246 = vunpack.c.h.b16 %v1152
    %v1247 = vunpack.c.l.b16 %v1153
    %v1248 = vunpack.c.h.b16 %v1153
    %v1249 = vunpack.c.l.b16 %v1154
    %v1250 = vunpack.c.h.b16 %v1154
    %v1251 = vpack.c.b16 %v1191, %v1187
    %v1252 = vpack.c.b16 %v1192, %v1188
    %v1253 = vpack.c.b16 %v1193, %v1189
    %v1254 = vpack.c.b16 %v1194, %v1190
    %v1255 = vpack.c.b16 %v1199, %v1195
    %v1256 = vpack.c.b16 %v1200, %v1196
    %v1257 = vpack.c.b16 %v1201, %v1197
    %v1258 = vpack.c.b16 %v1202, %v1198
    %v1259 = vpack.c.b16 %v1207, %v1203
    %v1260 = vpack.c.b16 %v1208, %v1204
    %v1261 = vpack.c.b16 %v1209, %v1205
    %v1262 = vpack.c.b16 %v1210, %v1206
    %v1263 = vpack.c.b16 %v1215, %v1211
    %v1264 = vpack.c.b16 %v1216, %v1212
    %v1265 = vpack.c.b16 %v1217, %v1213
    %v1266 = vpack.c.b16 %v1218, %v1214
    %v1267 = vpack.c.b16 %v1223, %v1219
    %v1268 = vpack.c.b16 %v1224, %v1220
    %v1269 = vpack.c.b16 %v1225, %v1221
    %v1270 = vpack.c.b16 %v1226, %v1222
    %v1271 = vpack.c.b16 %v1231, %v1227
    %v1272 = vpack.c.b16 %v1232, %v1228
    %v1273 = vpack.c.b16 %v1233, %v1229
    %v1274 = vpack.c.b16 %v1234, %v1230
    %v1275 = vpack.c.b16 %v1239, %v1235
    %v1276 = vpack.c.b16 %v1240, %v1236
    %v1277 = vpack.c.b16 %v1241, %v1237
    %v1278 = vpack.c.b16 %v1242, %v1238
    %v1279 = vpack.c.b16 %v1247, %v1243
    %v1280 = vpack.c.b16 %v1248, %v1244
    %v1281 = vpack.c.b16 %v1249, %v1245
    %v1282 = vpack.c.b16 %v1250, %v1246
    %1315 = vmatprep.subr.bf16.mxu0 %v1252
    %1316 = vmatpush1.bf16.msra.mxu0 %v1251
    %1317 = vmatprep.subr.bf16.mxu0 %v1256
    %1318 = vmatpush1.bf16.msra.mxu0 %v1255
    %1319 = vmatprep.subr.bf16.mxu0 %v1260
    %1320 = vmatpush1.bf16.msra.mxu0 %v1259
    %1321 = vmatprep.subr.bf16.mxu0 %v1264
    %1322 = vmatpush1.bf16.msra.mxu0 %v1263
    %1323 = vmatprep.subr.bf16.mxu0 %v1268
    %1324 = vmatpush1.bf16.msra.mxu0 %v1267
    %1325 = vmatprep.subr.bf16.mxu0 %v1272
    %1326 = vmatpush1.bf16.msra.mxu0 %v1271
    %1327 = vmatprep.subr.bf16.mxu0 %v1276
    %1328 = vmatpush1.bf16.msra.mxu0 %v1275
    %1329 = vmatprep.subr.bf16.mxu0 %v1280
    %1330 = vmatpush1.bf16.msra.mxu0 %v1279
    %1331 = vmatprep.subr.bf16.mxu0 0
    %1332 = vmatpush1.bf16.msra.mxu0 0
    %1333 = vmatprep.subr.bf16.mxu0 0
    %1334 = vmatpush1.bf16.msra.mxu0 0
    %1335 = vmatprep.subr.bf16.mxu0 0
    %1336 = vmatpush1.bf16.msra.mxu0 0
    %1337 = vmatprep.subr.bf16.mxu0 0
    %1338 = vmatpush1.bf16.msra.mxu0 0
    %1339 = vmatprep.subr.bf16.mxu0 0
    %1340 = vmatpush1.bf16.msra.mxu0 0
    %1341 = vmatprep.subr.bf16.mxu0 0
    %1342 = vmatpush1.bf16.msra.mxu0 0
    %1343 = vmatprep.subr.bf16.mxu0 0
    %1344 = vmatpush1.bf16.msra.mxu0 0
    %1345 = vmatprep.subr.bf16.mxu0 0
    %1346 = vmatpush1.bf16.msra.mxu0 0
    %1347 = vmatprep.mubr.bf16.mxu0 0
    %1348 = vmatmul.mubr.bf16.gmra.mrb[0].mxu0 %v1122
    %v1349 = vpop.f32.mrb[0].mxu0
    %v1350 = vadd.f32 0.0, %v1349
    %v1351 = vpop.f32.mrb[0].mxu0
    %v1352 = vadd.f32 0.0, %v1351
    %v1353 = vpop.f32.mrb[0].mxu0
    %v1354 = vpop.f32.mrb[0].mxu0
    %1355 = vdwg.mxu0
    %1356 = vmatprep.subr.bf16.mxu0 %v1254
    %1357 = vmatpush1.bf16.msra.mxu0 %v1253
    %1358 = vmatprep.subr.bf16.mxu0 %v1258
    %1359 = vmatpush1.bf16.msra.mxu0 %v1257
    %1360 = vmatprep.subr.bf16.mxu0 %v1262
    %1361 = vmatpush1.bf16.msra.mxu0 %v1261
    %1362 = vmatprep.subr.bf16.mxu0 %v1266
    %1363 = vmatpush1.bf16.msra.mxu0 %v1265
    %1364 = vmatprep.subr.bf16.mxu0 %v1270
    %1365 = vmatpush1.bf16.msra.mxu0 %v1269
    %1366 = vmatprep.subr.bf16.mxu0 %v1274
    %1367 = vmatpush1.bf16.msra.mxu0 %v1273
    %1368 = vmatprep.subr.bf16.mxu0 %v1278
    %1369 = vmatpush1.bf16.msra.mxu0 %v1277
    %1370 = vmatprep.subr.bf16.mxu0 %v1282
    %1371 = vmatpush1.bf16.msra.mxu0 %v1281
    %1372 = vmatprep.subr.bf16.mxu0 0
    %1373 = vmatpush1.bf16.msra.mxu0 0
    %1374 = vmatprep.subr.bf16.mxu0 0
    %1375 = vmatpush1.bf16.msra.mxu0 0
    %1376 = vmatprep.subr.bf16.mxu0 0
    %1377 = vmatpush1.bf16.msra.mxu0 0
    %1378 = vmatprep.subr.bf16.mxu0 0
    %1379 = vmatpush1.bf16.msra.mxu0 0
    %1380 = vmatprep.subr.bf16.mxu0 0
    %1381 = vmatpush1.bf16.msra.mxu0 0
    %1382 = vmatprep.subr.bf16.mxu0 0
    %1383 = vmatpush1.bf16.msra.mxu0 0
    %1384 = vmatprep.subr.bf16.mxu0 0
    %1385 = vmatpush1.bf16.msra.mxu0 0
    %1386 = vmatprep.subr.bf16.mxu0 0
    %1387 = vmatpush1.bf16.msra.mxu0 0
    %1388 = vmatprep.mubr.bf16.mxu0 0
    %1389 = vmatmul.mubr.bf16.gmra.mrb[0].mxu0 %v1122
    %v1390 = vpop.f32.mrb[0].mxu0
    %v1391 = vadd.f32 0.0, %v1390
    %v1392 = vpop.f32.mrb[0].mxu0
    %v1393 = vadd.f32 0.0, %v1392
    %v1394 = vpop.f32.mrb[0].mxu0
    %v1395 = vpop.f32.mrb[0].mxu0
    %1396 = vdwg.mxu0
    %v1397 = vadd.f32 %v1118, %v1350
    %v1398 = vadd.f32 %v1119, %v1352
    %v1399 = vadd.f32 %v1120, %v1391
    %v1400 = vadd.f32 %v1121, %v1393
    %v1401 = vxor.u32 %v1397, 2147483648
    %v1402 = vmul.f32 %v1401, 1.442695
    %v1403 = vpow.pop %v1402
    %v1404 = vadd.f32 %v1403, 1.0
    %v1405 = vrcp.pop %v1404
    %v1406 = vmul.f32 1.0, %v1405
    %v1407 = vxor.u32 %v1398, 2147483648
    %v1408 = vmul.f32 %v1407, 1.442695
    %v1409 = vpow.pop %v1408
    %v1410 = vadd.f32 %v1409, 1.0
    %v1411 = vrcp.pop %v1410
    %v1412 = vmul.f32 1.0, %v1411
    %v1413 = vtanh.pop %v1399
    %v1414 = vxor.u32 %v1400, 2147483648
    %v1415 = vmul.f32 %v1414, 1.442695
    %v1416 = vpow.pop %v1415
    %v1417 = vadd.f32 %v1416, 1.0
    %v1418 = vrcp.pop %v1417
    %v1419 = vmul.f32 1.0, %v1418
    %v1420 = vmul.f32 %v1412, %v1110
    %v1421 = vmul.f32 %v1406, %v1413
    %v1422 = vadd.f32 %v1420, %v1421
    %v1423 = vtanh.pop %v1422
    %v1424 = vmul.f32 %v1419, %v1423
    %s1425 = scalar_lea.vmem [#allocation3], 16
    %1426 = vst [vmem:[%s1425] sm:$0xff] %v1424
    %s1427 = scalar_lea.vmem [#allocation4], 40
    %1428 = vst [vmem:[%s1427] sm:$0xff] %v1424
    %s1429 = scalar_lea.vmem [#allocation2], 96
    %v1430 = vld [vmem:[%s1429] sm:$0xff]
    %v1431 = vld [vmem:[%s1429 + $0x8] sm:$0xff]
    %v1432 = vld [vmem:[%s1429 + $0x10] sm:$0xff]
    %v1433 = vld [vmem:[%s1429 + $0x18] sm:$0xff]
    %v1434 = vpack.c.bf16 %v1424, %v1424
    %v1435 = vld [vmem:[#allocation10] sm:$0xff]
    %v1436 = vld [vmem:[#allocation10 + $0x8] sm:$0xff]
    %v1437 = vld [vmem:[#allocation10 + $0x10] sm:$0xff]
    %v1438 = vld [vmem:[#allocation10 + $0x18] sm:$0xff]
    %v1439 = vld [vmem:[#allocation10 + $0x20] sm:$0xff]
    %v1440 = vld [vmem:[#allocation10 + $0x28] sm:$0xff]
    %v1441 = vld [vmem:[#allocation10 + $0x30] sm:$0xff]
    %v1442 = vld [vmem:[#allocation10 + $0x38] sm:$0xff]
    %v1443 = vld [vmem:[#allocation10 + $0x40] sm:$0xff]
    %v1444 = vld [vmem:[#allocation10 + $0x48] sm:$0xff]
    %v1445 = vld [vmem:[#allocation10 + $0x50] sm:$0xff]
    %v1446 = vld [vmem:[#allocation10 + $0x58] sm:$0xff]
    %v1447 = vld [vmem:[#allocation10 + $0x60] sm:$0xff]
    %v1448 = vld [vmem:[#allocation10 + $0x68] sm:$0xff]
    %v1449 = vld [vmem:[#allocation10 + $0x70] sm:$0xff]
    %v1450 = vld [vmem:[#allocation10 + $0x78] sm:$0xff]
    %v1451 = vld [vmem:[#allocation10 + $0x80] sm:$0xff]
    %v1452 = vld [vmem:[#allocation10 + $0x88] sm:$0xff]
    %v1453 = vld [vmem:[#allocation10 + $0x90] sm:$0xff]
    %v1454 = vld [vmem:[#allocation10 + $0x98] sm:$0xff]
    %v1455 = vld [vmem:[#allocation10 + $0xa0] sm:$0xff]
    %v1456 = vld [vmem:[#allocation10 + $0xa8] sm:$0xff]
    %v1457 = vld [vmem:[#allocation10 + $0xb0] sm:$0xff]
    %v1458 = vld [vmem:[#allocation10 + $0xb8] sm:$0xff]
    %v1459 = vld [vmem:[#allocation10 + $0xc0] sm:$0xff]
    %v1460 = vld [vmem:[#allocation10 + $0xc8] sm:$0xff]
    %v1461 = vld [vmem:[#allocation10 + $0xd0] sm:$0xff]
    %v1462 = vld [vmem:[#allocation10 + $0xd8] sm:$0xff]
    %v1463 = vld [vmem:[#allocation10 + $0xe0] sm:$0xff]
    %v1464 = vld [vmem:[#allocation10 + $0xe8] sm:$0xff]
    %v1465 = vld [vmem:[#allocation10 + $0xf0] sm:$0xff]
    %v1466 = vld [vmem:[#allocation10 + $0xf8] sm:$0xff]
    %v1499 = vunpack.c.l.b16 %v1435
    %v1500 = vunpack.c.h.b16 %v1435
    %v1501 = vunpack.c.l.b16 %v1436
    %v1502 = vunpack.c.h.b16 %v1436
    %v1503 = vunpack.c.l.b16 %v1437
    %v1504 = vunpack.c.h.b16 %v1437
    %v1505 = vunpack.c.l.b16 %v1438
    %v1506 = vunpack.c.h.b16 %v1438
    %v1507 = vunpack.c.l.b16 %v1439
    %v1508 = vunpack.c.h.b16 %v1439
    %v1509 = vunpack.c.l.b16 %v1440
    %v1510 = vunpack.c.h.b16 %v1440
    %v1511 = vunpack.c.l.b16 %v1441
    %v1512 = vunpack.c.h.b16 %v1441
    %v1513 = vunpack.c.l.b16 %v1442
    %v1514 = vunpack.c.h.b16 %v1442
    %v1515 = vunpack.c.l.b16 %v1443
    %v1516 = vunpack.c.h.b16 %v1443
    %v1517 = vunpack.c.l.b16 %v1444
    %v1518 = vunpack.c.h.b16 %v1444
    %v1519 = vunpack.c.l.b16 %v1445
    %v1520 = vunpack.c.h.b16 %v1445
    %v1521 = vunpack.c.l.b16 %v1446
    %v1522 = vunpack.c.h.b16 %v1446
    %v1523 = vunpack.c.l.b16 %v1447
    %v1524 = vunpack.c.h.b16 %v1447
    %v1525 = vunpack.c.l.b16 %v1448
    %v1526 = vunpack.c.h.b16 %v1448
    %v1527 = vunpack.c.l.b16 %v1449
    %v1528 = vunpack.c.h.b16 %v1449
    %v1529 = vunpack.c.l.b16 %v1450
    %v1530 = vunpack.c.h.b16 %v1450
    %v1531 = vunpack.c.l.b16 %v1451
    %v1532 = vunpack.c.h.b16 %v1451
    %v1533 = vunpack.c.l.b16 %v1452
    %v1534 = vunpack.c.h.b16 %v1452
    %v1535 = vunpack.c.l.b16 %v1453
    %v1536 = vunpack.c.h.b16 %v1453
    %v1537 = vunpack.c.l.b16 %v1454
    %v1538 = vunpack.c.h.b16 %v1454
    %v1539 = vunpack.c.l.b16 %v1455
    %v1540 = vunpack.c.h.b16 %v1455
    %v1541 = vunpack.c.l.b16 %v1456
    %v1542 = vunpack.c.h.b16 %v1456
    %v1543 = vunpack.c.l.b16 %v1457
    %v1544 = vunpack.c.h.b16 %v1457
    %v1545 = vunpack.c.l.b16 %v1458
    %v1546 = vunpack.c.h.b16 %v1458
    %v1547 = vunpack.c.l.b16 %v1459
    %v1548 = vunpack.c.h.b16 %v1459
    %v1549 = vunpack.c.l.b16 %v1460
    %v1550 = vunpack.c.h.b16 %v1460
    %v1551 = vunpack.c.l.b16 %v1461
    %v1552 = vunpack.c.h.b16 %v1461
    %v1553 = vunpack.c.l.b16 %v1462
    %v1554 = vunpack.c.h.b16 %v1462
    %v1555 = vunpack.c.l.b16 %v1463
    %v1556 = vunpack.c.h.b16 %v1463
    %v1557 = vunpack.c.l.b16 %v1464
    %v1558 = vunpack.c.h.b16 %v1464
    %v1559 = vunpack.c.l.b16 %v1465
    %v1560 = vunpack.c.h.b16 %v1465
    %v1561 = vunpack.c.l.b16 %v1466
    %v1562 = vunpack.c.h.b16 %v1466
    %v1563 = vpack.c.b16 %v1503, %v1499
    %v1564 = vpack.c.b16 %v1504, %v1500
    %v1565 = vpack.c.b16 %v1505, %v1501
    %v1566 = vpack.c.b16 %v1506, %v1502
    %v1567 = vpack.c.b16 %v1511, %v1507
    %v1568 = vpack.c.b16 %v1512, %v1508
    %v1569 = vpack.c.b16 %v1513, %v1509
    %v1570 = vpack.c.b16 %v1514, %v1510
    %v1571 = vpack.c.b16 %v1519, %v1515
    %v1572 = vpack.c.b16 %v1520, %v1516
    %v1573 = vpack.c.b16 %v1521, %v1517
    %v1574 = vpack.c.b16 %v1522, %v1518
    %v1575 = vpack.c.b16 %v1527, %v1523
    %v1576 = vpack.c.b16 %v1528, %v1524
    %v1577 = vpack.c.b16 %v1529, %v1525
    %v1578 = vpack.c.b16 %v1530, %v1526
    %v1579 = vpack.c.b16 %v1535, %v1531
    %v1580 = vpack.c.b16 %v1536, %v1532
    %v1581 = vpack.c.b16 %v1537, %v1533
    %v1582 = vpack.c.b16 %v1538, %v1534
    %v1583 = vpack.c.b16 %v1543, %v1539
    %v1584 = vpack.c.b16 %v1544, %v1540
    %v1585 = vpack.c.b16 %v1545, %v1541
    %v1586 = vpack.c.b16 %v1546, %v1542
    %v1587 = vpack.c.b16 %v1551, %v1547
    %v1588 = vpack.c.b16 %v1552, %v1548
    %v1589 = vpack.c.b16 %v1553, %v1549
    %v1590 = vpack.c.b16 %v1554, %v1550
    %v1591 = vpack.c.b16 %v1559, %v1555
    %v1592 = vpack.c.b16 %v1560, %v1556
    %v1593 = vpack.c.b16 %v1561, %v1557
    %v1594 = vpack.c.b16 %v1562, %v1558
    %1627 = vmatprep.subr.bf16.mxu0 %v1564
    %1628 = vmatpush1.bf16.msra.mxu0 %v1563
    %1629 = vmatprep.subr.bf16.mxu0 %v1568
    %1630 = vmatpush1.bf16.msra.mxu0 %v1567
    %1631 = vmatprep.subr.bf16.mxu0 %v1572
    %1632 = vmatpush1.bf16.msra.mxu0 %v1571
    %1633 = vmatprep.subr.bf16.mxu0 %v1576
    %1634 = vmatpush1.bf16.msra.mxu0 %v1575
    %1635 = vmatprep.subr.bf16.mxu0 %v1580
    %1636 = vmatpush1.bf16.msra.mxu0 %v1579
    %1637 = vmatprep.subr.bf16.mxu0 %v1584
    %1638 = vmatpush1.bf16.msra.mxu0 %v1583
    %1639 = vmatprep.subr.bf16.mxu0 %v1588
    %1640 = vmatpush1.bf16.msra.mxu0 %v1587
    %1641 = vmatprep.subr.bf16.mxu0 %v1592
    %1642 = vmatpush1.bf16.msra.mxu0 %v1591
    %1643 = vmatprep.subr.bf16.mxu0 0
    %1644 = vmatpush1.bf16.msra.mxu0 0
    %1645 = vmatprep.subr.bf16.mxu0 0
    %1646 = vmatpush1.bf16.msra.mxu0 0
    %1647 = vmatprep.subr.bf16.mxu0 0
    %1648 = vmatpush1.bf16.msra.mxu0 0
    %1649 = vmatprep.subr.bf16.mxu0 0
    %1650 = vmatpush1.bf16.msra.mxu0 0
    %1651 = vmatprep.subr.bf16.mxu0 0
    %1652 = vmatpush1.bf16.msra.mxu0 0
    %1653 = vmatprep.subr.bf16.mxu0 0
    %1654 = vmatpush1.bf16.msra.mxu0 0
    %1655 = vmatprep.subr.bf16.mxu0 0
    %1656 = vmatpush1.bf16.msra.mxu0 0
    %1657 = vmatprep.subr.bf16.mxu0 0
    %1658 = vmatpush1.bf16.msra.mxu0 0
    %1659 = vmatprep.mubr.bf16.mxu0 0
    %1660 = vmatmul.mubr.bf16.gmra.mrb[0].mxu0 %v1434
    %v1661 = vpop.f32.mrb[0].mxu0
    %v1662 = vadd.f32 0.0, %v1661
    %v1663 = vpop.f32.mrb[0].mxu0
    %v1664 = vadd.f32 0.0, %v1663
    %v1665 = vpop.f32.mrb[0].mxu0
    %v1666 = vpop.f32.mrb[0].mxu0
    %1667 = vdwg.mxu0
    %1668 = vmatprep.subr.bf16.mxu0 %v1566
    %1669 = vmatpush1.bf16.msra.mxu0 %v1565
    %1670 = vmatprep.subr.bf16.mxu0 %v1570
    %1671 = vmatpush1.bf16.msra.mxu0 %v1569
    %1672 = vmatprep.subr.bf16.mxu0 %v1574
    %1673 = vmatpush1.bf16.msra.mxu0 %v1573
    %1674 = vmatprep.subr.bf16.mxu0 %v1578
    %1675 = vmatpush1.bf16.msra.mxu0 %v1577
    %1676 = vmatprep.subr.bf16.mxu0 %v1582
    %1677 = vmatpush1.bf16.msra.mxu0 %v1581
    %1678 = vmatprep.subr.bf16.mxu0 %v1586
    %1679 = vmatpush1.bf16.msra.mxu0 %v1585
    %1680 = vmatprep.subr.bf16.mxu0 %v1590
    %1681 = vmatpush1.bf16.msra.mxu0 %v1589
    %1682 = vmatprep.subr.bf16.mxu0 %v1594
    %1683 = vmatpush1.bf16.msra.mxu0 %v1593
    %1684 = vmatprep.subr.bf16.mxu0 0
    %1685 = vmatpush1.bf16.msra.mxu0 0
    %1686 = vmatprep.subr.bf16.mxu0 0
    %1687 = vmatpush1.bf16.msra.mxu0 0
    %1688 = vmatprep.subr.bf16.mxu0 0
    %1689 = vmatpush1.bf16.msra.mxu0 0
    %1690 = vmatprep.subr.bf16.mxu0 0
    %1691 = vmatpush1.bf16.msra.mxu0 0
    %1692 = vmatprep.subr.bf16.mxu0 0
    %1693 = vmatpush1.bf16.msra.mxu0 0
    %1694 = vmatprep.subr.bf16.mxu0 0
    %1695 = vmatpush1.bf16.msra.mxu0 0
    %1696 = vmatprep.subr.bf16.mxu0 0
    %1697 = vmatpush1.bf16.msra.mxu0 0
    %1698 = vmatprep.subr.bf16.mxu0 0
    %1699 = vmatpush1.bf16.msra.mxu0 0
    %1700 = vmatprep.mubr.bf16.mxu0 0
    %1701 = vmatmul.mubr.bf16.gmra.mrb[0].mxu0 %v1434
    %v1702 = vpop.f32.mrb[0].mxu0
    %v1703 = vadd.f32 0.0, %v1702
    %v1704 = vpop.f32.mrb[0].mxu0
    %v1705 = vadd.f32 0.0, %v1704
    %v1706 = vpop.f32.mrb[0].mxu0
    %v1707 = vpop.f32.mrb[0].mxu0
    %1708 = vdwg.mxu0
    %v1709 = vadd.f32 %v1430, %v1662
    %v1710 = vadd.f32 %v1431, %v1664
    %v1711 = vadd.f32 %v1432, %v1703
    %v1712 = vadd.f32 %v1433, %v1705
    %v1713 = vxor.u32 %v1709, 2147483648
    %v1714 = vmul.f32 %v1713, 1.442695
    %v1715 = vpow.pop %v1714
    %v1716 = vadd.f32 %v1715, 1.0
    %v1717 = vrcp.pop %v1716
    %v1718 = vmul.f32 1.0, %v1717
    %v1719 = vxor.u32 %v1710, 2147483648
    %v1720 = vmul.f32 %v1719, 1.442695
    %v1721 = vpow.pop %v1720
    %v1722 = vadd.f32 %v1721, 1.0
    %v1723 = vrcp.pop %v1722
    %v1724 = vmul.f32 1.0, %v1723
    %v1725 = vtanh.pop %v1711
    %v1726 = vxor.u32 %v1712, 2147483648
    %v1727 = vmul.f32 %v1726, 1.442695
    %v1728 = vpow.pop %v1727
    %v1729 = vadd.f32 %v1728, 1.0
    %v1730 = vrcp.pop %v1729
    %v1731 = vmul.f32 1.0, %v1730
    %v1732 = vmul.f32 %v1724, %v1422
    %v1733 = vmul.f32 %v1718, %v1725
    %v1734 = vadd.f32 %v1732, %v1733
    %v1735 = vtanh.pop %v1734
    %v1736 = vmul.f32 %v1731, %v1735
    %s1737 = scalar_lea.vmem [#allocation3], 24
    %1738 = vst [vmem:[%s1737] sm:$0xff] %v1736
    %s1739 = scalar_lea.vmem [#allocation4], 32
    %1740 = vst [vmem:[%s1739] sm:$0xff] %v1736
    %s1741 = scalar_lea.vmem [#allocation2], 128
    %v1742 = vld [vmem:[%s1741] sm:$0xff]
    %v1743 = vld [vmem:[%s1741 + $0x8] sm:$0xff]
    %v1744 = vld [vmem:[%s1741 + $0x10] sm:$0xff]
    %v1745 = vld [vmem:[%s1741 + $0x18] sm:$0xff]
    %v1746 = vpack.c.bf16 %v1736, %v1736
    %v1747 = vld [vmem:[#allocation10] sm:$0xff]
    %v1748 = vld [vmem:[#allocation10 + $0x8] sm:$0xff]
    %v1749 = vld [vmem:[#allocation10 + $0x10] sm:$0xff]
    %v1750 = vld [vmem:[#allocation10 + $0x18] sm:$0xff]
    %v1751 = vld [vmem:[#allocation10 + $0x20] sm:$0xff]
    %v1752 = vld [vmem:[#allocation10 + $0x28] sm:$0xff]
    %v1753 = vld [vmem:[#allocation10 + $0x30] sm:$0xff]
    %v1754 = vld [vmem:[#allocation10 + $0x38] sm:$0xff]
    %v1755 = vld [vmem:[#allocation10 + $0x40] sm:$0xff]
    %v1756 = vld [vmem:[#allocation10 + $0x48] sm:$0xff]
    %v1757 = vld [vmem:[#allocation10 + $0x50] sm:$0xff]
    %v1758 = vld [vmem:[#allocation10 + $0x58] sm:$0xff]
    %v1759 = vld [vmem:[#allocation10 + $0x60] sm:$0xff]
    %v1760 = vld [vmem:[#allocation10 + $0x68] sm:$0xff]
    %v1761 = vld [vmem:[#allocation10 + $0x70] sm:$0xff]
    %v1762 = vld [vmem:[#allocation10 + $0x78] sm:$0xff]
    %v1763 = vld [vmem:[#allocation10 + $0x80] sm:$0xff]
    %v1764 = vld [vmem:[#allocation10 + $0x88] sm:$0xff]
    %v1765 = vld [vmem:[#allocation10 + $0x90] sm:$0xff]
    %v1766 = vld [vmem:[#allocation10 + $0x98] sm:$0xff]
    %v1767 = vld [vmem:[#allocation10 + $0xa0] sm:$0xff]
    %v1768 = vld [vmem:[#allocation10 + $0xa8] sm:$0xff]
    %v1769 = vld [vmem:[#allocation10 + $0xb0] sm:$0xff]
    %v1770 = vld [vmem:[#allocation10 + $0xb8] sm:$0xff]
    %v1771 = vld [vmem:[#allocation10 + $0xc0] sm:$0xff]
    %v1772 = vld [vmem:[#allocation10 + $0xc8] sm:$0xff]
    %v1773 = vld [vmem:[#allocation10 + $0xd0] sm:$0xff]
    %v1774 = vld [vmem:[#allocation10 + $0xd8] sm:$0xff]
    %v1775 = vld [vmem:[#allocation10 + $0xe0] sm:$0xff]
    %v1776 = vld [vmem:[#allocation10 + $0xe8] sm:$0xff]
    %v1777 = vld [vmem:[#allocation10 + $0xf0] sm:$0xff]
    %v1778 = vld [vmem:[#allocation10 + $0xf8] sm:$0xff]
    %v1811 = vunpack.c.l.b16 %v1747
    %v1812 = vunpack.c.h.b16 %v1747
    %v1813 = vunpack.c.l.b16 %v1748
    %v1814 = vunpack.c.h.b16 %v1748
    %v1815 = vunpack.c.l.b16 %v1749
    %v1816 = vunpack.c.h.b16 %v1749
    %v1817 = vunpack.c.l.b16 %v1750
    %v1818 = vunpack.c.h.b16 %v1750
    %v1819 = vunpack.c.l.b16 %v1751
    %v1820 = vunpack.c.h.b16 %v1751
    %v1821 = vunpack.c.l.b16 %v1752
    %v1822 = vunpack.c.h.b16 %v1752
    %v1823 = vunpack.c.l.b16 %v1753
    %v1824 = vunpack.c.h.b16 %v1753
    %v1825 = vunpack.c.l.b16 %v1754
    %v1826 = vunpack.c.h.b16 %v1754
    %v1827 = vunpack.c.l.b16 %v1755
    %v1828 = vunpack.c.h.b16 %v1755
    %v1829 = vunpack.c.l.b16 %v1756
    %v1830 = vunpack.c.h.b16 %v1756
    %v1831 = vunpack.c.l.b16 %v1757
    %v1832 = vunpack.c.h.b16 %v1757
    %v1833 = vunpack.c.l.b16 %v1758
    %v1834 = vunpack.c.h.b16 %v1758
    %v1835 = vunpack.c.l.b16 %v1759
    %v1836 = vunpack.c.h.b16 %v1759
    %v1837 = vunpack.c.l.b16 %v1760
    %v1838 = vunpack.c.h.b16 %v1760
    %v1839 = vunpack.c.l.b16 %v1761
    %v1840 = vunpack.c.h.b16 %v1761
    %v1841 = vunpack.c.l.b16 %v1762
    %v1842 = vunpack.c.h.b16 %v1762
    %v1843 = vunpack.c.l.b16 %v1763
    %v1844 = vunpack.c.h.b16 %v1763
    %v1845 = vunpack.c.l.b16 %v1764
    %v1846 = vunpack.c.h.b16 %v1764
    %v1847 = vunpack.c.l.b16 %v1765
    %v1848 = vunpack.c.h.b16 %v1765
    %v1849 = vunpack.c.l.b16 %v1766
    %v1850 = vunpack.c.h.b16 %v1766
    %v1851 = vunpack.c.l.b16 %v1767
    %v1852 = vunpack.c.h.b16 %v1767
    %v1853 = vunpack.c.l.b16 %v1768
    %v1854 = vunpack.c.h.b16 %v1768
    %v1855 = vunpack.c.l.b16 %v1769
    %v1856 = vunpack.c.h.b16 %v1769
    %v1857 = vunpack.c.l.b16 %v1770
    %v1858 = vunpack.c.h.b16 %v1770
    %v1859 = vunpack.c.l.b16 %v1771
    %v1860 = vunpack.c.h.b16 %v1771
    %v1861 = vunpack.c.l.b16 %v1772
    %v1862 = vunpack.c.h.b16 %v1772
    %v1863 = vunpack.c.l.b16 %v1773
    %v1864 = vunpack.c.h.b16 %v1773
    %v1865 = vunpack.c.l.b16 %v1774
    %v1866 = vunpack.c.h.b16 %v1774
    %v1867 = vunpack.c.l.b16 %v1775
    %v1868 = vunpack.c.h.b16 %v1775
    %v1869 = vunpack.c.l.b16 %v1776
    %v1870 = vunpack.c.h.b16 %v1776
    %v1871 = vunpack.c.l.b16 %v1777
    %v1872 = vunpack.c.h.b16 %v1777
    %v1873 = vunpack.c.l.b16 %v1778
    %v1874 = vunpack.c.h.b16 %v1778
    %v1875 = vpack.c.b16 %v1815, %v1811
    %v1876 = vpack.c.b16 %v1816, %v1812
    %v1877 = vpack.c.b16 %v1817, %v1813
    %v1878 = vpack.c.b16 %v1818, %v1814
    %v1879 = vpack.c.b16 %v1823, %v1819
    %v1880 = vpack.c.b16 %v1824, %v1820
    %v1881 = vpack.c.b16 %v1825, %v1821
    %v1882 = vpack.c.b16 %v1826, %v1822
    %v1883 = vpack.c.b16 %v1831, %v1827
    %v1884 = vpack.c.b16 %v1832, %v1828
    %v1885 = vpack.c.b16 %v1833, %v1829
    %v1886 = vpack.c.b16 %v1834, %v1830
    %v1887 = vpack.c.b16 %v1839, %v1835
    %v1888 = vpack.c.b16 %v1840, %v1836
    %v1889 = vpack.c.b16 %v1841, %v1837
    %v1890 = vpack.c.b16 %v1842, %v1838
    %v1891 = vpack.c.b16 %v1847, %v1843
    %v1892 = vpack.c.b16 %v1848, %v1844
    %v1893 = vpack.c.b16 %v1849, %v1845
    %v1894 = vpack.c.b16 %v1850, %v1846
    %v1895 = vpack.c.b16 %v1855, %v1851
    %v1896 = vpack.c.b16 %v1856, %v1852
    %v1897 = vpack.c.b16 %v1857, %v1853
    %v1898 = vpack.c.b16 %v1858, %v1854
    %v1899 = vpack.c.b16 %v1863, %v1859
    %v1900 = vpack.c.b16 %v1864, %v1860
    %v1901 = vpack.c.b16 %v1865, %v1861
    %v1902 = vpack.c.b16 %v1866, %v1862
    %v1903 = vpack.c.b16 %v1871, %v1867
    %v1904 = vpack.c.b16 %v1872, %v1868
    %v1905 = vpack.c.b16 %v1873, %v1869
    %v1906 = vpack.c.b16 %v1874, %v1870
    %1939 = vmatprep.subr.bf16.mxu0 %v1876
    %1940 = vmatpush1.bf16.msra.mxu0 %v1875
    %1941 = vmatprep.subr.bf16.mxu0 %v1880
    %1942 = vmatpush1.bf16.msra.mxu0 %v1879
    %1943 = vmatprep.subr.bf16.mxu0 %v1884
    %1944 = vmatpush1.bf16.msra.mxu0 %v1883
    %1945 = vmatprep.subr.bf16.mxu0 %v1888
    %1946 = vmatpush1.bf16.msra.mxu0 %v1887
    %1947 = vmatprep.subr.bf16.mxu0 %v1892
    %1948 = vmatpush1.bf16.msra.mxu0 %v1891
    %1949 = vmatprep.subr.bf16.mxu0 %v1896
    %1950 = vmatpush1.bf16.msra.mxu0 %v1895
    %1951 = vmatprep.subr.bf16.mxu0 %v1900
    %1952 = vmatpush1.bf16.msra.mxu0 %v1899
    %1953 = vmatprep.subr.bf16.mxu0 %v1904
    %1954 = vmatpush1.bf16.msra.mxu0 %v1903
    %1955 = vmatprep.subr.bf16.mxu0 0
    %1956 = vmatpush1.bf16.msra.mxu0 0
    %1957 = vmatprep.subr.bf16.mxu0 0
    %1958 = vmatpush1.bf16.msra.mxu0 0
    %1959 = vmatprep.subr.bf16.mxu0 0
    %1960 = vmatpush1.bf16.msra.mxu0 0
    %1961 = vmatprep.subr.bf16.mxu0 0
    %1962 = vmatpush1.bf16.msra.mxu0 0
    %1963 = vmatprep.subr.bf16.mxu0 0
    %1964 = vmatpush1.bf16.msra.mxu0 0
    %1965 = vmatprep.subr.bf16.mxu0 0
    %1966 = vmatpush1.bf16.msra.mxu0 0
    %1967 = vmatprep.subr.bf16.mxu0 0
    %1968 = vmatpush1.bf16.msra.mxu0 0
    %1969 = vmatprep.subr.bf16.mxu0 0
    %1970 = vmatpush1.bf16.msra.mxu0 0
    %1971 = vmatprep.mubr.bf16.mxu0 0
    %1972 = vmatmul.mubr.bf16.gmra.mrb[0].mxu0 %v1746
    %v1973 = vpop.f32.mrb[0].mxu0
    %v1974 = vadd.f32 0.0, %v1973
    %v1975 = vpop.f32.mrb[0].mxu0
    %v1976 = vadd.f32 0.0, %v1975
    %v1977 = vpop.f32.mrb[0].mxu0
    %v1978 = vpop.f32.mrb[0].mxu0
    %1979 = vdwg.mxu0
    %1980 = vmatprep.subr.bf16.mxu0 %v1878
    %1981 = vmatpush1.bf16.msra.mxu0 %v1877
    %1982 = vmatprep.subr.bf16.mxu0 %v1882
    %1983 = vmatpush1.bf16.msra.mxu0 %v1881
    %1984 = vmatprep.subr.bf16.mxu0 %v1886
    %1985 = vmatpush1.bf16.msra.mxu0 %v1885
    %1986 = vmatprep.subr.bf16.mxu0 %v1890
    %1987 = vmatpush1.bf16.msra.mxu0 %v1889
    %1988 = vmatprep.subr.bf16.mxu0 %v1894
    %1989 = vmatpush1.bf16.msra.mxu0 %v1893
    %1990 = vmatprep.subr.bf16.mxu0 %v1898
    %1991 = vmatpush1.bf16.msra.mxu0 %v1897
    %1992 = vmatprep.subr.bf16.mxu0 %v1902
    %1993 = vmatpush1.bf16.msra.mxu0 %v1901
    %1994 = vmatprep.subr.bf16.mxu0 %v1906
    %1995 = vmatpush1.bf16.msra.mxu0 %v1905
    %1996 = vmatprep.subr.bf16.mxu0 0
    %1997 = vmatpush1.bf16.msra.mxu0 0
    %1998 = vmatprep.subr.bf16.mxu0 0
    %1999 = vmatpush1.bf16.msra.mxu0 0
    %2000 = vmatprep.subr.bf16.mxu0 0
    %2001 = vmatpush1.bf16.msra.mxu0 0
    %2002 = vmatprep.subr.bf16.mxu0 0
    %2003 = vmatpush1.bf16.msra.mxu0 0
    %2004 = vmatprep.subr.bf16.mxu0 0
    %2005 = vmatpush1.bf16.msra.mxu0 0
    %2006 = vmatprep.subr.bf16.mxu0 0
    %2007 = vmatpush1.bf16.msra.mxu0 0
    %2008 = vmatprep.subr.bf16.mxu0 0
    %2009 = vmatpush1.bf16.msra.mxu0 0
    %2010 = vmatprep.subr.bf16.mxu0 0
    %2011 = vmatpush1.bf16.msra.mxu0 0
    %2012 = vmatprep.mubr.bf16.mxu0 0
    %2013 = vmatmul.mubr.bf16.gmra.mrb[0].mxu0 %v1746
    %v2014 = vpop.f32.mrb[0].mxu0
    %v2015 = vadd.f32 0.0, %v2014
    %v2016 = vpop.f32.mrb[0].mxu0
    %v2017 = vadd.f32 0.0, %v2016
    %v2018 = vpop.f32.mrb[0].mxu0
    %v2019 = vpop.f32.mrb[0].mxu0
    %2020 = vdwg.mxu0
    %v2021 = vadd.f32 %v1742, %v1974
    %v2022 = vadd.f32 %v1743, %v1976
    %v2023 = vadd.f32 %v1744, %v2015
    %v2024 = vadd.f32 %v1745, %v2017
    %v2025 = vxor.u32 %v2021, 2147483648
    %v2026 = vmul.f32 %v2025, 1.442695
    %v2027 = vpow.pop %v2026
    %v2028 = vadd.f32 %v2027, 1.0
    %v2029 = vrcp.pop %v2028
    %v2030 = vmul.f32 1.0, %v2029
    %v2031 = vxor.u32 %v2022, 2147483648
    %v2032 = vmul.f32 %v2031, 1.442695
    %v2033 = vpow.pop %v2032
    %v2034 = vadd.f32 %v2033, 1.0
    %v2035 = vrcp.pop %v2034
    %v2036 = vmul.f32 1.0, %v2035
    %v2037 = vtanh.pop %v2023
    %v2038 = vxor.u32 %v2024, 2147483648
    %v2039 = vmul.f32 %v2038, 1.442695
    %v2040 = vpow.pop %v2039
    %v2041 = vadd.f32 %v2040, 1.0
    %v2042 = vrcp.pop %v2041
    %v2043 = vmul.f32 1.0, %v2042
    %v2044 = vmul.f32 %v2036, %v1734
    %v2045 = vmul.f32 %v2030, %v2037
    %v2046 = vadd.f32 %v2044, %v2045
    %v2047 = vtanh.pop %v2046
    %v2048 = vmul.f32 %v2043, %v2047
    %s2049 = scalar_lea.vmem [#allocation3], 32
    %2050 = vst [vmem:[%s2049] sm:$0xff] %v2048
    %s2051 = scalar_lea.vmem [#allocation4], 24
    %2052 = vst [vmem:[%s2051] sm:$0xff] %v2048
    %s2053 = scalar_lea.vmem [#allocation2], 160
    %v2054 = vld [vmem:[%s2053] sm:$0xff]
    %v2055 = vld [vmem:[%s2053 + $0x8] sm:$0xff]
    %v2056 = vld [vmem:[%s2053 + $0x10] sm:$0xff]
    %v2057 = vld [vmem:[%s2053 + $0x18] sm:$0xff]
    %v2058 = vpack.c.bf16 %v2048, %v2048
    %v2059 = vld [vmem:[#allocation10] sm:$0xff]
    %v2060 = vld [vmem:[#allocation10 + $0x8] sm:$0xff]
    %v2061 = vld [vmem:[#allocation10 + $0x10] sm:$0xff]
    %v2062 = vld [vmem:[#allocation10 + $0x18] sm:$0xff]
    %v2063 = vld [vmem:[#allocation10 + $0x20] sm:$0xff]
    %v2064 = vld [vmem:[#allocation10 + $0x28] sm:$0xff]
    %v2065 = vld [vmem:[#allocation10 + $0x30] sm:$0xff]
    %v2066 = vld [vmem:[#allocation10 + $0x38] sm:$0xff]
    %v2067 = vld [vmem:[#allocation10 + $0x40] sm:$0xff]
    %v2068 = vld [vmem:[#allocation10 + $0x48] sm:$0xff]
    %v2069 = vld [vmem:[#allocation10 + $0x50] sm:$0xff]
    %v2070 = vld [vmem:[#allocation10 + $0x58] sm:$0xff]
    %v2071 = vld [vmem:[#allocation10 + $0x60] sm:$0xff]
    %v2072 = vld [vmem:[#allocation10 + $0x68] sm:$0xff]
    %v2073 = vld [vmem:[#allocation10 + $0x70] sm:$0xff]
    %v2074 = vld [vmem:[#allocation10 + $0x78] sm:$0xff]
    %v2075 = vld [vmem:[#allocation10 + $0x80] sm:$0xff]
    %v2076 = vld [vmem:[#allocation10 + $0x88] sm:$0xff]
    %v2077 = vld [vmem:[#allocation10 + $0x90] sm:$0xff]
    %v2078 = vld [vmem:[#allocation10 + $0x98] sm:$0xff]
    %v2079 = vld [vmem:[#allocation10 + $0xa0] sm:$0xff]
    %v2080 = vld [vmem:[#allocation10 + $0xa8] sm:$0xff]
    %v2081 = vld [vmem:[#allocation10 + $0xb0] sm:$0xff]
    %v2082 = vld [vmem:[#allocation10 + $0xb8] sm:$0xff]
    %v2083 = vld [vmem:[#allocation10 + $0xc0] sm:$0xff]
    %v2084 = vld [vmem:[#allocation10 + $0xc8] sm:$0xff]
    %v2085 = vld [vmem:[#allocation10 + $0xd0] sm:$0xff]
    %v2086 = vld [vmem:[#allocation10 + $0xd8] sm:$0xff]
    %v2087 = vld [vmem:[#allocation10 + $0xe0] sm:$0xff]
    %v2088 = vld [vmem:[#allocation10 + $0xe8] sm:$0xff]
    %v2089 = vld [vmem:[#allocation10 + $0xf0] sm:$0xff]
    %v2090 = vld [vmem:[#allocation10 + $0xf8] sm:$0xff]
    %v2123 = vunpack.c.l.b16 %v2059
    %v2124 = vunpack.c.h.b16 %v2059
    %v2125 = vunpack.c.l.b16 %v2060
    %v2126 = vunpack.c.h.b16 %v2060
    %v2127 = vunpack.c.l.b16 %v2061
    %v2128 = vunpack.c.h.b16 %v2061
    %v2129 = vunpack.c.l.b16 %v2062
    %v2130 = vunpack.c.h.b16 %v2062
    %v2131 = vunpack.c.l.b16 %v2063
    %v2132 = vunpack.c.h.b16 %v2063
    %v2133 = vunpack.c.l.b16 %v2064
    %v2134 = vunpack.c.h.b16 %v2064
    %v2135 = vunpack.c.l.b16 %v2065
    %v2136 = vunpack.c.h.b16 %v2065
    %v2137 = vunpack.c.l.b16 %v2066
    %v2138 = vunpack.c.h.b16 %v2066
    %v2139 = vunpack.c.l.b16 %v2067
    %v2140 = vunpack.c.h.b16 %v2067
    %v2141 = vunpack.c.l.b16 %v2068
    %v2142 = vunpack.c.h.b16 %v2068
    %v2143 = vunpack.c.l.b16 %v2069
    %v2144 = vunpack.c.h.b16 %v2069
    %v2145 = vunpack.c.l.b16 %v2070
    %v2146 = vunpack.c.h.b16 %v2070
    %v2147 = vunpack.c.l.b16 %v2071
    %v2148 = vunpack.c.h.b16 %v2071
    %v2149 = vunpack.c.l.b16 %v2072
    %v2150 = vunpack.c.h.b16 %v2072
    %v2151 = vunpack.c.l.b16 %v2073
    %v2152 = vunpack.c.h.b16 %v2073
    %v2153 = vunpack.c.l.b16 %v2074
    %v2154 = vunpack.c.h.b16 %v2074
    %v2155 = vunpack.c.l.b16 %v2075
    %v2156 = vunpack.c.h.b16 %v2075
    %v2157 = vunpack.c.l.b16 %v2076
    %v2158 = vunpack.c.h.b16 %v2076
    %v2159 = vunpack.c.l.b16 %v2077
    %v2160 = vunpack.c.h.b16 %v2077
    %v2161 = vunpack.c.l.b16 %v2078
    %v2162 = vunpack.c.h.b16 %v2078
    %v2163 = vunpack.c.l.b16 %v2079
    %v2164 = vunpack.c.h.b16 %v2079
    %v2165 = vunpack.c.l.b16 %v2080
    %v2166 = vunpack.c.h.b16 %v2080
    %v2167 = vunpack.c.l.b16 %v2081
    %v2168 = vunpack.c.h.b16 %v2081
    %v2169 = vunpack.c.l.b16 %v2082
    %v2170 = vunpack.c.h.b16 %v2082
    %v2171 = vunpack.c.l.b16 %v2083
    %v2172 = vunpack.c.h.b16 %v2083
    %v2173 = vunpack.c.l.b16 %v2084
    %v2174 = vunpack.c.h.b16 %v2084
    %v2175 = vunpack.c.l.b16 %v2085
    %v2176 = vunpack.c.h.b16 %v2085
    %v2177 = vunpack.c.l.b16 %v2086
    %v2178 = vunpack.c.h.b16 %v2086
    %v2179 = vunpack.c.l.b16 %v2087
    %v2180 = vunpack.c.h.b16 %v2087
    %v2181 = vunpack.c.l.b16 %v2088
    %v2182 = vunpack.c.h.b16 %v2088
    %v2183 = vunpack.c.l.b16 %v2089
    %v2184 = vunpack.c.h.b16 %v2089
    %v2185 = vunpack.c.l.b16 %v2090
    %v2186 = vunpack.c.h.b16 %v2090
    %v2187 = vpack.c.b16 %v2127, %v2123
    %v2188 = vpack.c.b16 %v2128, %v2124
    %v2189 = vpack.c.b16 %v2129, %v2125
    %v2190 = vpack.c.b16 %v2130, %v2126
    %v2191 = vpack.c.b16 %v2135, %v2131
    %v2192 = vpack.c.b16 %v2136, %v2132
    %v2193 = vpack.c.b16 %v2137, %v2133
    %v2194 = vpack.c.b16 %v2138, %v2134
    %v2195 = vpack.c.b16 %v2143, %v2139
    %v2196 = vpack.c.b16 %v2144, %v2140
    %v2197 = vpack.c.b16 %v2145, %v2141
    %v2198 = vpack.c.b16 %v2146, %v2142
    %v2199 = vpack.c.b16 %v2151, %v2147
    %v2200 = vpack.c.b16 %v2152, %v2148
    %v2201 = vpack.c.b16 %v2153, %v2149
    %v2202 = vpack.c.b16 %v2154, %v2150
    %v2203 = vpack.c.b16 %v2159, %v2155
    %v2204 = vpack.c.b16 %v2160, %v2156
    %v2205 = vpack.c.b16 %v2161, %v2157
    %v2206 = vpack.c.b16 %v2162, %v2158
    %v2207 = vpack.c.b16 %v2167, %v2163
    %v2208 = vpack.c.b16 %v2168, %v2164
    %v2209 = vpack.c.b16 %v2169, %v2165
    %v2210 = vpack.c.b16 %v2170, %v2166
    %v2211 = vpack.c.b16 %v2175, %v2171
    %v2212 = vpack.c.b16 %v2176, %v2172
    %v2213 = vpack.c.b16 %v2177, %v2173
    %v2214 = vpack.c.b16 %v2178, %v2174
    %v2215 = vpack.c.b16 %v2183, %v2179
    %v2216 = vpack.c.b16 %v2184, %v2180
    %v2217 = vpack.c.b16 %v2185, %v2181
    %v2218 = vpack.c.b16 %v2186, %v2182
    %2251 = vmatprep.subr.bf16.mxu0 %v2188
    %2252 = vmatpush1.bf16.msra.mxu0 %v2187
    %2253 = vmatprep.subr.bf16.mxu0 %v2192
    %2254 = vmatpush1.bf16.msra.mxu0 %v2191
    %2255 = vmatprep.subr.bf16.mxu0 %v2196
    %2256 = vmatpush1.bf16.msra.mxu0 %v2195
    %2257 = vmatprep.subr.bf16.mxu0 %v2200
    %2258 = vmatpush1.bf16.msra.mxu0 %v2199
    %2259 = vmatprep.subr.bf16.mxu0 %v2204
    %2260 = vmatpush1.bf16.msra.mxu0 %v2203
    %2261 = vmatprep.subr.bf16.mxu0 %v2208
    %2262 = vmatpush1.bf16.msra.mxu0 %v2207
    %2263 = vmatprep.subr.bf16.mxu0 %v2212
    %2264 = vmatpush1.bf16.msra.mxu0 %v2211
    %2265 = vmatprep.subr.bf16.mxu0 %v2216
    %2266 = vmatpush1.bf16.msra.mxu0 %v2215
    %2267 = vmatprep.subr.bf16.mxu0 0
    %2268 = vmatpush1.bf16.msra.mxu0 0
    %2269 = vmatprep.subr.bf16.mxu0 0
    %2270 = vmatpush1.bf16.msra.mxu0 0
    %2271 = vmatprep.subr.bf16.mxu0 0
    %2272 = vmatpush1.bf16.msra.mxu0 0
    %2273 = vmatprep.subr.bf16.mxu0 0
    %2274 = vmatpush1.bf16.msra.mxu0 0
    %2275 = vmatprep.subr.bf16.mxu0 0
    %2276 = vmatpush1.bf16.msra.mxu0 0
    %2277 = vmatprep.subr.bf16.mxu0 0
    %2278 = vmatpush1.bf16.msra.mxu0 0
    %2279 = vmatprep.subr.bf16.mxu0 0
    %2280 = vmatpush1.bf16.msra.mxu0 0
    %2281 = vmatprep.subr.bf16.mxu0 0
    %2282 = vmatpush1.bf16.msra.mxu0 0
    %2283 = vmatprep.mubr.bf16.mxu0 0
    %2284 = vmatmul.mubr.bf16.gmra.mrb[0].mxu0 %v2058
    %v2285 = vpop.f32.mrb[0].mxu0
    %v2286 = vadd.f32 0.0, %v2285
    %v2287 = vpop.f32.mrb[0].mxu0
    %v2288 = vadd.f32 0.0, %v2287
    %v2289 = vpop.f32.mrb[0].mxu0
    %v2290 = vpop.f32.mrb[0].mxu0
    %2291 = vdwg.mxu0
    %2292 = vmatprep.subr.bf16.mxu0 %v2190
    %2293 = vmatpush1.bf16.msra.mxu0 %v2189
    %2294 = vmatprep.subr.bf16.mxu0 %v2194
    %2295 = vmatpush1.bf16.msra.mxu0 %v2193
    %2296 = vmatprep.subr.bf16.mxu0 %v2198
    %2297 = vmatpush1.bf16.msra.mxu0 %v2197
    %2298 = vmatprep.subr.bf16.mxu0 %v2202
    %2299 = vmatpush1.bf16.msra.mxu0 %v2201
    %2300 = vmatprep.subr.bf16.mxu0 %v2206
    %2301 = vmatpush1.bf16.msra.mxu0 %v2205
    %2302 = vmatprep.subr.bf16.mxu0 %v2210
    %2303 = vmatpush1.bf16.msra.mxu0 %v2209
    %2304 = vmatprep.subr.bf16.mxu0 %v2214
    %2305 = vmatpush1.bf16.msra.mxu0 %v2213
    %2306 = vmatprep.subr.bf16.mxu0 %v2218
    %2307 = vmatpush1.bf16.msra.mxu0 %v2217
    %2308 = vmatprep.subr.bf16.mxu0 0
    %2309 = vmatpush1.bf16.msra.mxu0 0
    %2310 = vmatprep.subr.bf16.mxu0 0
    %2311 = vmatpush1.bf16.msra.mxu0 0
    %2312 = vmatprep.subr.bf16.mxu0 0
    %2313 = vmatpush1.bf16.msra.mxu0 0
    %2314 = vmatprep.subr.bf16.mxu0 0
    %2315 = vmatpush1.bf16.msra.mxu0 0
    %2316 = vmatprep.subr.bf16.mxu0 0
    %2317 = vmatpush1.bf16.msra.mxu0 0
    %2318 = vmatprep.subr.bf16.mxu0 0
    %2319 = vmatpush1.bf16.msra.mxu0 0
    %2320 = vmatprep.subr.bf16.mxu0 0
    %2321 = vmatpush1.bf16.msra.mxu0 0
    %2322 = vmatprep.subr.bf16.mxu0 0
    %2323 = vmatpush1.bf16.msra.mxu0 0
    %2324 = vmatprep.mubr.bf16.mxu0 0
    %2325 = vmatmul.mubr.bf16.gmra.mrb[0].mxu0 %v2058
    %v2326 = vpop.f32.mrb[0].mxu0
    %v2327 = vadd.f32 0.0, %v2326
    %v2328 = vpop.f32.mrb[0].mxu0
    %v2329 = vadd.f32 0.0, %v2328
    %v2330 = vpop.f32.mrb[0].mxu0
    %v2331 = vpop.f32.mrb[0].mxu0
    %2332 = vdwg.mxu0
    %v2333 = vadd.f32 %v2054, %v2286
    %v2334 = vadd.f32 %v2055, %v2288
    %v2335 = vadd.f32 %v2056, %v2327
    %v2336 = vadd.f32 %v2057, %v2329
    %v2337 = vxor.u32 %v2333, 2147483648
    %v2338 = vmul.f32 %v2337, 1.442695
    %v2339 = vpow.pop %v2338
    %v2340 = vadd.f32 %v2339, 1.0
    %v2341 = vrcp.pop %v2340
    %v2342 = vmul.f32 1.0, %v2341
    %v2343 = vxor.u32 %v2334, 2147483648
    %v2344 = vmul.f32 %v2343, 1.442695
    %v2345 = vpow.pop %v2344
    %v2346 = vadd.f32 %v2345, 1.0
    %v2347 = vrcp.pop %v2346
    %v2348 = vmul.f32 1.0, %v2347
    %v2349 = vtanh.pop %v2335
    %v2350 = vxor.u32 %v2336, 2147483648
    %v2351 = vmul.f32 %v2350, 1.442695
    %v2352 = vpow.pop %v2351
    %v2353 = vadd.f32 %v2352, 1.0
    %v2354 = vrcp.pop %v2353
    %v2355 = vmul.f32 1.0, %v2354
    %v2356 = vmul.f32 %v2348, %v2046
    %v2357 = vmul.f32 %v2342, %v2349
    %v2358 = vadd.f32 %v2356, %v2357
    %v2359 = vtanh.pop %v2358
    %v2360 = vmul.f32 %v2355, %v2359
    %s2361 = scalar_lea.vmem [#allocation3], 40
    %2362 = vst [vmem:[%s2361] sm:$0xff] %v2360
    %s2363 = scalar_lea.vmem [#allocation4], 16
    %2364 = vst [vmem:[%s2363] sm:$0xff] %v2360
    %s2365 = scalar_lea.vmem [#allocation2], 192
    %v2366 = vld [vmem:[%s2365] sm:$0xff]
    %v2367 = vld [vmem:[%s2365 + $0x8] sm:$0xff]
    %v2368 = vld [vmem:[%s2365 + $0x10] sm:$0xff]
    %v2369 = vld [vmem:[%s2365 + $0x18] sm:$0xff]
    %v2370 = vpack.c.bf16 %v2360, %v2360
    %v2371 = vld [vmem:[#allocation10] sm:$0xff]
    %v2372 = vld [vmem:[#allocation10 + $0x8] sm:$0xff]
    %v2373 = vld [vmem:[#allocation10 + $0x10] sm:$0xff]
    %v2374 = vld [vmem:[#allocation10 + $0x18] sm:$0xff]
    %v2375 = vld [vmem:[#allocation10 + $0x20] sm:$0xff]
    %v2376 = vld [vmem:[#allocation10 + $0x28] sm:$0xff]
    %v2377 = vld [vmem:[#allocation10 + $0x30] sm:$0xff]
    %v2378 = vld [vmem:[#allocation10 + $0x38] sm:$0xff]
    %v2379 = vld [vmem:[#allocation10 + $0x40] sm:$0xff]
    %v2380 = vld [vmem:[#allocation10 + $0x48] sm:$0xff]
    %v2381 = vld [vmem:[#allocation10 + $0x50] sm:$0xff]
    %v2382 = vld [vmem:[#allocation10 + $0x58] sm:$0xff]
    %v2383 = vld [vmem:[#allocation10 + $0x60] sm:$0xff]
    %v2384 = vld [vmem:[#allocation10 + $0x68] sm:$0xff]
    %v2385 = vld [vmem:[#allocation10 + $0x70] sm:$0xff]
    %v2386 = vld [vmem:[#allocation10 + $0x78] sm:$0xff]
    %v2387 = vld [vmem:[#allocation10 + $0x80] sm:$0xff]
    %v2388 = vld [vmem:[#allocation10 + $0x88] sm:$0xff]
    %v2389 = vld [vmem:[#allocation10 + $0x90] sm:$0xff]
    %v2390 = vld [vmem:[#allocation10 + $0x98] sm:$0xff]
    %v2391 = vld [vmem:[#allocation10 + $0xa0] sm:$0xff]
    %v2392 = vld [vmem:[#allocation10 + $0xa8] sm:$0xff]
    %v2393 = vld [vmem:[#allocation10 + $0xb0] sm:$0xff]
    %v2394 = vld [vmem:[#allocation10 + $0xb8] sm:$0xff]
    %v2395 = vld [vmem:[#allocation10 + $0xc0] sm:$0xff]
    %v2396 = vld [vmem:[#allocation10 + $0xc8] sm:$0xff]
    %v2397 = vld [vmem:[#allocation10 + $0xd0] sm:$0xff]
    %v2398 = vld [vmem:[#allocation10 + $0xd8] sm:$0xff]
    %v2399 = vld [vmem:[#allocation10 + $0xe0] sm:$0xff]
    %v2400 = vld [vmem:[#allocation10 + $0xe8] sm:$0xff]
    %v2401 = vld [vmem:[#allocation10 + $0xf0] sm:$0xff]
    %v2402 = vld [vmem:[#allocation10 + $0xf8] sm:$0xff]
    %v2435 = vunpack.c.l.b16 %v2371
    %v2436 = vunpack.c.h.b16 %v2371
    %v2437 = vunpack.c.l.b16 %v2372
    %v2438 = vunpack.c.h.b16 %v2372
    %v2439 = vunpack.c.l.b16 %v2373
    %v2440 = vunpack.c.h.b16 %v2373
    %v2441 = vunpack.c.l.b16 %v2374
    %v2442 = vunpack.c.h.b16 %v2374
    %v2443 = vunpack.c.l.b16 %v2375
    %v2444 = vunpack.c.h.b16 %v2375
    %v2445 = vunpack.c.l.b16 %v2376
    %v2446 = vunpack.c.h.b16 %v2376
    %v2447 = vunpack.c.l.b16 %v2377
    %v2448 = vunpack.c.h.b16 %v2377
    %v2449 = vunpack.c.l.b16 %v2378
    %v2450 = vunpack.c.h.b16 %v2378
    %v2451 = vunpack.c.l.b16 %v2379
    %v2452 = vunpack.c.h.b16 %v2379
    %v2453 = vunpack.c.l.b16 %v2380
    %v2454 = vunpack.c.h.b16 %v2380
    %v2455 = vunpack.c.l.b16 %v2381
    %v2456 = vunpack.c.h.b16 %v2381
    %v2457 = vunpack.c.l.b16 %v2382
    %v2458 = vunpack.c.h.b16 %v2382
    %v2459 = vunpack.c.l.b16 %v2383
    %v2460 = vunpack.c.h.b16 %v2383
    %v2461 = vunpack.c.l.b16 %v2384
    %v2462 = vunpack.c.h.b16 %v2384
    %v2463 = vunpack.c.l.b16 %v2385
    %v2464 = vunpack.c.h.b16 %v2385
    %v2465 = vunpack.c.l.b16 %v2386
    %v2466 = vunpack.c.h.b16 %v2386
    %v2467 = vunpack.c.l.b16 %v2387
    %v2468 = vunpack.c.h.b16 %v2387
    %v2469 = vunpack.c.l.b16 %v2388
    %v2470 = vunpack.c.h.b16 %v2388
    %v2471 = vunpack.c.l.b16 %v2389
    %v2472 = vunpack.c.h.b16 %v2389
    %v2473 = vunpack.c.l.b16 %v2390
    %v2474 = vunpack.c.h.b16 %v2390
    %v2475 = vunpack.c.l.b16 %v2391
    %v2476 = vunpack.c.h.b16 %v2391
    %v2477 = vunpack.c.l.b16 %v2392
    %v2478 = vunpack.c.h.b16 %v2392
    %v2479 = vunpack.c.l.b16 %v2393
    %v2480 = vunpack.c.h.b16 %v2393
    %v2481 = vunpack.c.l.b16 %v2394
    %v2482 = vunpack.c.h.b16 %v2394
    %v2483 = vunpack.c.l.b16 %v2395
    %v2484 = vunpack.c.h.b16 %v2395
    %v2485 = vunpack.c.l.b16 %v2396
    %v2486 = vunpack.c.h.b16 %v2396
    %v2487 = vunpack.c.l.b16 %v2397
    %v2488 = vunpack.c.h.b16 %v2397
    %v2489 = vunpack.c.l.b16 %v2398
    %v2490 = vunpack.c.h.b16 %v2398
    %v2491 = vunpack.c.l.b16 %v2399
    %v2492 = vunpack.c.h.b16 %v2399
    %v2493 = vunpack.c.l.b16 %v2400
    %v2494 = vunpack.c.h.b16 %v2400
    %v2495 = vunpack.c.l.b16 %v2401
    %v2496 = vunpack.c.h.b16 %v2401
    %v2497 = vunpack.c.l.b16 %v2402
    %v2498 = vunpack.c.h.b16 %v2402
    %v2499 = vpack.c.b16 %v2439, %v2435
    %v2500 = vpack.c.b16 %v2440, %v2436
    %v2501 = vpack.c.b16 %v2441, %v2437
    %v2502 = vpack.c.b16 %v2442, %v2438
    %v2503 = vpack.c.b16 %v2447, %v2443
    %v2504 = vpack.c.b16 %v2448, %v2444
    %v2505 = vpack.c.b16 %v2449, %v2445
    %v2506 = vpack.c.b16 %v2450, %v2446
    %v2507 = vpack.c.b16 %v2455, %v2451
    %v2508 = vpack.c.b16 %v2456, %v2452
    %v2509 = vpack.c.b16 %v2457, %v2453
    %v2510 = vpack.c.b16 %v2458, %v2454
    %v2511 = vpack.c.b16 %v2463, %v2459
    %v2512 = vpack.c.b16 %v2464, %v2460
    %v2513 = vpack.c.b16 %v2465, %v2461
    %v2514 = vpack.c.b16 %v2466, %v2462
    %v2515 = vpack.c.b16 %v2471, %v2467
    %v2516 = vpack.c.b16 %v2472, %v2468
    %v2517 = vpack.c.b16 %v2473, %v2469
    %v2518 = vpack.c.b16 %v2474, %v2470
    %v2519 = vpack.c.b16 %v2479, %v2475
    %v2520 = vpack.c.b16 %v2480, %v2476
    %v2521 = vpack.c.b16 %v2481, %v2477
    %v2522 = vpack.c.b16 %v2482, %v2478
    %v2523 = vpack.c.b16 %v2487, %v2483
    %v2524 = vpack.c.b16 %v2488, %v2484
    %v2525 = vpack.c.b16 %v2489, %v2485
    %v2526 = vpack.c.b16 %v2490, %v2486
    %v2527 = vpack.c.b16 %v2495, %v2491
    %v2528 = vpack.c.b16 %v2496, %v2492
    %v2529 = vpack.c.b16 %v2497, %v2493
    %v2530 = vpack.c.b16 %v2498, %v2494
    %2563 = vmatprep.subr.bf16.mxu0 %v2500
    %2564 = vmatpush1.bf16.msra.mxu0 %v2499
    %2565 = vmatprep.subr.bf16.mxu0 %v2504
    %2566 = vmatpush1.bf16.msra.mxu0 %v2503
    %2567 = vmatprep.subr.bf16.mxu0 %v2508
    %2568 = vmatpush1.bf16.msra.mxu0 %v2507
    %2569 = vmatprep.subr.bf16.mxu0 %v2512
    %2570 = vmatpush1.bf16.msra.mxu0 %v2511
    %2571 = vmatprep.subr.bf16.mxu0 %v2516
    %2572 = vmatpush1.bf16.msra.mxu0 %v2515
    %2573 = vmatprep.subr.bf16.mxu0 %v2520
    %2574 = vmatpush1.bf16.msra.mxu0 %v2519
    %2575 = vmatprep.subr.bf16.mxu0 %v2524
    %2576 = vmatpush1.bf16.msra.mxu0 %v2523
    %2577 = vmatprep.subr.bf16.mxu0 %v2528
    %2578 = vmatpush1.bf16.msra.mxu0 %v2527
    %2579 = vmatprep.subr.bf16.mxu0 0
    %2580 = vmatpush1.bf16.msra.mxu0 0
    %2581 = vmatprep.subr.bf16.mxu0 0
    %2582 = vmatpush1.bf16.msra.mxu0 0
    %2583 = vmatprep.subr.bf16.mxu0 0
    %2584 = vmatpush1.bf16.msra.mxu0 0
    %2585 = vmatprep.subr.bf16.mxu0 0
    %2586 = vmatpush1.bf16.msra.mxu0 0
    %2587 = vmatprep.subr.bf16.mxu0 0
    %2588 = vmatpush1.bf16.msra.mxu0 0
    %2589 = vmatprep.subr.bf16.mxu0 0
    %2590 = vmatpush1.bf16.msra.mxu0 0
    %2591 = vmatprep.subr.bf16.mxu0 0
    %2592 = vmatpush1.bf16.msra.mxu0 0
    %2593 = vmatprep.subr.bf16.mxu0 0
    %2594 = vmatpush1.bf16.msra.mxu0 0
    %2595 = vmatprep.mubr.bf16.mxu0 0
    %2596 = vmatmul.mubr.bf16.gmra.mrb[0].mxu0 %v2370
    %v2597 = vpop.f32.mrb[0].mxu0
    %v2598 = vadd.f32 0.0, %v2597
    %v2599 = vpop.f32.mrb[0].mxu0
    %v2600 = vadd.f32 0.0, %v2599
    %v2601 = vpop.f32.mrb[0].mxu0
    %v2602 = vpop.f32.mrb[0].mxu0
    %2603 = vdwg.mxu0
    %2604 = vmatprep.subr.bf16.mxu0 %v2502
    %2605 = vmatpush1.bf16.msra.mxu0 %v2501
    %2606 = vmatprep.subr.bf16.mxu0 %v2506
    %2607 = vmatpush1.bf16.msra.mxu0 %v2505
    %2608 = vmatprep.subr.bf16.mxu0 %v2510
    %2609 = vmatpush1.bf16.msra.mxu0 %v2509
    %2610 = vmatprep.subr.bf16.mxu0 %v2514
    %2611 = vmatpush1.bf16.msra.mxu0 %v2513
    %2612 = vmatprep.subr.bf16.mxu0 %v2518
    %2613 = vmatpush1.bf16.msra.mxu0 %v2517
    %2614 = vmatprep.subr.bf16.mxu0 %v2522
    %2615 = vmatpush1.bf16.msra.mxu0 %v2521
    %2616 = vmatprep.subr.bf16.mxu0 %v2526
    %2617 = vmatpush1.bf16.msra.mxu0 %v2525
    %2618 = vmatprep.subr.bf16.mxu0 %v2530
    %2619 = vmatpush1.bf16.msra.mxu0 %v2529
    %2620 = vmatprep.subr.bf16.mxu0 0
    %2621 = vmatpush1.bf16.msra.mxu0 0
    %2622 = vmatprep.subr.bf16.mxu0 0
    %2623 = vmatpush1.bf16.msra.mxu0 0
    %2624 = vmatprep.subr.bf16.mxu0 0
    %2625 = vmatpush1.bf16.msra.mxu0 0
    %2626 = vmatprep.subr.bf16.mxu0 0
    %2627 = vmatpush1.bf16.msra.mxu0 0
    %2628 = vmatprep.subr.bf16.mxu0 0
    %2629 = vmatpush1.bf16.msra.mxu0 0
    %2630 = vmatprep.subr.bf16.mxu0 0
    %2631 = vmatpush1.bf16.msra.mxu0 0
    %2632 = vmatprep.subr.bf16.mxu0 0
    %2633 = vmatpush1.bf16.msra.mxu0 0
    %2634 = vmatprep.subr.bf16.mxu0 0
    %2635 = vmatpush1.bf16.msra.mxu0 0
    %2636 = vmatprep.mubr.bf16.mxu0 0
    %2637 = vmatmul.mubr.bf16.gmra.mrb[0].mxu0 %v2370
    %v2638 = vpop.f32.mrb[0].mxu0
    %v2639 = vadd.f32 0.0, %v2638
    %v2640 = vpop.f32.mrb[0].mxu0
    %v2641 = vadd.f32 0.0, %v2640
    %v2642 = vpop.f32.mrb[0].mxu0
    %v2643 = vpop.f32.mrb[0].mxu0
    %2644 = vdwg.mxu0
    %v2645 = vadd.f32 %v2366, %v2598
    %v2646 = vadd.f32 %v2367, %v2600
    %v2647 = vadd.f32 %v2368, %v2639
    %v2648 = vadd.f32 %v2369, %v2641
    %v2649 = vxor.u32 %v2645, 2147483648
    %v2650 = vmul.f32 %v2649, 1.442695
    %v2651 = vpow.pop %v2650
    %v2652 = vadd.f32 %v2651, 1.0
    %v2653 = vrcp.pop %v2652
    %v2654 = vmul.f32 1.0, %v2653
    %v2655 = vxor.u32 %v2646, 2147483648
    %v2656 = vmul.f32 %v2655, 1.442695
    %v2657 = vpow.pop %v2656
    %v2658 = vadd.f32 %v2657, 1.0
    %v2659 = vrcp.pop %v2658
    %v2660 = vmul.f32 1.0, %v2659
    %v2661 = vtanh.pop %v2647
    %v2662 = vxor.u32 %v2648, 2147483648
    %v2663 = vmul.f32 %v2662, 1.442695
    %v2664 = vpow.pop %v2663
    %v2665 = vadd.f32 %v2664, 1.0
    %v2666 = vrcp.pop %v2665
    %v2667 = vmul.f32 1.0, %v2666
    %v2668 = vmul.f32 %v2660, %v2358
    %v2669 = vmul.f32 %v2654, %v2661
    %v2670 = vadd.f32 %v2668, %v2669
    %v2671 = vtanh.pop %v2670
    %v2672 = vmul.f32 %v2667, %v2671
    %s2673 = scalar_lea.vmem [#allocation3], 48
    %2674 = vst [vmem:[%s2673] sm:$0xff] %v2672
    %s2675 = scalar_lea.vmem [#allocation4], 8
    %2676 = vst [vmem:[%s2675] sm:$0xff] %v2672
    %s2677 = scalar_lea.vmem [#allocation2], 224
    %v2678 = vld [vmem:[%s2677] sm:$0xff]
    %v2679 = vld [vmem:[%s2677 + $0x8] sm:$0xff]
    %v2680 = vld [vmem:[%s2677 + $0x10] sm:$0xff]
    %v2681 = vld [vmem:[%s2677 + $0x18] sm:$0xff]
    %v2682 = vpack.c.bf16 %v2672, %v2672
    %v2683 = vld [vmem:[#allocation10] sm:$0xff]
    %v2684 = vld [vmem:[#allocation10 + $0x8] sm:$0xff]
    %v2685 = vld [vmem:[#allocation10 + $0x10] sm:$0xff]
    %v2686 = vld [vmem:[#allocation10 + $0x18] sm:$0xff]
    %v2687 = vld [vmem:[#allocation10 + $0x20] sm:$0xff]
    %v2688 = vld [vmem:[#allocation10 + $0x28] sm:$0xff]
    %v2689 = vld [vmem:[#allocation10 + $0x30] sm:$0xff]
    %v2690 = vld [vmem:[#allocation10 + $0x38] sm:$0xff]
    %v2691 = vld [vmem:[#allocation10 + $0x40] sm:$0xff]
    %v2692 = vld [vmem:[#allocation10 + $0x48] sm:$0xff]
    %v2693 = vld [vmem:[#allocation10 + $0x50] sm:$0xff]
    %v2694 = vld [vmem:[#allocation10 + $0x58] sm:$0xff]
    %v2695 = vld [vmem:[#allocation10 + $0x60] sm:$0xff]
    %v2696 = vld [vmem:[#allocation10 + $0x68] sm:$0xff]
    %v2697 = vld [vmem:[#allocation10 + $0x70] sm:$0xff]
    %v2698 = vld [vmem:[#allocation10 + $0x78] sm:$0xff]
    %v2699 = vld [vmem:[#allocation10 + $0x80] sm:$0xff]
    %v2700 = vld [vmem:[#allocation10 + $0x88] sm:$0xff]
    %v2701 = vld [vmem:[#allocation10 + $0x90] sm:$0xff]
    %v2702 = vld [vmem:[#allocation10 + $0x98] sm:$0xff]
    %v2703 = vld [vmem:[#allocation10 + $0xa0] sm:$0xff]
    %v2704 = vld [vmem:[#allocation10 + $0xa8] sm:$0xff]
    %v2705 = vld [vmem:[#allocation10 + $0xb0] sm:$0xff]
    %v2706 = vld [vmem:[#allocation10 + $0xb8] sm:$0xff]
    %v2707 = vld [vmem:[#allocation10 + $0xc0] sm:$0xff]
    %v2708 = vld [vmem:[#allocation10 + $0xc8] sm:$0xff]
    %v2709 = vld [vmem:[#allocation10 + $0xd0] sm:$0xff]
    %v2710 = vld [vmem:[#allocation10 + $0xd8] sm:$0xff]
    %v2711 = vld [vmem:[#allocation10 + $0xe0] sm:$0xff]
    %v2712 = vld [vmem:[#allocation10 + $0xe8] sm:$0xff]
    %v2713 = vld [vmem:[#allocation10 + $0xf0] sm:$0xff]
    %v2714 = vld [vmem:[#allocation10 + $0xf8] sm:$0xff]
    %v2747 = vunpack.c.l.b16 %v2683
    %v2748 = vunpack.c.h.b16 %v2683
    %v2749 = vunpack.c.l.b16 %v2684
    %v2750 = vunpack.c.h.b16 %v2684
    %v2751 = vunpack.c.l.b16 %v2685
    %v2752 = vunpack.c.h.b16 %v2685
    %v2753 = vunpack.c.l.b16 %v2686
    %v2754 = vunpack.c.h.b16 %v2686
    %v2755 = vunpack.c.l.b16 %v2687
    %v2756 = vunpack.c.h.b16 %v2687
    %v2757 = vunpack.c.l.b16 %v2688
    %v2758 = vunpack.c.h.b16 %v2688
    %v2759 = vunpack.c.l.b16 %v2689
    %v2760 = vunpack.c.h.b16 %v2689
    %v2761 = vunpack.c.l.b16 %v2690
    %v2762 = vunpack.c.h.b16 %v2690
    %v2763 = vunpack.c.l.b16 %v2691
    %v2764 = vunpack.c.h.b16 %v2691
    %v2765 = vunpack.c.l.b16 %v2692
    %v2766 = vunpack.c.h.b16 %v2692
    %v2767 = vunpack.c.l.b16 %v2693
    %v2768 = vunpack.c.h.b16 %v2693
    %v2769 = vunpack.c.l.b16 %v2694
    %v2770 = vunpack.c.h.b16 %v2694
    %v2771 = vunpack.c.l.b16 %v2695
    %v2772 = vunpack.c.h.b16 %v2695
    %v2773 = vunpack.c.l.b16 %v2696
    %v2774 = vunpack.c.h.b16 %v2696
    %v2775 = vunpack.c.l.b16 %v2697
    %v2776 = vunpack.c.h.b16 %v2697
    %v2777 = vunpack.c.l.b16 %v2698
    %v2778 = vunpack.c.h.b16 %v2698
    %v2779 = vunpack.c.l.b16 %v2699
    %v2780 = vunpack.c.h.b16 %v2699
    %v2781 = vunpack.c.l.b16 %v2700
    %v2782 = vunpack.c.h.b16 %v2700
    %v2783 = vunpack.c.l.b16 %v2701
    %v2784 = vunpack.c.h.b16 %v2701
    %v2785 = vunpack.c.l.b16 %v2702
    %v2786 = vunpack.c.h.b16 %v2702
    %v2787 = vunpack.c.l.b16 %v2703
    %v2788 = vunpack.c.h.b16 %v2703
    %v2789 = vunpack.c.l.b16 %v2704
    %v2790 = vunpack.c.h.b16 %v2704
    %v2791 = vunpack.c.l.b16 %v2705
    %v2792 = vunpack.c.h.b16 %v2705
    %v2793 = vunpack.c.l.b16 %v2706
    %v2794 = vunpack.c.h.b16 %v2706
    %v2795 = vunpack.c.l.b16 %v2707
    %v2796 = vunpack.c.h.b16 %v2707
    %v2797 = vunpack.c.l.b16 %v2708
    %v2798 = vunpack.c.h.b16 %v2708
    %v2799 = vunpack.c.l.b16 %v2709
    %v2800 = vunpack.c.h.b16 %v2709
    %v2801 = vunpack.c.l.b16 %v2710
    %v2802 = vunpack.c.h.b16 %v2710
    %v2803 = vunpack.c.l.b16 %v2711
    %v2804 = vunpack.c.h.b16 %v2711
    %v2805 = vunpack.c.l.b16 %v2712
    %v2806 = vunpack.c.h.b16 %v2712
    %v2807 = vunpack.c.l.b16 %v2713
    %v2808 = vunpack.c.h.b16 %v2713
    %v2809 = vunpack.c.l.b16 %v2714
    %v2810 = vunpack.c.h.b16 %v2714
    %v2811 = vpack.c.b16 %v2751, %v2747
    %v2812 = vpack.c.b16 %v2752, %v2748
    %v2813 = vpack.c.b16 %v2753, %v2749
    %v2814 = vpack.c.b16 %v2754, %v2750
    %v2815 = vpack.c.b16 %v2759, %v2755
    %v2816 = vpack.c.b16 %v2760, %v2756
    %v2817 = vpack.c.b16 %v2761, %v2757
    %v2818 = vpack.c.b16 %v2762, %v2758
    %v2819 = vpack.c.b16 %v2767, %v2763
    %v2820 = vpack.c.b16 %v2768, %v2764
    %v2821 = vpack.c.b16 %v2769, %v2765
    %v2822 = vpack.c.b16 %v2770, %v2766
    %v2823 = vpack.c.b16 %v2775, %v2771
    %v2824 = vpack.c.b16 %v2776, %v2772
    %v2825 = vpack.c.b16 %v2777, %v2773
    %v2826 = vpack.c.b16 %v2778, %v2774
    %v2827 = vpack.c.b16 %v2783, %v2779
    %v2828 = vpack.c.b16 %v2784, %v2780
    %v2829 = vpack.c.b16 %v2785, %v2781
    %v2830 = vpack.c.b16 %v2786, %v2782
    %v2831 = vpack.c.b16 %v2791, %v2787
    %v2832 = vpack.c.b16 %v2792, %v2788
    %v2833 = vpack.c.b16 %v2793, %v2789
    %v2834 = vpack.c.b16 %v2794, %v2790
    %v2835 = vpack.c.b16 %v2799, %v2795
    %v2836 = vpack.c.b16 %v2800, %v2796
    %v2837 = vpack.c.b16 %v2801, %v2797
    %v2838 = vpack.c.b16 %v2802, %v2798
    %v2839 = vpack.c.b16 %v2807, %v2803
    %v2840 = vpack.c.b16 %v2808, %v2804
    %v2841 = vpack.c.b16 %v2809, %v2805
    %v2842 = vpack.c.b16 %v2810, %v2806
    %2875 = vmatprep.subr.bf16.mxu0 %v2812
    %2876 = vmatpush1.bf16.msra.mxu0 %v2811
    %2877 = vmatprep.subr.bf16.mxu0 %v2816
    %2878 = vmatpush1.bf16.msra.mxu0 %v2815
    %2879 = vmatprep.subr.bf16.mxu0 %v2820
    %2880 = vmatpush1.bf16.msra.mxu0 %v2819
    %2881 = vmatprep.subr.bf16.mxu0 %v2824
    %2882 = vmatpush1.bf16.msra.mxu0 %v2823
    %2883 = vmatprep.subr.bf16.mxu0 %v2828
    %2884 = vmatpush1.bf16.msra.mxu0 %v2827
    %2885 = vmatprep.subr.bf16.mxu0 %v2832
    %2886 = vmatpush1.bf16.msra.mxu0 %v2831
    %2887 = vmatprep.subr.bf16.mxu0 %v2836
    %2888 = vmatpush1.bf16.msra.mxu0 %v2835
    %2889 = vmatprep.subr.bf16.mxu0 %v2840
    %2890 = vmatpush1.bf16.msra.mxu0 %v2839
    %2891 = vmatprep.subr.bf16.mxu0 0
    %2892 = vmatpush1.bf16.msra.mxu0 0
    %2893 = vmatprep.subr.bf16.mxu0 0
    %2894 = vmatpush1.bf16.msra.mxu0 0
    %2895 = vmatprep.subr.bf16.mxu0 0
    %2896 = vmatpush1.bf16.msra.mxu0 0
    %2897 = vmatprep.subr.bf16.mxu0 0
    %2898 = vmatpush1.bf16.msra.mxu0 0
    %2899 = vmatprep.subr.bf16.mxu0 0
    %2900 = vmatpush1.bf16.msra.mxu0 0
    %2901 = vmatprep.subr.bf16.mxu0 0
    %2902 = vmatpush1.bf16.msra.mxu0 0
    %2903 = vmatprep.subr.bf16.mxu0 0
    %2904 = vmatpush1.bf16.msra.mxu0 0
    %2905 = vmatprep.subr.bf16.mxu0 0
    %2906 = vmatpush1.bf16.msra.mxu0 0
    %2907 = vmatprep.mubr.bf16.mxu0 0
    %2908 = vmatmul.mubr.bf16.gmra.mrb[0].mxu0 %v2682
    %v2909 = vpop.f32.mrb[0].mxu0
    %v2910 = vadd.f32 0.0, %v2909
    %v2911 = vpop.f32.mrb[0].mxu0
    %v2912 = vadd.f32 0.0, %v2911
    %v2913 = vpop.f32.mrb[0].mxu0
    %v2914 = vpop.f32.mrb[0].mxu0
    %2915 = vdwg.mxu0
    %2916 = vmatprep.subr.bf16.mxu0 %v2814
    %2917 = vmatpush1.bf16.msra.mxu0 %v2813
    %2918 = vmatprep.subr.bf16.mxu0 %v2818
    %2919 = vmatpush1.bf16.msra.mxu0 %v2817
    %2920 = vmatprep.subr.bf16.mxu0 %v2822
    %2921 = vmatpush1.bf16.msra.mxu0 %v2821
    %2922 = vmatprep.subr.bf16.mxu0 %v2826
    %2923 = vmatpush1.bf16.msra.mxu0 %v2825
    %2924 = vmatprep.subr.bf16.mxu0 %v2830
    %2925 = vmatpush1.bf16.msra.mxu0 %v2829
    %2926 = vmatprep.subr.bf16.mxu0 %v2834
    %2927 = vmatpush1.bf16.msra.mxu0 %v2833
    %2928 = vmatprep.subr.bf16.mxu0 %v2838
    %2929 = vmatpush1.bf16.msra.mxu0 %v2837
    %2930 = vmatprep.subr.bf16.mxu0 %v2842
    %2931 = vmatpush1.bf16.msra.mxu0 %v2841
    %2932 = vmatprep.subr.bf16.mxu0 0
    %2933 = vmatpush1.bf16.msra.mxu0 0
    %2934 = vmatprep.subr.bf16.mxu0 0
    %2935 = vmatpush1.bf16.msra.mxu0 0
    %2936 = vmatprep.subr.bf16.mxu0 0
    %2937 = vmatpush1.bf16.msra.mxu0 0
    %2938 = vmatprep.subr.bf16.mxu0 0
    %2939 = vmatpush1.bf16.msra.mxu0 0
    %2940 = vmatprep.subr.bf16.mxu0 0
    %2941 = vmatpush1.bf16.msra.mxu0 0
    %2942 = vmatprep.subr.bf16.mxu0 0
    %2943 = vmatpush1.bf16.msra.mxu0 0
    %2944 = vmatprep.subr.bf16.mxu0 0
    %2945 = vmatpush1.bf16.msra.mxu0 0
    %2946 = vmatprep.subr.bf16.mxu0 0
    %2947 = vmatpush1.bf16.msra.mxu0 0
    %2948 = vmatprep.mubr.bf16.mxu0 0
    %2949 = vmatmul.mubr.bf16.gmra.mrb[0].mxu0 %v2682
    %v2950 = vpop.f32.mrb[0].mxu0
    %v2951 = vadd.f32 0.0, %v2950
    %v2952 = vpop.f32.mrb[0].mxu0
    %v2953 = vadd.f32 0.0, %v2952
    %v2954 = vpop.f32.mrb[0].mxu0
    %v2955 = vpop.f32.mrb[0].mxu0
    %2956 = vdwg.mxu0
    %v2957 = vadd.f32 %v2678, %v2910
    %v2958 = vadd.f32 %v2679, %v2912
    %v2959 = vadd.f32 %v2680, %v2951
    %v2960 = vadd.f32 %v2681, %v2953
    %v2961 = vxor.u32 %v2957, 2147483648
    %v2962 = vmul.f32 %v2961, 1.442695
    %v2963 = vpow.pop %v2962
    %v2964 = vadd.f32 %v2963, 1.0
    %v2965 = vrcp.pop %v2964
    %v2966 = vmul.f32 1.0, %v2965
    %v2967 = vxor.u32 %v2958, 2147483648
    %v2968 = vmul.f32 %v2967, 1.442695
    %v2969 = vpow.pop %v2968
    %v2970 = vadd.f32 %v2969, 1.0
    %v2971 = vrcp.pop %v2970
    %v2972 = vmul.f32 1.0, %v2971
    %v2973 = vtanh.pop %v2959
    %v2974 = vxor.u32 %v2960, 2147483648
    %v2975 = vmul.f32 %v2974, 1.442695
    %v2976 = vpow.pop %v2975
    %v2977 = vadd.f32 %v2976, 1.0
    %v2978 = vrcp.pop %v2977
    %v2979 = vmul.f32 1.0, %v2978
    %v2980 = vmul.f32 %v2972, %v2670
    %v2981 = vmul.f32 %v2966, %v2973
    %v2982 = vadd.f32 %v2980, %v2981
    %v2983 = vtanh.pop %v2982
    %v2984 = vmul.f32 %v2979, %v2983
    %s2985 = scalar_lea.vmem [#allocation3], 56
    %2986 = vst [vmem:[%s2985] sm:$0xff] %v2984
    %2987 = vst [vmem:[#allocation4] sm:$0xff] %v2984
    %v2988 = vld [vmem:[#allocation3] sm:$0xff]
    %v2989 = vld [vmem:[#allocation3 + $0x8] sm:$0xff]
    %v2990 = vld [vmem:[#allocation3 + $0x10] sm:$0xff]
    %v2991 = vld [vmem:[#allocation3 + $0x18] sm:$0xff]
    %v2992 = vld [vmem:[#allocation3 + $0x20] sm:$0xff]
    %v2993 = vld [vmem:[#allocation3 + $0x28] sm:$0xff]
    %v2994 = vld [vmem:[#allocation3 + $0x30] sm:$0xff]
    %v2995 = vld [vmem:[#allocation3 + $0x38] sm:$0xff]
    %v2996 = vpack.c.bf16 %v2989, %v2988
    %v2997 = vpack.c.bf16 %v2991, %v2990
    %v2998 = vpack.c.bf16 %v2993, %v2992
    %v2999 = vpack.c.bf16 %v2995, %v2994
    %v3000 = vld [vmem:[#allocation4] sm:$0xff]
    %v3001 = vld [vmem:[#allocation4 + $0x8] sm:$0xff]
    %v3002 = vld [vmem:[#allocation4 + $0x10] sm:$0xff]
    %v3003 = vld [vmem:[#allocation4 + $0x18] sm:$0xff]
    %v3004 = vld [vmem:[#allocation4 + $0x20] sm:$0xff]
    %v3005 = vld [vmem:[#allocation4 + $0x28] sm:$0xff]
    %v3006 = vld [vmem:[#allocation4 + $0x30] sm:$0xff]
    %v3007 = vld [vmem:[#allocation4 + $0x38] sm:$0xff]
    %v3008 = vpack.c.bf16 %v3001, %v3000
    %v3009 = vpack.c.bf16 %v3003, %v3002
    %v3010 = vpack.c.bf16 %v3005, %v3004
    %v3011 = vpack.c.bf16 %v3007, %v3006
    %v3012 = vld [vmem:[#allocation11] sm:$0xf]
    %v3013 = vld [vmem:[#allocation11 + $0x4] sm:$0xf]
    %v3014 = vld [vmem:[#allocation11 + $0x8] sm:$0xf]
    %v3015 = vld [vmem:[#allocation11 + $0xc] sm:$0xf]
    %v3016 = vld [vmem:[#allocation11 + $0x10] sm:$0xf]
    %v3017 = vld [vmem:[#allocation11 + $0x14] sm:$0xf]
    %v3018 = vld [vmem:[#allocation11 + $0x18] sm:$0xf]
    %v3019 = vld [vmem:[#allocation11 + $0x1c] sm:$0xf]
    %v3020 = vld [vmem:[#allocation11 + $0x20] sm:$0xf]
    %v3021 = vld [vmem:[#allocation11 + $0x24] sm:$0xf]
    %v3022 = vld [vmem:[#allocation11 + $0x28] sm:$0xf]
    %v3023 = vld [vmem:[#allocation11 + $0x2c] sm:$0xf]
    %v3024 = vld [vmem:[#allocation11 + $0x30] sm:$0xf]
    %v3025 = vld [vmem:[#allocation11 + $0x34] sm:$0xf]
    %v3026 = vld [vmem:[#allocation11 + $0x38] sm:$0xf]
    %v3027 = vld [vmem:[#allocation11 + $0x3c] sm:$0xf]
    %v3028 = vld [vmem:[#allocation13] sm:$0xf]
    %v3029 = vld [vmem:[#allocation13 + $0x4] sm:$0xf]
    %v3030 = vld [vmem:[#allocation13 + $0x8] sm:$0xf]
    %v3031 = vld [vmem:[#allocation13 + $0xc] sm:$0xf]
    %v3032 = vld [vmem:[#allocation13 + $0x10] sm:$0xf]
    %v3033 = vld [vmem:[#allocation13 + $0x14] sm:$0xf]
    %v3034 = vld [vmem:[#allocation13 + $0x18] sm:$0xf]
    %v3035 = vld [vmem:[#allocation13 + $0x1c] sm:$0xf]
    %v3036 = vld [vmem:[#allocation13 + $0x20] sm:$0xf]
    %v3037 = vld [vmem:[#allocation13 + $0x24] sm:$0xf]
    %v3038 = vld [vmem:[#allocation13 + $0x28] sm:$0xf]
    %v3039 = vld [vmem:[#allocation13 + $0x2c] sm:$0xf]
    %v3040 = vld [vmem:[#allocation13 + $0x30] sm:$0xf]
    %v3041 = vld [vmem:[#allocation13 + $0x34] sm:$0xf]
    %v3042 = vld [vmem:[#allocation13 + $0x38] sm:$0xf]
    %v3043 = vld [vmem:[#allocation13 + $0x3c] sm:$0xf]
    %v3060 = vunpack.c.l.b16 %v3028
    %v3061 = vunpack.c.l.b16 %v3029
    %v3062 = vunpack.c.l.b16 %v3030
    %v3063 = vunpack.c.l.b16 %v3031
    %v3064 = vunpack.c.l.b16 %v3032
    %v3065 = vunpack.c.l.b16 %v3033
    %v3066 = vunpack.c.l.b16 %v3034
    %v3067 = vunpack.c.l.b16 %v3035
    %v3068 = vunpack.c.l.b16 %v3036
    %v3069 = vunpack.c.l.b16 %v3037
    %v3070 = vunpack.c.l.b16 %v3038
    %v3071 = vunpack.c.l.b16 %v3039
    %v3072 = vunpack.c.l.b16 %v3040
    %v3073 = vunpack.c.l.b16 %v3041
    %v3074 = vunpack.c.l.b16 %v3042
    %v3075 = vunpack.c.l.b16 %v3043
    %v3076 = vpack.c.b16 %v3061, %v3060
    %v3077 = vpack.c.b16 %v3063, %v3062
    %v3078 = vpack.c.b16 %v3065, %v3064
    %v3079 = vpack.c.b16 %v3067, %v3066
    %v3080 = vpack.c.b16 %v3069, %v3068
    %v3081 = vpack.c.b16 %v3071, %v3070
    %v3082 = vpack.c.b16 %v3073, %v3072
    %v3083 = vpack.c.b16 %v3075, %v3074
    %3092 = vmatprep.subr.bf16.mxu0 0
    %3093 = vmatpush1.bf16.msra.mxu0 %v3076
    %3094 = vmatprep.subr.bf16.mxu0 0
    %3095 = vmatpush1.bf16.msra.mxu0 %v3077
    %3096 = vmatprep.subr.bf16.mxu0 0
    %3097 = vmatpush1.bf16.msra.mxu0 %v3078
    %3098 = vmatprep.subr.bf16.mxu0 0
    %3099 = vmatpush1.bf16.msra.mxu0 %v3079
    %3100 = vmatprep.subr.bf16.mxu0 0
    %3101 = vmatpush1.bf16.msra.mxu0 %v3080
    %3102 = vmatprep.subr.bf16.mxu0 0
    %3103 = vmatpush1.bf16.msra.mxu0 %v3081
    %3104 = vmatprep.subr.bf16.mxu0 0
    %3105 = vmatpush1.bf16.msra.mxu0 %v3082
    %3106 = vmatprep.subr.bf16.mxu0 0
    %3107 = vmatpush1.bf16.msra.mxu0 %v3083
    %3108 = vmatprep.subr.bf16.mxu0 0
    %3109 = vmatpush1.bf16.msra.mxu0 0
    %3110 = vmatprep.subr.bf16.mxu0 0
    %3111 = vmatpush1.bf16.msra.mxu0 0
    %3112 = vmatprep.subr.bf16.mxu0 0
    %3113 = vmatpush1.bf16.msra.mxu0 0
    %3114 = vmatprep.subr.bf16.mxu0 0
    %3115 = vmatpush1.bf16.msra.mxu0 0
    %3116 = vmatprep.subr.bf16.mxu0 0
    %3117 = vmatpush1.bf16.msra.mxu0 0
    %3118 = vmatprep.subr.bf16.mxu0 0
    %3119 = vmatpush1.bf16.msra.mxu0 0
    %3120 = vmatprep.subr.bf16.mxu0 0
    %3121 = vmatpush1.bf16.msra.mxu0 0
    %3122 = vmatprep.subr.bf16.mxu0 0
    %3123 = vmatpush1.bf16.msra.mxu0 0
    %3124 = vmatprep.mubr.bf16.mxu0 0
    %3125 = vmatmul.mubr.bf16.gmra.mrb[0].mxu0 %v3008
    %v3126 = vpop.f32.mrb[0].mxu0
    %v3127 = vadd.f32 0.0, %v3126
    %v3128 = vpop.f32.mrb[0].mxu0
    %v3129 = vpop.f32.mrb[0].mxu0
    %v3130 = vadd.f32 0.0, %v3129
    %v3131 = vpop.f32.mrb[0].mxu0
    %3132 = vmatprep.mubr.bf16.mxu0 0
    %3133 = vmatmul.mubr.bf16.gmra.mrb[0].mxu0 %v3009
    %v3134 = vpop.f32.mrb[0].mxu0
    %v3135 = vadd.f32 0.0, %v3134
    %v3136 = vpop.f32.mrb[0].mxu0
    %v3137 = vpop.f32.mrb[0].mxu0
    %v3138 = vadd.f32 0.0, %v3137
    %v3139 = vpop.f32.mrb[0].mxu0
    %3140 = vmatprep.mubr.bf16.mxu0 0
    %3141 = vmatmul.mubr.bf16.gmra.mrb[0].mxu0 %v3010
    %v3142 = vpop.f32.mrb[0].mxu0
    %v3143 = vadd.f32 0.0, %v3142
    %v3144 = vpop.f32.mrb[0].mxu0
    %v3145 = vpop.f32.mrb[0].mxu0
    %v3146 = vadd.f32 0.0, %v3145
    %v3147 = vpop.f32.mrb[0].mxu0
    %3148 = vmatprep.mubr.bf16.mxu0 0
    %3149 = vmatmul.mubr.bf16.gmra.mrb[0].mxu0 %v3011
    %v3150 = vpop.f32.mrb[0].mxu0
    %v3151 = vadd.f32 0.0, %v3150
    %v3152 = vpop.f32.mrb[0].mxu0
    %v3153 = vpop.f32.mrb[0].mxu0
    %v3154 = vadd.f32 0.0, %v3153
    %v3155 = vpop.f32.mrb[0].mxu0
    %3156 = vdwg.mxu0
    %v3173 = vunpack.c.l.b16 %v3012
    %v3174 = vunpack.c.l.b16 %v3013
    %v3175 = vunpack.c.l.b16 %v3014
    %v3176 = vunpack.c.l.b16 %v3015
    %v3177 = vunpack.c.l.b16 %v3016
    %v3178 = vunpack.c.l.b16 %v3017
    %v3179 = vunpack.c.l.b16 %v3018
    %v3180 = vunpack.c.l.b16 %v3019
    %v3181 = vunpack.c.l.b16 %v3020
    %v3182 = vunpack.c.l.b16 %v3021
    %v3183 = vunpack.c.l.b16 %v3022
    %v3184 = vunpack.c.l.b16 %v3023
    %v3185 = vunpack.c.l.b16 %v3024
    %v3186 = vunpack.c.l.b16 %v3025
    %v3187 = vunpack.c.l.b16 %v3026
    %v3188 = vunpack.c.l.b16 %v3027
    %v3189 = vpack.c.b16 %v3174, %v3173
    %v3190 = vpack.c.b16 %v3176, %v3175
    %v3191 = vpack.c.b16 %v3178, %v3177
    %v3192 = vpack.c.b16 %v3180, %v3179
    %v3193 = vpack.c.b16 %v3182, %v3181
    %v3194 = vpack.c.b16 %v3184, %v3183
    %v3195 = vpack.c.b16 %v3186, %v3185
    %v3196 = vpack.c.b16 %v3188, %v3187
    %3205 = vmatprep.subr.bf16.mxu0 0
    %3206 = vmatpush1.bf16.msra.mxu0 %v3189
    %3207 = vmatprep.subr.bf16.mxu0 0
    %3208 = vmatpush1.bf16.msra.mxu0 %v3190
    %3209 = vmatprep.subr.bf16.mxu0 0
    %3210 = vmatpush1.bf16.msra.mxu0 %v3191
    %3211 = vmatprep.subr.bf16.mxu0 0
    %3212 = vmatpush1.bf16.msra.mxu0 %v3192
    %3213 = vmatprep.subr.bf16.mxu0 0
    %3214 = vmatpush1.bf16.msra.mxu0 %v3193
    %3215 = vmatprep.subr.bf16.mxu0 0
    %3216 = vmatpush1.bf16.msra.mxu0 %v3194
    %3217 = vmatprep.subr.bf16.mxu0 0
    %3218 = vmatpush1.bf16.msra.mxu0 %v3195
    %3219 = vmatprep.subr.bf16.mxu0 0
    %3220 = vmatpush1.bf16.msra.mxu0 %v3196
    %3221 = vmatprep.subr.bf16.mxu0 0
    %3222 = vmatpush1.bf16.msra.mxu0 0
    %3223 = vmatprep.subr.bf16.mxu0 0
    %3224 = vmatpush1.bf16.msra.mxu0 0
    %3225 = vmatprep.subr.bf16.mxu0 0
    %3226 = vmatpush1.bf16.msra.mxu0 0
    %3227 = vmatprep.subr.bf16.mxu0 0
    %3228 = vmatpush1.bf16.msra.mxu0 0
    %3229 = vmatprep.subr.bf16.mxu0 0
    %3230 = vmatpush1.bf16.msra.mxu0 0
    %3231 = vmatprep.subr.bf16.mxu0 0
    %3232 = vmatpush1.bf16.msra.mxu0 0
    %3233 = vmatprep.subr.bf16.mxu0 0
    %3234 = vmatpush1.bf16.msra.mxu0 0
    %3235 = vmatprep.subr.bf16.mxu0 0
    %3236 = vmatpush1.bf16.msra.mxu0 0
    %3237 = vmatprep.mubr.bf16.mxu0 0
    %3238 = vmatmul.mubr.bf16.gmra.mrb[0].mxu0 %v2996
    %v3239 = vpop.f32.mrb[0].mxu0
    %v3240 = vadd.f32 %v3127, %v3239
    %v3241 = vpop.f32.mrb[0].mxu0
    %v3242 = vpop.f32.mrb[0].mxu0
    %v3243 = vadd.f32 %v3130, %v3242
    %v3244 = vpop.f32.mrb[0].mxu0
    %3245 = vmatprep.mubr.bf16.mxu0 0
    %3246 = vmatmul.mubr.bf16.gmra.mrb[0].mxu0 %v2997
    %v3247 = vpop.f32.mrb[0].mxu0
    %v3248 = vadd.f32 %v3135, %v3247
    %v3249 = vpop.f32.mrb[0].mxu0
    %v3250 = vpop.f32.mrb[0].mxu0
    %v3251 = vadd.f32 %v3138, %v3250
    %v3252 = vpop.f32.mrb[0].mxu0
    %3253 = vmatprep.mubr.bf16.mxu0 0
    %3254 = vmatmul.mubr.bf16.gmra.mrb[0].mxu0 %v2998
    %v3255 = vpop.f32.mrb[0].mxu0
    %v3256 = vadd.f32 %v3143, %v3255
    %v3257 = vpop.f32.mrb[0].mxu0
    %v3258 = vpop.f32.mrb[0].mxu0
    %v3259 = vadd.f32 %v3146, %v3258
    %v3260 = vpop.f32.mrb[0].mxu0
    %3261 = vmatprep.mubr.bf16.mxu0 0
    %3262 = vmatmul.mubr.bf16.gmra.mrb[0].mxu0 %v2999
    %v3263 = vpop.f32.mrb[0].mxu0
    %v3264 = vadd.f32 %v3151, %v3263
    %v3265 = vpop.f32.mrb[0].mxu0
    %v3266 = vpop.f32.mrb[0].mxu0
    %v3267 = vadd.f32 %v3154, %v3266
    %v3268 = vpop.f32.mrb[0].mxu0
    %3269 = vdwg.mxu0
    %v3270 = vld [vmem:[#allocation14] sm:$0x1]
    %v3272 = vlaneseq
    %v3273 = vshrl.u32 %v3272, 7
    %v3274 = vsub.s32 0, %v3273
    %v3275 = vrot.slane %v3270, %v3274
    %v3277 = vadd.f32 %v3240, %v3275
    %v3278 = vadd.f32 %v3243, %v3275
    %v3279 = vadd.f32 %v3248, %v3275
    %v3280 = vadd.f32 %v3251, %v3275
    %v3281 = vadd.f32 %v3256, %v3275
    %v3282 = vadd.f32 %v3259, %v3275
    %v3283 = vadd.f32 %v3264, %v3275
    %v3284 = vadd.f32 %v3267, %v3275
    %3285 = vst [vmem:[#allocation16] sm:$0xff] %v3277
    %3286 = vst [vmem:[#allocation16 + $0x8] sm:$0xff] %v3278
    %3287 = vst [vmem:[#allocation16 + $0x10] sm:$0xff] %v3279
    %3288 = vst [vmem:[#allocation16 + $0x18] sm:$0xff] %v3280
    %3289 = vst [vmem:[#allocation16 + $0x20] sm:$0xff] %v3281
    %3290 = vst [vmem:[#allocation16 + $0x28] sm:$0xff] %v3282
    %3291 = vst [vmem:[#allocation16 + $0x30] sm:$0xff] %v3283
    %3292 = vst [vmem:[#allocation16 + $0x38] sm:$0xff] %v3284
    // Predicated region
    $region50: #{tpu_custom_call.1} parent=1 // pred_check
      _
    $region51: #{tpu_custom_call.1} parent=1 // pred_check_branch
      %3294 = sbr.rel (0) target = $region53
    $region52: #{tpu_custom_call.1} parent=1 // pred_region
      %s3296 = ssub.s32 1024, 1024
      %3297 = vsyncadd [#allocation7], %s3296
      %s3298 = sshll.u32 [#allocation16], 4
      %s3299 = int_to_ptr.vmem [resolvable:$true] %s3298
      %3304 = dma.vmem_to_hbm [thread:$0]  %s3299, 1024, %s6, [#allocation7], 128, 128, 8
    $region53: #{tpu_custom_call.1} parent=1 // pred_fallthru
      _
    // Predicated region
    $region54: #{tpu_custom_call.1} parent=1 // pred_check
      _
    $region55: #{tpu_custom_call.1} parent=1 // pred_check_branch
      %3306 = sbr.rel (0) target = $region57
    $region56: #{tpu_custom_call.1} parent=1 // pred_region
      %3307 = dma.done [#allocation7], 1024
    $region57: #{tpu_custom_call.1} parent=1 // pred_fallthru
      _
    %3308 = vsyncpa [#allocation6], 1
    %3309 = vsyncpa [#allocation9], 1
    %3310 = vsyncpa [#allocation12], 1
    %3311 = vsyncpa [#allocation15], 1
    %3312 = vsyncpa [#allocation7], 1

</llo_original>
